<compile_context>
chip_gen: v7x
topology: tpu7x:2x2x1
jax: 0.10.0
libtpu: 0.0.40
codegen_flags: <defaults>
</compile_context>

<pallas_src>
import functools

import numpy as np

import jax
import jax.numpy as jnp
from jax.experimental import pallas as pl
from jax.experimental.pallas import tpu as pltpu


# --------------------------- weight preparation -----------------------------

def _toeplitz_conv_weights(w, w_in):
    """Pack conv weights [Cout,Cin,KH,KW] into banded ("Toeplitz") matrices.

    Returns T of shape [KH*2, Cin*W_in, Cout*OWp] with k = di*2 + col_parity,
    such that for an input row-slab X of shape [R, Cin*W_in]:
        (X @ T[k])[r, co*OWp + q]
          = sum_{ci,dj} X[r, ci*W_in + (2q+parity) + dj] * w[co, ci, di, dj]
    i.e. the vertical-tap-di contribution to conv output column ow = 2q+parity.
    """
    w = np.asarray(w, np.float32)
    cout, cin, kh, kw = w.shape
    ow = w_in - kw + 1
    owp = ow // 2
    t = np.zeros((kh * 2, cin * w_in, cout * owp), np.float32)
    cols = np.arange(cout) * owp
    for di in range(kh):
        for par in range(2):
            k = di * 2 + par
            for q in range(owp):
                for dj in range(kw):
                    for ci in range(cin):
                        t[k, ci * w_in + 2 * q + par + dj, cols + q] = w[:, ci, di, dj]
    return t


def prepare_params(params):
    """One-time repack: banded conv weights (conv1 taps folded into K),
    re-indexed fc1, lane-padded fc2, bf16 casts for MXU operands."""
    f32, bf16 = jnp.float32, jnp.bfloat16
    hidden = params["fc1_w"].shape[0]

    # conv1: fold the 5 vertical taps into the contraction dim -> [2, 140, 240]
    t1 = _toeplitz_conv_weights(params["conv1_w"], 28)                # [10, 28, 240]
    t1f = np.stack([t1.reshape(5, 2, 28, 240)[:, cp].reshape(140, 240)
                    for cp in range(2)])                              # [2, 140, 240]
    # conv2: keep per-tap banded matrices, k = di*2 + col_parity
    t2 = _toeplitz_conv_weights(params["conv2_w"], 12)                # [10, 240, 200]

    # biases tiled to the (co, pooled_ow) lane layout of the conv outputs
    b1t = jnp.repeat(params["conv1_b"].astype(f32), 12)[None, :]      # [1, 240]
    b2t = jnp.repeat(params["conv2_b"].astype(f32), 4)[None, :]       # [1, 200]

    # fc1 weights re-indexed to the kernel's a2[h*B+b, c*4+w] activation layout
    w1r = (params["fc1_w"].reshape(hidden, 50, 4, 4)
           .transpose(2, 1, 3, 0).reshape(4, 200, hidden).astype(bf16))  # [4, 200, H]
    fc1b = params["fc1_b"].astype(f32)[None, :]                       # [1, H]

    # fc2: pad the 10 classes to 128 lanes (zero weights, -1e9 bias) so the
    # output store is lane-dense and log-softmax over 128 lanes stays exact.
    # fc2 matmul is kept in f32 (tiny K=H) to keep logits sharp.
    w2p = jnp.zeros((hidden, 128), f32).at[:, :10].set(
        params["fc2_w"].T.astype(f32))                                # [H, 128] f32
    b2p = jnp.full((1, 128), -1e9, f32).at[0, :10].set(
        params["fc2_b"].astype(f32))                                  # [1, 128]

    return dict(T1f=jnp.asarray(t1f, bf16), b1t=b1t,
                T2=jnp.asarray(t2, bf16), b2t=b2t,
                W1r=w1r, fc1b=fc1b, W2p=w2p, b2p=b2p)


# ----------------------------- input repacking -------------------------------

def _repack_conv1_input(x2d, b_tile):
    """[Np, 28, 28] f32 -> [2, 12*Np, 140] bf16 conv1 LHS banks (done once,
    outside the kernel; pure layout plumbing).

    Bank rp (pool row parity), row ((t*2 + p)*6 + q)*B + b, lane di*28 + col:
        = x[t*B + b, 4*q + 2*p + rp + di, col]
    so bank[rp] @ T1f[cp] performs all 5 vertical conv taps in one K=140 MXU
    contraction, and the conv1/pool output rows come out ordered (p, q, b)
    with pooled row r1 = 2*q + p -- exactly the layout conv2 needs so its tap
    slabs are contiguous (no strided sublane reads anywhere in the kernel).
    """
    n = x2d.shape[0]
    t = n // b_tile
    x5 = x2d.reshape(t, b_tile, 28, 28)
    banks = []
    for rp in range(2):
        taps = []
        for di in range(5):
            per_p = []
            for p in range(2):
                start = 2 * p + rp + di                    # q advances rows by 4
                per_p.append(x5[:, :, start:start + 21:4, :])      # [t, B, 6, 28]
            # (t, B, p, q, col) -> (t, p, q, B, col)
            taps.append(jnp.stack(per_p, axis=2).transpose(0, 2, 3, 1, 4))
        banks.append(jnp.concatenate(taps, axis=-1))               # [t, 2, 6, B, 140]
    xr = jnp.stack(banks, axis=0)                                  # [2, t, 2, 6, B, 140]
    return xr.reshape(2, t * 12 * b_tile, 140).astype(jnp.bfloat16)


# ------------------------------ Pallas kernel --------------------------------

def _net_kernel(bt, xr_ref, t1_ref, b1_ref, t2_ref, b2_ref, w1_ref, fb1_ref,
                w2_ref, fb2_ref, out_ref, a1s_ref):
    f32, bf16 = jnp.float32, jnp.bfloat16

    # ---- conv1 (1->20, 5x5) + bias + ReLU + 2x2 max-pool: 4 matmuls ---------
    # LHS bank per pool-row-parity rp: [12B, 140] (vertical taps folded into K)
    # RHS per pool-col-parity cp:      [140, 240]
    pooled = None
    for rp in range(2):
        lhs = xr_ref[rp]                                   # single load per rp
        for cp in range(2):
            r = jnp.dot(lhs, t1_ref[cp], preferred_element_type=f32)
            pooled = r if pooled is None else jnp.maximum(pooled, r)
    a1 = jnp.maximum(pooled + b1_ref[...], 0.0)            # [12B, 240] f32
    a1s_ref[...] = a1.astype(a1s_ref.dtype)                # single cast/store

    # ---- conv2 (20->50, 5x5) + bias + ReLU + 2x2 max-pool -------------------
    # Tap s = rp+di needs a1 rows r1 = 2*r2 + s: thanks to the (parity, q, b)
    # row order that is the contiguous [4B, 240] slab starting at
    # (s%2)*6B + (s//2)*B.  Load each of the 6 slabs exactly once.
    taps = [a1s_ref[pl.ds((s % 2) * 6 * bt + (s // 2) * bt, 4 * bt), :].astype(bf16)
            for s in range(6)]
    pooled = None
    for rp in range(2):
        acc0 = acc1 = None
        for di in range(5):
            lhs = taps[rp + di]
            p0 = jnp.dot(lhs, t2_ref[2 * di + 0], preferred_element_type=f32)
            p1 = jnp.dot(lhs, t2_ref[2 * di + 1], preferred_element_type=f32)
            acc0 = p0 if acc0 is None else acc0 + p0
            acc1 = p1 if acc1 is None else acc1 + p1
        m = jnp.maximum(acc0, acc1)
        pooled = m if pooled is None else jnp.maximum(pooled, m)
    a2 = jnp.maximum(pooled + b2_ref[...], 0.0)            # [4B, 200] f32, rows (r2, b)

    # ---- fc1 + ReLU: 4 accumulated batched matmuls [B,200] @ [200,H] --------
    acc = None
    for h in range(4):
        part = jnp.dot(a2[h * bt:(h + 1) * bt, :].astype(bf16), w1_ref[h],
                       preferred_element_type=f32)
        acc = part if acc is None else acc + part
    h1 = jnp.maximum(acc + fb1_ref[...], 0.0)              # [B, H] f32

    # ---- fc2 (f32, classes padded to 128 lanes) + log-softmax ---------------
    logits = jnp.dot(h1, w2_ref[...], preferred_element_type=f32) + fb2_ref[...]
    mx = jnp.max(logits, axis=-1, keepdims=True)
    sh = logits - mx
    out_ref[...] = sh - jnp.log(jnp.sum(jnp.exp(sh), axis=-1, keepdims=True))


def net_forward_pallas(prep, x, b_tile=16):
    """x: [N, 1, 28, 28] -> log-probabilities [N, 10]."""
    assert b_tile % 8 == 0, "b_tile must be a multiple of 8 (sublane tiling)"
    n = x.shape[0]
    hidden = prep["W1r"].shape[-1]
    x2d = x.reshape(n, 28, 28).astype(jnp.float32)
    npad = -n % b_tile
    if npad:
        x2d = jnp.concatenate([x2d, jnp.zeros((npad, 28, 28), jnp.float32)], 0)
    n_pad = n + npad
    steps = n_pad // b_tile
    xr = _repack_conv1_input(x2d, b_tile)                  # [2, 12*n_pad, 140] bf16
    # bf16 scratch slab offsets are multiples of b_tile; keep them 16-aligned,
    # otherwise (b_tile==8, v5e-sized tiles) fall back to an f32 scratch.
    a1_dtype = jnp.bfloat16 if b_tile % 16 == 0 else jnp.float32

    out = pl.pallas_call(
        functools.partial(_net_kernel, b_tile),
        out_shape=jax.ShapeDtypeStruct((n_pad, 128), jnp.float32),
        grid=(steps,),
        in_specs=[
            pl.BlockSpec((2, 12 * b_tile, 140), lambda i: (0, i, 0)),  # conv1 LHS banks
            pl.BlockSpec((2, 140, 240), lambda i: (0, 0, 0)),          # conv1 banded W
            pl.BlockSpec((1, 240), lambda i: (0, 0)),                  # conv1 bias (tiled)
            pl.BlockSpec((10, 240, 200), lambda i: (0, 0, 0)),         # conv2 banded W
            pl.BlockSpec((1, 200), lambda i: (0, 0)),                  # conv2 bias (tiled)
            pl.BlockSpec((4, 200, hidden), lambda i: (0, 0, 0)),       # fc1 W (re-packed)
            pl.BlockSpec((1, hidden), lambda i: (0, 0)),               # fc1 bias
            pl.BlockSpec((hidden, 128), lambda i: (0, 0)),             # fc2 W (lane-padded)
            pl.BlockSpec((1, 128), lambda i: (0, 0)),                  # fc2 bias (-1e9 pad)
        ],
        out_specs=pl.BlockSpec((b_tile, 128), lambda i: (i, 0)),
        scratch_shapes=[pltpu.VMEM((12 * b_tile, 240), a1_dtype)],     # conv1 activations
        compiler_params=pltpu.CompilerParams(
            dimension_semantics=("parallel",)),            # batch tiles shard over TCs
    )(xr, prep["T1f"], prep["b1t"], prep["T2"], prep["b2t"],
      prep["W1r"], prep["fc1b"], prep["W2p"], prep["b2p"])
    return out[:n, :10]


# --------------------------- reference & params ------------------------------

def init_params(key, hidden):
    ks = jax.random.split(key, 8)
    def u(k, shape, fan_in):
        bound = 1.0 / jnp.sqrt(fan_in)
        return jax.random.uniform(k, shape, jnp.float32, -bound, bound)
    return {
        "conv1_w": u(ks[0], (20, 1, 5, 5), 1 * 5 * 5),
        "conv1_b": u(ks[1], (20,), 1 * 5 * 5),
        "conv2_w": u(ks[2], (50, 20, 5, 5), 20 * 5 * 5),
        "conv2_b": u(ks[3], (50,), 20 * 5 * 5),
        "fc1_w":   u(ks[4], (hidden, 4 * 4 * 50), 4 * 4 * 50),
        "fc1_b":   u(ks[5], (hidden,), 4 * 4 * 50),
        "fc2_w":   u(ks[6], (10, hidden), hidden),
        "fc2_b":   u(ks[7], (10,), hidden),
    }


def reference_forward(params, x):
    """Pure-JAX f32 reference matching the PyTorch module."""
    def pool(y):
        n, c, h, w = y.shape
        return y.reshape(n, c, h // 2, 2, w // 2, 2).max(axis=(3, 5))
    dn = ("NCHW", "OIHW", "NCHW")
    y = jax.lax.conv_general_dilated(x, params["conv1_w"], (1, 1), "VALID",
                                     dimension_numbers=dn)
    y = pool(jax.nn.relu(y + params["conv1_b"][None, :, None, None]))
    y = jax.lax.conv_general_dilated(y, params["conv2_w"], (1, 1), "VALID",
                                     dimension_numbers=dn)
    y = pool(jax.nn.relu(y + params["conv2_b"][None, :, None, None]))
    y = y.reshape(y.shape[0], -1)                          # [N, 800] in (c,h,w) order
    y = jax.nn.relu(y @ params["fc1_w"].T + params["fc1_b"])
    y = y @ params["fc2_w"].T + params["fc2_b"]
    return jax.nn.log_softmax(y, axis=-1)


# ---------------------------------- main --------------------------------------

if __name__ == "__main__":
    key = jax.random.PRNGKey(0)
    k_params, k_x = jax.random.split(key)
    hidden = 32
    batch = 8          # small demo batch; padded to one 16-image tile
    # spatial size is fixed at 28x28 by fc1's 4*4*50 = 800 input features
    x = jax.random.normal(k_x, (batch, 1, 28, 28), jnp.float32)
    params = init_params(k_params, hidden)
    prep = prepare_params(params)

    out = jax.jit(net_forward_pallas)(prep, x)
    out = jax.block_until_ready(out)
    assert out.shape == (batch, 10)

    # rows of a log-softmax must exponentiate-sum to 1
    assert jnp.allclose(jnp.sum(jnp.exp(out), axis=1), 1.0, atol=1e-3)
    # compare against the pure-JAX f32 reference; the only error source is the
    # bf16 cast of MXU operands (conv1/conv2/fc1), typically ~0.1 max-abs.
    ref = jax.jit(reference_forward)(params, x)
    err = float(jnp.max(jnp.abs(out - ref)))
    assert err < 0.2, f"max abs error vs reference too large: {err}"

    print("KERNEL_OK")
</pallas_src>

<mosaic_0001>
module attributes {stable_mosaic.version = 11 : i64} {
  func.func @_net_kernel(%arg0: i32, %arg1: memref<2x192x140xbf16, #tpu.memory_space<vmem>>, %arg2: memref<2x140x240xbf16, #tpu.memory_space<vmem>>, %arg3: memref<1x240xf32, #tpu.memory_space<vmem>>, %arg4: memref<10x240x200xbf16, #tpu.memory_space<vmem>>, %arg5: memref<1x200xf32, #tpu.memory_space<vmem>>, %arg6: memref<4x200x32xbf16, #tpu.memory_space<vmem>>, %arg7: memref<1x32xf32, #tpu.memory_space<vmem>>, %arg8: memref<32x128xf32, #tpu.memory_space<vmem>>, %arg9: memref<1x128xf32, #tpu.memory_space<vmem>>, %arg10: memref<16x128xf32, #tpu.memory_space<vmem>>, %arg11: memref<192x240xbf16, #tpu.memory_space<vmem>>) attributes {dimension_semantics = [#tpu.dimension_semantics<parallel>], iteration_bounds = array<i64: 1>, scalar_prefetch = 0 : i64, scratch_operands = 1 : i64, tpu.core_type = #tpu.core_type<tc>, window_params = [{transform_indices = @transform_0, window_bounds = array<i64: 2, 192, 140>}, {pipeline_mode = #tpu.pipeline_mode<synchronous>, transform_indices = @transform_1, window_bounds = array<i64: 2, 140, 240>}, {pipeline_mode = #tpu.pipeline_mode<synchronous>, transform_indices = @transform_2, window_bounds = array<i64: 1, 240>}, {pipeline_mode = #tpu.pipeline_mode<synchronous>, transform_indices = @transform_3, window_bounds = array<i64: 10, 240, 200>}, {pipeline_mode = #tpu.pipeline_mode<synchronous>, transform_indices = @transform_4, window_bounds = array<i64: 1, 200>}, {pipeline_mode = #tpu.pipeline_mode<synchronous>, transform_indices = @transform_5, window_bounds = array<i64: 4, 200, 32>}, {pipeline_mode = #tpu.pipeline_mode<synchronous>, transform_indices = @transform_6, window_bounds = array<i64: 1, 32>}, {pipeline_mode = #tpu.pipeline_mode<synchronous>, transform_indices = @transform_7, window_bounds = array<i64: 32, 128>}, {pipeline_mode = #tpu.pipeline_mode<synchronous>, transform_indices = @transform_8, window_bounds = array<i64: 1, 128>}, {transform_indices = @transform_9, window_bounds = array<i64: 16, 128>}]} {
    %c0 = arith.constant 0 : index
    %c0_0 = arith.constant 0 : index
    %c0_1 = arith.constant 0 : index
    %0 = vector.load %arg1[%c0, %c0_0, %c0_1] : memref<2x192x140xbf16, #tpu.memory_space<vmem>>, vector<1x192x140xbf16>
    %1 = vector.shape_cast %0 : vector<1x192x140xbf16> to vector<192x140xbf16>
    %c0_2 = arith.constant 0 : index
    %c0_3 = arith.constant 0 : index
    %c0_4 = arith.constant 0 : index
    %2 = vector.load %arg2[%c0_2, %c0_3, %c0_4] : memref<2x140x240xbf16, #tpu.memory_space<vmem>>, vector<1x140x240xbf16>
    %3 = vector.shape_cast %2 : vector<1x140x240xbf16> to vector<140x240xbf16>
    %cst = arith.constant dense<0.000000e+00> : vector<192x240xf32>
    %4 = tpu.matmul %1, %3, %cst {dimension_numbers = #tpu.dot_dimension_numbers<[1], [0], [0], [1], [0, 0, 1, 1], [], []>} : vector<192x140xbf16>, vector<140x240xbf16>, vector<192x240xf32> -> vector<192x240xf32>
    %c1 = arith.constant 1 : index
    %c0_5 = arith.constant 0 : index
    %c0_6 = arith.constant 0 : index
    %5 = vector.load %arg2[%c1, %c0_5, %c0_6] : memref<2x140x240xbf16, #tpu.memory_space<vmem>>, vector<1x140x240xbf16>
    %6 = vector.shape_cast %5 : vector<1x140x240xbf16> to vector<140x240xbf16>
    %cst_7 = arith.constant dense<0.000000e+00> : vector<192x240xf32>
    %7 = tpu.matmul %1, %6, %cst_7 {dimension_numbers = #tpu.dot_dimension_numbers<[1], [0], [0], [1], [0, 0, 1, 1], [], []>} : vector<192x140xbf16>, vector<140x240xbf16>, vector<192x240xf32> -> vector<192x240xf32>
    %8 = arith.maximumf %4, %7 : vector<192x240xf32>
    %c1_8 = arith.constant 1 : index
    %c0_9 = arith.constant 0 : index
    %c0_10 = arith.constant 0 : index
    %9 = vector.load %arg1[%c1_8, %c0_9, %c0_10] : memref<2x192x140xbf16, #tpu.memory_space<vmem>>, vector<1x192x140xbf16>
    %10 = vector.shape_cast %9 : vector<1x192x140xbf16> to vector<192x140xbf16>
    %c0_11 = arith.constant 0 : index
    %c0_12 = arith.constant 0 : index
    %c0_13 = arith.constant 0 : index
    %11 = vector.load %arg2[%c0_11, %c0_12, %c0_13] : memref<2x140x240xbf16, #tpu.memory_space<vmem>>, vector<1x140x240xbf16>
    %12 = vector.shape_cast %11 : vector<1x140x240xbf16> to vector<140x240xbf16>
    %cst_14 = arith.constant dense<0.000000e+00> : vector<192x240xf32>
    %13 = tpu.matmul %10, %12, %cst_14 {dimension_numbers = #tpu.dot_dimension_numbers<[1], [0], [0], [1], [0, 0, 1, 1], [], []>} : vector<192x140xbf16>, vector<140x240xbf16>, vector<192x240xf32> -> vector<192x240xf32>
    %14 = arith.maximumf %8, %13 : vector<192x240xf32>
    %c1_15 = arith.constant 1 : index
    %c0_16 = arith.constant 0 : index
    %c0_17 = arith.constant 0 : index
    %15 = vector.load %arg2[%c1_15, %c0_16, %c0_17] : memref<2x140x240xbf16, #tpu.memory_space<vmem>>, vector<1x140x240xbf16>
    %16 = vector.shape_cast %15 : vector<1x140x240xbf16> to vector<140x240xbf16>
    %cst_18 = arith.constant dense<0.000000e+00> : vector<192x240xf32>
    %17 = tpu.matmul %10, %16, %cst_18 {dimension_numbers = #tpu.dot_dimension_numbers<[1], [0], [0], [1], [0, 0, 1, 1], [], []>} : vector<192x140xbf16>, vector<140x240xbf16>, vector<192x240xf32> -> vector<192x240xf32>
    %18 = arith.maximumf %14, %17 : vector<192x240xf32>
    %c0_19 = arith.constant 0 : index
    %c0_20 = arith.constant 0 : index
    %19 = vector.load %arg3[%c0_19, %c0_20] : memref<1x240xf32, #tpu.memory_space<vmem>>, vector<1x240xf32>
    %20 = vector.broadcast %19 : vector<1x240xf32> to vector<192x240xf32>
    %21 = arith.addf %18, %20 : vector<192x240xf32>
    %cst_21 = arith.constant 0.000000e+00 : f32
    %22 = vector.broadcast %cst_21 : f32 to vector<192x240xf32>
    %23 = arith.maximumf %21, %22 : vector<192x240xf32>
    %24 = arith.truncf %23 : vector<192x240xf32> to vector<192x240xbf16>
    %c0_22 = arith.constant 0 : index
    %c0_23 = arith.constant 0 : index
    %25 = vector.load %arg11[%c0_22, %c0_23] : memref<192x240xbf16, #tpu.memory_space<vmem>>, vector<192x240xbf16>
    tpu.vector_store %arg11[%c0_22, %c0_23], %24 {strides = array<i32>} : memref<192x240xbf16, #tpu.memory_space<vmem>>, vector<192x240xbf16>,
    %c0_24 = arith.constant 0 : index
    %c0_25 = arith.constant 0 : index
    %26 = vector.load %arg11[%c0_24, %c0_25] : memref<192x240xbf16, #tpu.memory_space<vmem>>, vector<64x240xbf16>
    %c96 = arith.constant 96 : index
    %c0_26 = arith.constant 0 : index
    %27 = vector.load %arg11[%c96, %c0_26] : memref<192x240xbf16, #tpu.memory_space<vmem>>, vector<64x240xbf16>
    %c16 = arith.constant 16 : index
    %c0_27 = arith.constant 0 : index
    %28 = vector.load %arg11[%c16, %c0_27] : memref<192x240xbf16, #tpu.memory_space<vmem>>, vector<64x240xbf16>
    %c112 = arith.constant 112 : index
    %c0_28 = arith.constant 0 : index
    %29 = vector.load %arg11[%c112, %c0_28] : memref<192x240xbf16, #tpu.memory_space<vmem>>, vector<64x240xbf16>
    %c32 = arith.constant 32 : index
    %c0_29 = arith.constant 0 : index
    %30 = vector.load %arg11[%c32, %c0_29] : memref<192x240xbf16, #tpu.memory_space<vmem>>, vector<64x240xbf16>
    %c128 = arith.constant 128 : index
    %c0_30 = arith.constant 0 : index
    %31 = vector.load %arg11[%c128, %c0_30] : memref<192x240xbf16, #tpu.memory_space<vmem>>, vector<64x240xbf16>
    %c0_31 = arith.constant 0 : index
    %c0_32 = arith.constant 0 : index
    %c0_33 = arith.constant 0 : index
    %32 = vector.load %arg4[%c0_31, %c0_32, %c0_33] : memref<10x240x200xbf16, #tpu.memory_space<vmem>>, vector<1x240x200xbf16>
    %33 = vector.shape_cast %32 : vector<1x240x200xbf16> to vector<240x200xbf16>
    %cst_34 = arith.constant dense<0.000000e+00> : vector<64x200xf32>
    %34 = tpu.matmul %26, %33, %cst_34 {dimension_numbers = #tpu.dot_dimension_numbers<[1], [0], [0], [1], [0, 0, 1, 1], [], []>} : vector<64x240xbf16>, vector<240x200xbf16>, vector<64x200xf32> -> vector<64x200xf32>
    %c1_35 = arith.constant 1 : index
    %c0_36 = arith.constant 0 : index
    %c0_37 = arith.constant 0 : index
    %35 = vector.load %arg4[%c1_35, %c0_36, %c0_37] : memref<10x240x200xbf16, #tpu.memory_space<vmem>>, vector<1x240x200xbf16>
    %36 = vector.shape_cast %35 : vector<1x240x200xbf16> to vector<240x200xbf16>
    %cst_38 = arith.constant dense<0.000000e+00> : vector<64x200xf32>
    %37 = tpu.matmul %26, %36, %cst_38 {dimension_numbers = #tpu.dot_dimension_numbers<[1], [0], [0], [1], [0, 0, 1, 1], [], []>} : vector<64x240xbf16>, vector<240x200xbf16>, vector<64x200xf32> -> vector<64x200xf32>
    %c2 = arith.constant 2 : index
    %c0_39 = arith.constant 0 : index
    %c0_40 = arith.constant 0 : index
    %38 = vector.load %arg4[%c2, %c0_39, %c0_40] : memref<10x240x200xbf16, #tpu.memory_space<vmem>>, vector<1x240x200xbf16>
    %39 = vector.shape_cast %38 : vector<1x240x200xbf16> to vector<240x200xbf16>
    %cst_41 = arith.constant dense<0.000000e+00> : vector<64x200xf32>
    %40 = tpu.matmul %27, %39, %cst_41 {dimension_numbers = #tpu.dot_dimension_numbers<[1], [0], [0], [1], [0, 0, 1, 1], [], []>} : vector<64x240xbf16>, vector<240x200xbf16>, vector<64x200xf32> -> vector<64x200xf32>
    %c3 = arith.constant 3 : index
    %c0_42 = arith.constant 0 : index
    %c0_43 = arith.constant 0 : index
    %41 = vector.load %arg4[%c3, %c0_42, %c0_43] : memref<10x240x200xbf16, #tpu.memory_space<vmem>>, vector<1x240x200xbf16>
    %42 = vector.shape_cast %41 : vector<1x240x200xbf16> to vector<240x200xbf16>
    %cst_44 = arith.constant dense<0.000000e+00> : vector<64x200xf32>
    %43 = tpu.matmul %27, %42, %cst_44 {dimension_numbers = #tpu.dot_dimension_numbers<[1], [0], [0], [1], [0, 0, 1, 1], [], []>} : vector<64x240xbf16>, vector<240x200xbf16>, vector<64x200xf32> -> vector<64x200xf32>
    %44 = arith.addf %34, %40 : vector<64x200xf32>
    %45 = arith.addf %37, %43 : vector<64x200xf32>
    %c4 = arith.constant 4 : index
    %c0_45 = arith.constant 0 : index
    %c0_46 = arith.constant 0 : index
    %46 = vector.load %arg4[%c4, %c0_45, %c0_46] : memref<10x240x200xbf16, #tpu.memory_space<vmem>>, vector<1x240x200xbf16>
    %47 = vector.shape_cast %46 : vector<1x240x200xbf16> to vector<240x200xbf16>
    %cst_47 = arith.constant dense<0.000000e+00> : vector<64x200xf32>
    %48 = tpu.matmul %28, %47, %cst_47 {dimension_numbers = #tpu.dot_dimension_numbers<[1], [0], [0], [1], [0, 0, 1, 1], [], []>} : vector<64x240xbf16>, vector<240x200xbf16>, vector<64x200xf32> -> vector<64x200xf32>
    %c5 = arith.constant 5 : index
    %c0_48 = arith.constant 0 : index
    %c0_49 = arith.constant 0 : index
    %49 = vector.load %arg4[%c5, %c0_48, %c0_49] : memref<10x240x200xbf16, #tpu.memory_space<vmem>>, vector<1x240x200xbf16>
    %50 = vector.shape_cast %49 : vector<1x240x200xbf16> to vector<240x200xbf16>
    %cst_50 = arith.constant dense<0.000000e+00> : vector<64x200xf32>
    %51 = tpu.matmul %28, %50, %cst_50 {dimension_numbers = #tpu.dot_dimension_numbers<[1], [0], [0], [1], [0, 0, 1, 1], [], []>} : vector<64x240xbf16>, vector<240x200xbf16>, vector<64x200xf32> -> vector<64x200xf32>
    %52 = arith.addf %44, %48 : vector<64x200xf32>
    %53 = arith.addf %45, %51 : vector<64x200xf32>
    %c6 = arith.constant 6 : index
    %c0_51 = arith.constant 0 : index
    %c0_52 = arith.constant 0 : index
    %54 = vector.load %arg4[%c6, %c0_51, %c0_52] : memref<10x240x200xbf16, #tpu.memory_space<vmem>>, vector<1x240x200xbf16>
    %55 = vector.shape_cast %54 : vector<1x240x200xbf16> to vector<240x200xbf16>
    %cst_53 = arith.constant dense<0.000000e+00> : vector<64x200xf32>
    %56 = tpu.matmul %29, %55, %cst_53 {dimension_numbers = #tpu.dot_dimension_numbers<[1], [0], [0], [1], [0, 0, 1, 1], [], []>} : vector<64x240xbf16>, vector<240x200xbf16>, vector<64x200xf32> -> vector<64x200xf32>
    %c7 = arith.constant 7 : index
    %c0_54 = arith.constant 0 : index
    %c0_55 = arith.constant 0 : index
    %57 = vector.load %arg4[%c7, %c0_54, %c0_55] : memref<10x240x200xbf16, #tpu.memory_space<vmem>>, vector<1x240x200xbf16>
    %58 = vector.shape_cast %57 : vector<1x240x200xbf16> to vector<240x200xbf16>
    %cst_56 = arith.constant dense<0.000000e+00> : vector<64x200xf32>
    %59 = tpu.matmul %29, %58, %cst_56 {dimension_numbers = #tpu.dot_dimension_numbers<[1], [0], [0], [1], [0, 0, 1, 1], [], []>} : vector<64x240xbf16>, vector<240x200xbf16>, vector<64x200xf32> -> vector<64x200xf32>
    %60 = arith.addf %52, %56 : vector<64x200xf32>
    %61 = arith.addf %53, %59 : vector<64x200xf32>
    %c8 = arith.constant 8 : index
    %c0_57 = arith.constant 0 : index
    %c0_58 = arith.constant 0 : index
    %62 = vector.load %arg4[%c8, %c0_57, %c0_58] : memref<10x240x200xbf16, #tpu.memory_space<vmem>>, vector<1x240x200xbf16>
    %63 = vector.shape_cast %62 : vector<1x240x200xbf16> to vector<240x200xbf16>
    %cst_59 = arith.constant dense<0.000000e+00> : vector<64x200xf32>
    %64 = tpu.matmul %30, %63, %cst_59 {dimension_numbers = #tpu.dot_dimension_numbers<[1], [0], [0], [1], [0, 0, 1, 1], [], []>} : vector<64x240xbf16>, vector<240x200xbf16>, vector<64x200xf32> -> vector<64x200xf32>
    %c9 = arith.constant 9 : index
    %c0_60 = arith.constant 0 : index
    %c0_61 = arith.constant 0 : index
    %65 = vector.load %arg4[%c9, %c0_60, %c0_61] : memref<10x240x200xbf16, #tpu.memory_space<vmem>>, vector<1x240x200xbf16>
    %66 = vector.shape_cast %65 : vector<1x240x200xbf16> to vector<240x200xbf16>
    %cst_62 = arith.constant dense<0.000000e+00> : vector<64x200xf32>
    %67 = tpu.matmul %30, %66, %cst_62 {dimension_numbers = #tpu.dot_dimension_numbers<[1], [0], [0], [1], [0, 0, 1, 1], [], []>} : vector<64x240xbf16>, vector<240x200xbf16>, vector<64x200xf32> -> vector<64x200xf32>
    %68 = arith.addf %60, %64 : vector<64x200xf32>
    %69 = arith.addf %61, %67 : vector<64x200xf32>
    %70 = arith.maximumf %68, %69 : vector<64x200xf32>
    %c0_63 = arith.constant 0 : index
    %c0_64 = arith.constant 0 : index
    %c0_65 = arith.constant 0 : index
    %71 = vector.load %arg4[%c0_63, %c0_64, %c0_65] : memref<10x240x200xbf16, #tpu.memory_space<vmem>>, vector<1x240x200xbf16>
    %72 = vector.shape_cast %71 : vector<1x240x200xbf16> to vector<240x200xbf16>
    %cst_66 = arith.constant dense<0.000000e+00> : vector<64x200xf32>
    %73 = tpu.matmul %27, %72, %cst_66 {dimension_numbers = #tpu.dot_dimension_numbers<[1], [0], [0], [1], [0, 0, 1, 1], [], []>} : vector<64x240xbf16>, vector<240x200xbf16>, vector<64x200xf32> -> vector<64x200xf32>
    %c1_67 = arith.constant 1 : index
    %c0_68 = arith.constant 0 : index
    %c0_69 = arith.constant 0 : index
    %74 = vector.load %arg4[%c1_67, %c0_68, %c0_69] : memref<10x240x200xbf16, #tpu.memory_space<vmem>>, vector<1x240x200xbf16>
    %75 = vector.shape_cast %74 : vector<1x240x200xbf16> to vector<240x200xbf16>
    %cst_70 = arith.constant dense<0.000000e+00> : vector<64x200xf32>
    %76 = tpu.matmul %27, %75, %cst_70 {dimension_numbers = #tpu.dot_dimension_numbers<[1], [0], [0], [1], [0, 0, 1, 1], [], []>} : vector<64x240xbf16>, vector<240x200xbf16>, vector<64x200xf32> -> vector<64x200xf32>
    %c2_71 = arith.constant 2 : index
    %c0_72 = arith.constant 0 : index
    %c0_73 = arith.constant 0 : index
    %77 = vector.load %arg4[%c2_71, %c0_72, %c0_73] : memref<10x240x200xbf16, #tpu.memory_space<vmem>>, vector<1x240x200xbf16>
    %78 = vector.shape_cast %77 : vector<1x240x200xbf16> to vector<240x200xbf16>
    %cst_74 = arith.constant dense<0.000000e+00> : vector<64x200xf32>
    %79 = tpu.matmul %28, %78, %cst_74 {dimension_numbers = #tpu.dot_dimension_numbers<[1], [0], [0], [1], [0, 0, 1, 1], [], []>} : vector<64x240xbf16>, vector<240x200xbf16>, vector<64x200xf32> -> vector<64x200xf32>
    %c3_75 = arith.constant 3 : index
    %c0_76 = arith.constant 0 : index
    %c0_77 = arith.constant 0 : index
    %80 = vector.load %arg4[%c3_75, %c0_76, %c0_77] : memref<10x240x200xbf16, #tpu.memory_space<vmem>>, vector<1x240x200xbf16>
    %81 = vector.shape_cast %80 : vector<1x240x200xbf16> to vector<240x200xbf16>
    %cst_78 = arith.constant dense<0.000000e+00> : vector<64x200xf32>
    %82 = tpu.matmul %28, %81, %cst_78 {dimension_numbers = #tpu.dot_dimension_numbers<[1], [0], [0], [1], [0, 0, 1, 1], [], []>} : vector<64x240xbf16>, vector<240x200xbf16>, vector<64x200xf32> -> vector<64x200xf32>
    %83 = arith.addf %73, %79 : vector<64x200xf32>
    %84 = arith.addf %76, %82 : vector<64x200xf32>
    %c4_79 = arith.constant 4 : index
    %c0_80 = arith.constant 0 : index
    %c0_81 = arith.constant 0 : index
    %85 = vector.load %arg4[%c4_79, %c0_80, %c0_81] : memref<10x240x200xbf16, #tpu.memory_space<vmem>>, vector<1x240x200xbf16>
    %86 = vector.shape_cast %85 : vector<1x240x200xbf16> to vector<240x200xbf16>
    %cst_82 = arith.constant dense<0.000000e+00> : vector<64x200xf32>
    %87 = tpu.matmul %29, %86, %cst_82 {dimension_numbers = #tpu.dot_dimension_numbers<[1], [0], [0], [1], [0, 0, 1, 1], [], []>} : vector<64x240xbf16>, vector<240x200xbf16>, vector<64x200xf32> -> vector<64x200xf32>
    %c5_83 = arith.constant 5 : index
    %c0_84 = arith.constant 0 : index
    %c0_85 = arith.constant 0 : index
    %88 = vector.load %arg4[%c5_83, %c0_84, %c0_85] : memref<10x240x200xbf16, #tpu.memory_space<vmem>>, vector<1x240x200xbf16>
    %89 = vector.shape_cast %88 : vector<1x240x200xbf16> to vector<240x200xbf16>
    %cst_86 = arith.constant dense<0.000000e+00> : vector<64x200xf32>
    %90 = tpu.matmul %29, %89, %cst_86 {dimension_numbers = #tpu.dot_dimension_numbers<[1], [0], [0], [1], [0, 0, 1, 1], [], []>} : vector<64x240xbf16>, vector<240x200xbf16>, vector<64x200xf32> -> vector<64x200xf32>
    %91 = arith.addf %83, %87 : vector<64x200xf32>
    %92 = arith.addf %84, %90 : vector<64x200xf32>
    %c6_87 = arith.constant 6 : index
    %c0_88 = arith.constant 0 : index
    %c0_89 = arith.constant 0 : index
    %93 = vector.load %arg4[%c6_87, %c0_88, %c0_89] : memref<10x240x200xbf16, #tpu.memory_space<vmem>>, vector<1x240x200xbf16>
    %94 = vector.shape_cast %93 : vector<1x240x200xbf16> to vector<240x200xbf16>
    %cst_90 = arith.constant dense<0.000000e+00> : vector<64x200xf32>
    %95 = tpu.matmul %30, %94, %cst_90 {dimension_numbers = #tpu.dot_dimension_numbers<[1], [0], [0], [1], [0, 0, 1, 1], [], []>} : vector<64x240xbf16>, vector<240x200xbf16>, vector<64x200xf32> -> vector<64x200xf32>
    %c7_91 = arith.constant 7 : index
    %c0_92 = arith.constant 0 : index
    %c0_93 = arith.constant 0 : index
    %96 = vector.load %arg4[%c7_91, %c0_92, %c0_93] : memref<10x240x200xbf16, #tpu.memory_space<vmem>>, vector<1x240x200xbf16>
    %97 = vector.shape_cast %96 : vector<1x240x200xbf16> to vector<240x200xbf16>
    %cst_94 = arith.constant dense<0.000000e+00> : vector<64x200xf32>
    %98 = tpu.matmul %30, %97, %cst_94 {dimension_numbers = #tpu.dot_dimension_numbers<[1], [0], [0], [1], [0, 0, 1, 1], [], []>} : vector<64x240xbf16>, vector<240x200xbf16>, vector<64x200xf32> -> vector<64x200xf32>
    %99 = arith.addf %91, %95 : vector<64x200xf32>
    %100 = arith.addf %92, %98 : vector<64x200xf32>
    %c8_95 = arith.constant 8 : index
    %c0_96 = arith.constant 0 : index
    %c0_97 = arith.constant 0 : index
    %101 = vector.load %arg4[%c8_95, %c0_96, %c0_97] : memref<10x240x200xbf16, #tpu.memory_space<vmem>>, vector<1x240x200xbf16>
    %102 = vector.shape_cast %101 : vector<1x240x200xbf16> to vector<240x200xbf16>
    %cst_98 = arith.constant dense<0.000000e+00> : vector<64x200xf32>
    %103 = tpu.matmul %31, %102, %cst_98 {dimension_numbers = #tpu.dot_dimension_numbers<[1], [0], [0], [1], [0, 0, 1, 1], [], []>} : vector<64x240xbf16>, vector<240x200xbf16>, vector<64x200xf32> -> vector<64x200xf32>
    %c9_99 = arith.constant 9 : index
    %c0_100 = arith.constant 0 : index
    %c0_101 = arith.constant 0 : index
    %104 = vector.load %arg4[%c9_99, %c0_100, %c0_101] : memref<10x240x200xbf16, #tpu.memory_space<vmem>>, vector<1x240x200xbf16>
    %105 = vector.shape_cast %104 : vector<1x240x200xbf16> to vector<240x200xbf16>
    %cst_102 = arith.constant dense<0.000000e+00> : vector<64x200xf32>
    %106 = tpu.matmul %31, %105, %cst_102 {dimension_numbers = #tpu.dot_dimension_numbers<[1], [0], [0], [1], [0, 0, 1, 1], [], []>} : vector<64x240xbf16>, vector<240x200xbf16>, vector<64x200xf32> -> vector<64x200xf32>
    %107 = arith.addf %99, %103 : vector<64x200xf32>
    %108 = arith.addf %100, %106 : vector<64x200xf32>
    %109 = arith.maximumf %107, %108 : vector<64x200xf32>
    %110 = arith.maximumf %70, %109 : vector<64x200xf32>
    %c0_103 = arith.constant 0 : index
    %c0_104 = arith.constant 0 : index
    %111 = vector.load %arg5[%c0_103, %c0_104] : memref<1x200xf32, #tpu.memory_space<vmem>>, vector<1x200xf32>
    %112 = vector.broadcast %111 : vector<1x200xf32> to vector<64x200xf32>
    %113 = arith.addf %110, %112 : vector<64x200xf32>
    %cst_105 = arith.constant 0.000000e+00 : f32
    %114 = vector.broadcast %cst_105 : f32 to vector<64x200xf32>
    %115 = arith.maximumf %113, %114 : vector<64x200xf32>
    %116 = vector.extract_strided_slice %115 {offsets = [0, 0], sizes = [16, 200], strides = [1, 1]} : vector<64x200xf32> to vector<16x200xf32>
    %117 = arith.truncf %116 : vector<16x200xf32> to vector<16x200xbf16>
    %c0_106 = arith.constant 0 : index
    %c0_107 = arith.constant 0 : index
    %c0_108 = arith.constant 0 : index
    %118 = vector.load %arg6[%c0_106, %c0_107, %c0_108] : memref<4x200x32xbf16, #tpu.memory_space<vmem>>, vector<1x200x32xbf16>
    %119 = vector.shape_cast %118 : vector<1x200x32xbf16> to vector<200x32xbf16>
    %cst_109 = arith.constant dense<0.000000e+00> : vector<16x32xf32>
    %120 = tpu.matmul %117, %119, %cst_109 {dimension_numbers = #tpu.dot_dimension_numbers<[1], [0], [0], [1], [0, 0, 1, 1], [], []>} : vector<16x200xbf16>, vector<200x32xbf16>, vector<16x32xf32> -> vector<16x32xf32>
    %121 = vector.extract_strided_slice %115 {offsets = [16, 0], sizes = [16, 200], strides = [1, 1]} : vector<64x200xf32> to vector<16x200xf32>
    %122 = arith.truncf %121 : vector<16x200xf32> to vector<16x200xbf16>
    %c1_110 = arith.constant 1 : index
    %c0_111 = arith.constant 0 : index
    %c0_112 = arith.constant 0 : index
    %123 = vector.load %arg6[%c1_110, %c0_111, %c0_112] : memref<4x200x32xbf16, #tpu.memory_space<vmem>>, vector<1x200x32xbf16>
    %124 = vector.shape_cast %123 : vector<1x200x32xbf16> to vector<200x32xbf16>
    %cst_113 = arith.constant dense<0.000000e+00> : vector<16x32xf32>
    %125 = tpu.matmul %122, %124, %cst_113 {dimension_numbers = #tpu.dot_dimension_numbers<[1], [0], [0], [1], [0, 0, 1, 1], [], []>} : vector<16x200xbf16>, vector<200x32xbf16>, vector<16x32xf32> -> vector<16x32xf32>
    %126 = arith.addf %120, %125 : vector<16x32xf32>
    %127 = vector.extract_strided_slice %115 {offsets = [32, 0], sizes = [16, 200], strides = [1, 1]} : vector<64x200xf32> to vector<16x200xf32>
    %128 = arith.truncf %127 : vector<16x200xf32> to vector<16x200xbf16>
    %c2_114 = arith.constant 2 : index
    %c0_115 = arith.constant 0 : index
    %c0_116 = arith.constant 0 : index
    %129 = vector.load %arg6[%c2_114, %c0_115, %c0_116] : memref<4x200x32xbf16, #tpu.memory_space<vmem>>, vector<1x200x32xbf16>
    %130 = vector.shape_cast %129 : vector<1x200x32xbf16> to vector<200x32xbf16>
    %cst_117 = arith.constant dense<0.000000e+00> : vector<16x32xf32>
    %131 = tpu.matmul %128, %130, %cst_117 {dimension_numbers = #tpu.dot_dimension_numbers<[1], [0], [0], [1], [0, 0, 1, 1], [], []>} : vector<16x200xbf16>, vector<200x32xbf16>, vector<16x32xf32> -> vector<16x32xf32>
    %132 = arith.addf %126, %131 : vector<16x32xf32>
    %133 = vector.extract_strided_slice %115 {offsets = [48, 0], sizes = [16, 200], strides = [1, 1]} : vector<64x200xf32> to vector<16x200xf32>
    %134 = arith.truncf %133 : vector<16x200xf32> to vector<16x200xbf16>
    %c3_118 = arith.constant 3 : index
    %c0_119 = arith.constant 0 : index
    %c0_120 = arith.constant 0 : index
    %135 = vector.load %arg6[%c3_118, %c0_119, %c0_120] : memref<4x200x32xbf16, #tpu.memory_space<vmem>>, vector<1x200x32xbf16>
    %136 = vector.shape_cast %135 : vector<1x200x32xbf16> to vector<200x32xbf16>
    %cst_121 = arith.constant dense<0.000000e+00> : vector<16x32xf32>
    %137 = tpu.matmul %134, %136, %cst_121 {dimension_numbers = #tpu.dot_dimension_numbers<[1], [0], [0], [1], [0, 0, 1, 1], [], []>} : vector<16x200xbf16>, vector<200x32xbf16>, vector<16x32xf32> -> vector<16x32xf32>
    %138 = arith.addf %132, %137 : vector<16x32xf32>
    %c0_122 = arith.constant 0 : index
    %c0_123 = arith.constant 0 : index
    %139 = vector.load %arg7[%c0_122, %c0_123] : memref<1x32xf32, #tpu.memory_space<vmem>>, vector<1x32xf32>
    %140 = vector.broadcast %139 : vector<1x32xf32> to vector<16x32xf32>
    %141 = arith.addf %138, %140 : vector<16x32xf32>
    %cst_124 = arith.constant 0.000000e+00 : f32
    %142 = vector.broadcast %cst_124 : f32 to vector<16x32xf32>
    %143 = arith.maximumf %141, %142 : vector<16x32xf32>
    %c0_125 = arith.constant 0 : index
    %c0_126 = arith.constant 0 : index
    %144 = vector.load %arg8[%c0_125, %c0_126] : memref<32x128xf32, #tpu.memory_space<vmem>>, vector<32x128xf32>
    %cst_127 = arith.constant dense<0.000000e+00> : vector<16x128xf32>
    %145 = tpu.matmul %143, %144, %cst_127 {dimension_numbers = #tpu.dot_dimension_numbers<[1], [0], [0], [1], [0, 0, 1, 1], [], []>} : vector<16x32xf32>, vector<32x128xf32>, vector<16x128xf32> -> vector<16x128xf32>
    %c0_128 = arith.constant 0 : index
    %c0_129 = arith.constant 0 : index
    %146 = vector.load %arg9[%c0_128, %c0_129] : memref<1x128xf32, #tpu.memory_space<vmem>>, vector<1x128xf32>
    %147 = vector.broadcast %146 : vector<1x128xf32> to vector<16x128xf32>
    %148 = arith.addf %145, %147 : vector<16x128xf32>
    %cst_130 = arith.constant dense<0xFF800000> : vector<16xf32>
    %149 = vector.multi_reduction <maximumf>, %148, %cst_130 [1] : vector<16x128xf32> to vector<16xf32>
    %150 = vector.shape_cast %149 : vector<16xf32> to vector<16x1xf32>
    %151 = vector.broadcast %150 : vector<16x1xf32> to vector<16x128xf32>
    %152 = arith.subf %148, %151 : vector<16x128xf32>
    %153 = math.exp %152 : vector<16x128xf32>
    %cst_131 = arith.constant dense<0.000000e+00> : vector<16xf32>
    %154 = vector.multi_reduction <add>, %153, %cst_131 [1] : vector<16x128xf32> to vector<16xf32>
    %155 = vector.shape_cast %154 : vector<16xf32> to vector<16x1xf32>
    %156 = math.log %155 : vector<16x1xf32>
    %157 = vector.broadcast %156 : vector<16x1xf32> to vector<16x128xf32>
    %158 = arith.subf %152, %157 : vector<16x128xf32>
    %c0_132 = arith.constant 0 : index
    %c0_133 = arith.constant 0 : index
    %159 = vector.load %arg10[%c0_132, %c0_133] : memref<16x128xf32, #tpu.memory_space<vmem>>, vector<16x128xf32>
    tpu.vector_store %arg10[%c0_132, %c0_133], %158 {strides = array<i32>} : memref<16x128xf32, #tpu.memory_space<vmem>>, vector<16x128xf32>,
    return
  }
  func.func @transform_0(%arg0: i32) -> (i32, i32, i32) {
    %c0_i32 = arith.constant 0 : i32
    %c0_i32_0 = arith.constant 0 : i32
    %c0_i32_1 = arith.constant 0 : i32
    return %c0_i32, %arg0, %c0_i32_0 : i32, i32, i32
  }
  func.func @transform_1(%arg0: i32) -> (i32, i32, i32) {
    %c0_i32 = arith.constant 0 : i32
    %c0_i32_0 = arith.constant 0 : i32
    %c0_i32_1 = arith.constant 0 : i32
    %c0_i32_2 = arith.constant 0 : i32
    return %c0_i32, %c0_i32_0, %c0_i32_1 : i32, i32, i32
  }
  func.func @transform_2(%arg0: i32) -> (i32, i32) {
    %c0_i32 = arith.constant 0 : i32
    %c0_i32_0 = arith.constant 0 : i32
    %c0_i32_1 = arith.constant 0 : i32
    return %c0_i32, %c0_i32_0 : i32, i32
  }
  func.func @transform_3(%arg0: i32) -> (i32, i32, i32) {
    %c0_i32 = arith.constant 0 : i32
    %c0_i32_0 = arith.constant 0 : i32
    %c0_i32_1 = arith.constant 0 : i32
    %c0_i32_2 = arith.constant 0 : i32
    return %c0_i32, %c0_i32_0, %c0_i32_1 : i32, i32, i32
  }
  func.func @transform_4(%arg0: i32) -> (i32, i32) {
    %c0_i32 = arith.constant 0 : i32
    %c0_i32_0 = arith.constant 0 : i32
    %c0_i32_1 = arith.constant 0 : i32
    return %c0_i32, %c0_i32_0 : i32, i32
  }
  func.func @transform_5(%arg0: i32) -> (i32, i32, i32) {
    %c0_i32 = arith.constant 0 : i32
    %c0_i32_0 = arith.constant 0 : i32
    %c0_i32_1 = arith.constant 0 : i32
    %c0_i32_2 = arith.constant 0 : i32
    return %c0_i32, %c0_i32_0, %c0_i32_1 : i32, i32, i32
  }
  func.func @transform_6(%arg0: i32) -> (i32, i32) {
    %c0_i32 = arith.constant 0 : i32
    %c0_i32_0 = arith.constant 0 : i32
    %c0_i32_1 = arith.constant 0 : i32
    return %c0_i32, %c0_i32_0 : i32, i32
  }
  func.func @transform_7(%arg0: i32) -> (i32, i32) {
    %c0_i32 = arith.constant 0 : i32
    %c0_i32_0 = arith.constant 0 : i32
    %c0_i32_1 = arith.constant 0 : i32
    return %c0_i32, %c0_i32_0 : i32, i32
  }
  func.func @transform_8(%arg0: i32) -> (i32, i32) {
    %c0_i32 = arith.constant 0 : i32
    %c0_i32_0 = arith.constant 0 : i32
    %c0_i32_1 = arith.constant 0 : i32
    return %c0_i32, %c0_i32_0 : i32, i32
  }
  func.func @transform_9(%arg0: i32) -> (i32, i32) {
    %c0_i32 = arith.constant 0 : i32
    %c0_i32_0 = arith.constant 0 : i32
    return %arg0, %c0_i32 : i32, i32
  }
}

</mosaic_0001>

<llo_original>
// kernel: net_forward_pallas.1
$region0: #{net_forward_pallas.1}
  #allocation0 [shape = 'u32[]', space=smem, size = 0x4, offset = 0x4, fixed_abs, tag = 'smem constant byte address 0x4 - core index']
  #allocation1 [shape = 'u32[144,128]{1,0:T(1,128)}', space=vmem, size = 0x12000, scoped, tag = 'internal scratch']
  #allocation2 [shape = 'bf16[192,240]{1,0:T(16,128)(2,1)}', space=vmem, size = 0x18000, scoped, tag = 'scratch operand']
  %s0 = inlined_call_operand.vmem [shape: bf16[2,192,140], index: 0, kind: input, shape index: {}]
  %s1 = inlined_call_operand.vmem [shape: bf16[2,140,240], index: 1, kind: input, shape index: {}]
  %s2 = inlined_call_operand.vmem [shape: f32[1,240], index: 2, kind: input, shape index: {}]
  %s3 = inlined_call_operand.vmem [shape: bf16[10,240,200], index: 3, kind: input, shape index: {}]
  %s4 = inlined_call_operand.vmem [shape: f32[1,200], index: 4, kind: input, shape index: {}]
  %s5 = inlined_call_operand.vmem [shape: bf16[4,200,32], index: 5, kind: input, shape index: {}]
  %s6 = inlined_call_operand.vmem [shape: f32[1,32], index: 6, kind: input, shape index: {}]
  %s7 = inlined_call_operand.vmem [shape: f32[32,128], index: 7, kind: input, shape index: {}]
  %s8 = inlined_call_operand.vmem [shape: f32[1,128], index: 8, kind: input, shape index: {}]
  %s9 = inlined_call_operand.vmem [shape: f32[16,128], index: 9, kind: output, shape index: {}]
  %s10 = sld [smem:[#allocation0]]
  $region46: #{net_forward_pallas.1} parent=0
    _
  %s12 = ssub.s32 1, %s10
  %s13 = scalar_select 0, %s12, %s10
  // Predicated region
  $region2: #{net_forward_pallas.1} parent=0 // pred_check
    _
  $region3: #{net_forward_pallas.1} parent=0 // pred_check_branch
    %15 = sbr.rel (0) target = $region5
  $region4: #{net_forward_pallas.1} parent=0 // pred_region
    _
  $region5: #{net_forward_pallas.1} parent=0 // pred_fallthru
    _
  // Predicated region
  $region6: #{net_forward_pallas.1} parent=0 // pred_check
    _
  $region7: #{net_forward_pallas.1} parent=0 // pred_check_branch
    %17 = sbr.rel (0) target = $region9
  $region8: #{net_forward_pallas.1} parent=0 // pred_region
    _
  $region9: #{net_forward_pallas.1} parent=0 // pred_fallthru
    _
  // Predicated region
  $region10: #{net_forward_pallas.1} parent=0 // pred_check
    _
  $region11: #{net_forward_pallas.1} parent=0 // pred_check_branch
    %19 = sbr.rel (0) target = $region13
  $region12: #{net_forward_pallas.1} parent=0 // pred_region
    _
  $region13: #{net_forward_pallas.1} parent=0 // pred_fallthru
    _
  // Predicated region
  $region14: #{net_forward_pallas.1} parent=0 // pred_check
    _
  $region15: #{net_forward_pallas.1} parent=0 // pred_check_branch
    %21 = sbr.rel (0) target = $region17
  $region16: #{net_forward_pallas.1} parent=0 // pred_region
    _
  $region17: #{net_forward_pallas.1} parent=0 // pred_fallthru
    _
  // Predicated region
  $region18: #{net_forward_pallas.1} parent=0 // pred_check
    _
  $region19: #{net_forward_pallas.1} parent=0 // pred_check_branch
    %23 = sbr.rel (0) target = $region21
  $region20: #{net_forward_pallas.1} parent=0 // pred_region
    _
  $region21: #{net_forward_pallas.1} parent=0 // pred_fallthru
    _
  // Predicated region
  $region22: #{net_forward_pallas.1} parent=0 // pred_check
    _
  $region23: #{net_forward_pallas.1} parent=0 // pred_check_branch
    %25 = sbr.rel (0) target = $region25
  $region24: #{net_forward_pallas.1} parent=0 // pred_region
    _
  $region25: #{net_forward_pallas.1} parent=0 // pred_fallthru
    _
  // Predicated region
  $region26: #{net_forward_pallas.1} parent=0 // pred_check
    _
  $region27: #{net_forward_pallas.1} parent=0 // pred_check_branch
    %27 = sbr.rel (0) target = $region29
  $region28: #{net_forward_pallas.1} parent=0 // pred_region
    _
  $region29: #{net_forward_pallas.1} parent=0 // pred_fallthru
    _
  // Predicated region
  $region30: #{net_forward_pallas.1} parent=0 // pred_check
    _
  $region31: #{net_forward_pallas.1} parent=0 // pred_check_branch
    %29 = sbr.rel (0) target = $region33
  $region32: #{net_forward_pallas.1} parent=0 // pred_region
    _
  $region33: #{net_forward_pallas.1} parent=0 // pred_fallthru
    _
  // Predicated region
  $region34: #{net_forward_pallas.1} parent=0 // pred_check
    _
  $region35: #{net_forward_pallas.1} parent=0 // pred_check_branch
    %31 = sbr.rel (0) target = $region37
  $region36: #{net_forward_pallas.1} parent=0 // pred_region
    _
  $region37: #{net_forward_pallas.1} parent=0 // pred_fallthru
    _
  %v33 = vld [vmem:[%s0] sm:$0xff]
  %v34 = vld [vmem:[%s0 + $0x8] sm:$0xff]
  %v35 = vld [vmem:[%s0 + $0x10] sm:$0xff]
  %v36 = vld [vmem:[%s0 + $0x18] sm:$0xff]
  %v37 = vld [vmem:[%s0 + $0x20] sm:$0xff]
  %v38 = vld [vmem:[%s0 + $0x28] sm:$0xff]
  %v39 = vld [vmem:[%s0 + $0x30] sm:$0xff]
  %v40 = vld [vmem:[%s0 + $0x38] sm:$0xff]
  %v41 = vld [vmem:[%s0 + $0x40] sm:$0xff]
  %v42 = vld [vmem:[%s0 + $0x48] sm:$0xff]
  %v43 = vld [vmem:[%s0 + $0x50] sm:$0xff]
  %v44 = vld [vmem:[%s0 + $0x58] sm:$0xff]
  %v45 = vld [vmem:[%s0 + $0x60] sm:$0xff]
  %v46 = vld [vmem:[%s0 + $0x68] sm:$0xff]
  %v47 = vld [vmem:[%s0 + $0x70] sm:$0xff]
  %v48 = vld [vmem:[%s0 + $0x78] sm:$0xff]
  %v49 = vld [vmem:[%s0 + $0x80] sm:$0xff]
  %v50 = vld [vmem:[%s0 + $0x88] sm:$0xff]
  %v51 = vld [vmem:[%s0 + $0x90] sm:$0xff]
  %v52 = vld [vmem:[%s0 + $0x98] sm:$0xff]
  %v53 = vld [vmem:[%s0 + $0xa0] sm:$0xff]
  %v54 = vld [vmem:[%s0 + $0xa8] sm:$0xff]
  %v55 = vld [vmem:[%s0 + $0xb0] sm:$0xff]
  %v56 = vld [vmem:[%s0 + $0xb8] sm:$0xff]
  %v57 = vld [vmem:[%s1] sm:$0xff]
  %v58 = vld [vmem:[%s1 + $0x8] sm:$0xff]
  %v59 = vld [vmem:[%s1 + $0x10] sm:$0xff]
  %v60 = vld [vmem:[%s1 + $0x18] sm:$0xff]
  %v61 = vld [vmem:[%s1 + $0x20] sm:$0xff]
  %v62 = vld [vmem:[%s1 + $0x28] sm:$0xff]
  %v63 = vld [vmem:[%s1 + $0x30] sm:$0xff]
  %v64 = vld [vmem:[%s1 + $0x38] sm:$0xff]
  %v65 = vld [vmem:[%s1 + $0x40] sm:$0xff]
  %v66 = vld [vmem:[%s1 + $0x48] sm:$0xff]
  %v67 = vld [vmem:[%s1 + $0x50] sm:$0xff]
  %v68 = vld [vmem:[%s1 + $0x58] sm:$0xff]
  %v69 = vld [vmem:[%s1 + $0x60] sm:$0xff]
  %v70 = vld [vmem:[%s1 + $0x68] sm:$0xff]
  %v71 = vld [vmem:[%s1 + $0x70] sm:$0xff]
  %v72 = vld [vmem:[%s1 + $0x78] sm:$0xff]
  %v73 = vld [vmem:[%s1 + $0x80] sm:$0xff]
  %v74 = vld [vmem:[%s1 + $0x88] sm:$0x33]
  %v99 = vunpack.c.l.b16 %v33
  %v100 = vunpack.c.h.b16 %v33
  %v101 = vunpack.c.l.b16 %v34
  %v102 = vunpack.c.h.b16 %v34
  %v103 = vunpack.c.l.b16 %v35
  %v104 = vunpack.c.h.b16 %v35
  %v105 = vunpack.c.l.b16 %v36
  %v106 = vunpack.c.h.b16 %v36
  %v107 = vunpack.c.l.b16 %v37
  %v108 = vunpack.c.h.b16 %v37
  %v109 = vunpack.c.l.b16 %v38
  %v110 = vunpack.c.h.b16 %v38
  %v111 = vunpack.c.l.b16 %v39
  %v112 = vunpack.c.h.b16 %v39
  %v113 = vunpack.c.l.b16 %v40
  %v114 = vunpack.c.h.b16 %v40
  %v115 = vunpack.c.l.b16 %v41
  %v116 = vunpack.c.h.b16 %v41
  %v117 = vunpack.c.l.b16 %v42
  %v118 = vunpack.c.h.b16 %v42
  %v119 = vunpack.c.l.b16 %v43
  %v120 = vunpack.c.h.b16 %v43
  %v121 = vunpack.c.l.b16 %v44
  %v122 = vunpack.c.h.b16 %v44
  %v123 = vunpack.c.l.b16 %v45
  %v124 = vunpack.c.h.b16 %v45
  %v125 = vunpack.c.l.b16 %v46
  %v126 = vunpack.c.h.b16 %v46
  %v127 = vunpack.c.l.b16 %v47
  %v128 = vunpack.c.h.b16 %v47
  %v129 = vunpack.c.l.b16 %v48
  %v130 = vunpack.c.h.b16 %v48
  %v131 = vunpack.c.l.b16 %v49
  %v132 = vunpack.c.h.b16 %v49
  %v133 = vunpack.c.l.b16 %v50
  %v134 = vunpack.c.h.b16 %v50
  %v135 = vunpack.c.l.b16 %v51
  %v136 = vunpack.c.h.b16 %v51
  %v137 = vunpack.c.l.b16 %v52
  %v138 = vunpack.c.h.b16 %v52
  %v139 = vunpack.c.l.b16 %v53
  %v140 = vunpack.c.h.b16 %v53
  %v141 = vunpack.c.l.b16 %v54
  %v142 = vunpack.c.h.b16 %v54
  %v143 = vunpack.c.l.b16 %v55
  %v144 = vunpack.c.h.b16 %v55
  %v145 = vunpack.c.l.b16 %v56
  %v146 = vunpack.c.h.b16 %v56
  %v147 = vpack.c.b16 %v101, %v99
  %v148 = vpack.c.b16 %v102, %v100
  %v149 = vpack.c.b16 %v105, %v103
  %v150 = vpack.c.b16 %v106, %v104
  %v151 = vpack.c.b16 %v109, %v107
  %v152 = vpack.c.b16 %v110, %v108
  %v153 = vpack.c.b16 %v113, %v111
  %v154 = vpack.c.b16 %v114, %v112
  %v155 = vpack.c.b16 %v117, %v115
  %v156 = vpack.c.b16 %v118, %v116
  %v157 = vpack.c.b16 %v121, %v119
  %v158 = vpack.c.b16 %v122, %v120
  %v159 = vpack.c.b16 %v125, %v123
  %v160 = vpack.c.b16 %v126, %v124
  %v161 = vpack.c.b16 %v129, %v127
  %v162 = vpack.c.b16 %v130, %v128
  %v163 = vpack.c.b16 %v133, %v131
  %v164 = vpack.c.b16 %v134, %v132
  %v165 = vpack.c.b16 %v137, %v135
  %v166 = vpack.c.b16 %v138, %v136
  %v167 = vpack.c.b16 %v141, %v139
  %v168 = vpack.c.b16 %v142, %v140
  %v169 = vpack.c.b16 %v145, %v143
  %v170 = vpack.c.b16 %v146, %v144
  %v201 = vunpack.c.l.b16 %v57
  %v202 = vunpack.c.h.b16 %v57
  %v203 = vunpack.c.l.b16 %v58
  %v204 = vunpack.c.h.b16 %v58
  %v205 = vunpack.c.l.b16 %v59
  %v206 = vunpack.c.h.b16 %v59
  %v207 = vunpack.c.l.b16 %v60
  %v208 = vunpack.c.h.b16 %v60
  %v209 = vunpack.c.l.b16 %v61
  %v210 = vunpack.c.h.b16 %v61
  %v211 = vunpack.c.l.b16 %v62
  %v212 = vunpack.c.h.b16 %v62
  %v213 = vunpack.c.l.b16 %v63
  %v214 = vunpack.c.h.b16 %v63
  %v215 = vunpack.c.l.b16 %v64
  %v216 = vunpack.c.h.b16 %v64
  %v217 = vunpack.c.l.b16 %v65
  %v218 = vunpack.c.h.b16 %v65
  %v219 = vunpack.c.l.b16 %v66
  %v220 = vunpack.c.h.b16 %v66
  %v221 = vunpack.c.l.b16 %v67
  %v222 = vunpack.c.h.b16 %v67
  %v223 = vunpack.c.l.b16 %v68
  %v224 = vunpack.c.h.b16 %v68
  %v225 = vunpack.c.l.b16 %v69
  %v226 = vunpack.c.h.b16 %v69
  %v227 = vunpack.c.l.b16 %v70
  %v228 = vunpack.c.h.b16 %v70
  %v229 = vunpack.c.l.b16 %v71
  %v230 = vunpack.c.h.b16 %v71
  %v231 = vunpack.c.l.b16 %v72
  %v232 = vunpack.c.h.b16 %v72
  %v233 = vunpack.c.l.b16 %v73
  %v234 = vunpack.c.h.b16 %v73
  %v235 = vunpack.c.l.b16 %v74
  %v236 = vunpack.c.h.b16 %v74
  %v237 = vpack.c.b16 %v203, %v201
  %v238 = vpack.c.b16 %v204, %v202
  %v239 = vpack.c.b16 %v207, %v205
  %v240 = vpack.c.b16 %v208, %v206
  %v241 = vpack.c.b16 %v211, %v209
  %v242 = vpack.c.b16 %v212, %v210
  %v243 = vpack.c.b16 %v215, %v213
  %v244 = vpack.c.b16 %v216, %v214
  %v245 = vpack.c.b16 %v219, %v217
  %v246 = vpack.c.b16 %v220, %v218
  %v247 = vpack.c.b16 %v223, %v221
  %v248 = vpack.c.b16 %v224, %v222
  %v249 = vpack.c.b16 %v227, %v225
  %v250 = vpack.c.b16 %v228, %v226
  %v251 = vpack.c.b16 %v231, %v229
  %v252 = vpack.c.b16 %v232, %v230
  %v253 = vpack.c.b16 %v235, %v233
  %v254 = vpack.c.b16 %v236, %v234
  %vm271 = vcmask 97280
  %v273 = vsel %vm271, %v148, 0
  %v276 = vsel %vm271, %v150, 0
  %v279 = vsel %vm271, %v152, 0
  %v282 = vsel %vm271, %v154, 0
  %v285 = vsel %vm271, %v156, 0
  %v288 = vsel %vm271, %v158, 0
  %v291 = vsel %vm271, %v160, 0
  %v294 = vsel %vm271, %v162, 0
  %v297 = vsel %vm271, %v164, 0
  %v300 = vsel %vm271, %v166, 0
  %v303 = vsel %vm271, %v168, 0
  %v306 = vsel %vm271, %v170, 0
  %vm308 = vcmask 1045504
  %v310 = vsel %vm308, %v253, 0
  %v313 = vsel %vm308, %v254, 0
  %315 = vmatprep.subr.bf16.mxu0 %v238
  %316 = vmatpush1.bf16.msra.mxu0 %v237
  %317 = vmatprep.subr.bf16.mxu0 %v240
  %318 = vmatpush1.bf16.msra.mxu0 %v239
  %319 = vmatprep.subr.bf16.mxu0 %v242
  %320 = vmatpush1.bf16.msra.mxu0 %v241
  %321 = vmatprep.subr.bf16.mxu0 %v244
  %322 = vmatpush1.bf16.msra.mxu0 %v243
  %323 = vmatprep.subr.bf16.mxu0 %v246
  %324 = vmatpush1.bf16.msra.mxu0 %v245
  %325 = vmatprep.subr.bf16.mxu0 %v248
  %326 = vmatpush1.bf16.msra.mxu0 %v247
  %327 = vmatprep.subr.bf16.mxu0 %v250
  %328 = vmatpush1.bf16.msra.mxu0 %v249
  %329 = vmatprep.subr.bf16.mxu0 %v252
  %330 = vmatpush1.bf16.msra.mxu0 %v251
  %331 = vmatprep.subr.bf16.mxu0 %v313
  %332 = vmatpush1.bf16.msra.mxu0 %v310
  %333 = vmatprep.subr.bf16.mxu0 0
  %334 = vmatpush1.bf16.msra.mxu0 0
  %335 = vmatprep.subr.bf16.mxu0 0
  %336 = vmatpush1.bf16.msra.mxu0 0
  %337 = vmatprep.subr.bf16.mxu0 0
  %338 = vmatpush1.bf16.msra.mxu0 0
  %339 = vmatprep.subr.bf16.mxu0 0
  %340 = vmatpush1.bf16.msra.mxu0 0
  %341 = vmatprep.subr.bf16.mxu0 0
  %342 = vmatpush1.bf16.msra.mxu0 0
  %343 = vmatprep.subr.bf16.mxu0 0
  %344 = vmatpush1.bf16.msra.mxu0 0
  %345 = vmatprep.subr.bf16.mxu0 0
  %346 = vmatpush1.bf16.msra.mxu0 0
  %347 = vmatprep.mubr.bf16.mxu0 %v273
  %348 = vmatmul.mubr.bf16.gmra.mrb[0].mxu0 %v147
  %v349 = vpop.f32.mrb[0].mxu0
  %v350 = vadd.f32 0.0, %v349
  %v351 = vpop.f32.mrb[0].mxu0
  %v352 = vadd.f32 0.0, %v351
  %v353 = vpop.f32.mrb[0].mxu0
  %v354 = vadd.f32 0.0, %v353
  %v355 = vpop.f32.mrb[0].mxu0
  %v356 = vadd.f32 0.0, %v355
  %357 = vmatprep.mubr.bf16.mxu0 %v276
  %358 = vmatmul.mubr.bf16.gmra.mrb[0].mxu0 %v149
  %v359 = vpop.f32.mrb[0].mxu0
  %v360 = vadd.f32 0.0, %v359
  %v361 = vpop.f32.mrb[0].mxu0
  %v362 = vadd.f32 0.0, %v361
  %v363 = vpop.f32.mrb[0].mxu0
  %v364 = vadd.f32 0.0, %v363
  %v365 = vpop.f32.mrb[0].mxu0
  %v366 = vadd.f32 0.0, %v365
  %367 = vmatprep.mubr.bf16.mxu0 %v279
  %368 = vmatmul.mubr.bf16.gmra.mrb[0].mxu0 %v151
  %v369 = vpop.f32.mrb[0].mxu0
  %v370 = vadd.f32 0.0, %v369
  %v371 = vpop.f32.mrb[0].mxu0
  %v372 = vadd.f32 0.0, %v371
  %v373 = vpop.f32.mrb[0].mxu0
  %v374 = vadd.f32 0.0, %v373
  %v375 = vpop.f32.mrb[0].mxu0
  %v376 = vadd.f32 0.0, %v375
  %377 = vmatprep.mubr.bf16.mxu0 %v282
  %378 = vmatmul.mubr.bf16.gmra.mrb[0].mxu0 %v153
  %v379 = vpop.f32.mrb[0].mxu0
  %v380 = vadd.f32 0.0, %v379
  %v381 = vpop.f32.mrb[0].mxu0
  %v382 = vadd.f32 0.0, %v381
  %v383 = vpop.f32.mrb[0].mxu0
  %v384 = vadd.f32 0.0, %v383
  %v385 = vpop.f32.mrb[0].mxu0
  %v386 = vadd.f32 0.0, %v385
  %387 = vmatprep.mubr.bf16.mxu0 %v285
  %388 = vmatmul.mubr.bf16.gmra.mrb[0].mxu0 %v155
  %v389 = vpop.f32.mrb[0].mxu0
  %v390 = vadd.f32 0.0, %v389
  %v391 = vpop.f32.mrb[0].mxu0
  %v392 = vadd.f32 0.0, %v391
  %v393 = vpop.f32.mrb[0].mxu0
  %v394 = vadd.f32 0.0, %v393
  %v395 = vpop.f32.mrb[0].mxu0
  %v396 = vadd.f32 0.0, %v395
  %397 = vmatprep.mubr.bf16.mxu0 %v288
  %398 = vmatmul.mubr.bf16.gmra.mrb[0].mxu0 %v157
  %v399 = vpop.f32.mrb[0].mxu0
  %v400 = vadd.f32 0.0, %v399
  %v401 = vpop.f32.mrb[0].mxu0
  %v402 = vadd.f32 0.0, %v401
  %v403 = vpop.f32.mrb[0].mxu0
  %v404 = vadd.f32 0.0, %v403
  %v405 = vpop.f32.mrb[0].mxu0
  %v406 = vadd.f32 0.0, %v405
  %407 = vmatprep.mubr.bf16.mxu0 %v291
  %408 = vmatmul.mubr.bf16.gmra.mrb[0].mxu0 %v159
  %v409 = vpop.f32.mrb[0].mxu0
  %v410 = vadd.f32 0.0, %v409
  %v411 = vpop.f32.mrb[0].mxu0
  %v412 = vadd.f32 0.0, %v411
  %v413 = vpop.f32.mrb[0].mxu0
  %v414 = vadd.f32 0.0, %v413
  %v415 = vpop.f32.mrb[0].mxu0
  %v416 = vadd.f32 0.0, %v415
  %417 = vmatprep.mubr.bf16.mxu0 %v294
  %418 = vmatmul.mubr.bf16.gmra.mrb[0].mxu0 %v161
  %v419 = vpop.f32.mrb[0].mxu0
  %v420 = vadd.f32 0.0, %v419
  %v421 = vpop.f32.mrb[0].mxu0
  %v422 = vadd.f32 0.0, %v421
  %v423 = vpop.f32.mrb[0].mxu0
  %v424 = vadd.f32 0.0, %v423
  %v425 = vpop.f32.mrb[0].mxu0
  %v426 = vadd.f32 0.0, %v425
  %427 = vmatprep.mubr.bf16.mxu0 %v297
  %428 = vmatmul.mubr.bf16.gmra.mrb[0].mxu0 %v163
  %v429 = vpop.f32.mrb[0].mxu0
  %v430 = vadd.f32 0.0, %v429
  %v431 = vpop.f32.mrb[0].mxu0
  %v432 = vadd.f32 0.0, %v431
  %v433 = vpop.f32.mrb[0].mxu0
  %v434 = vadd.f32 0.0, %v433
  %v435 = vpop.f32.mrb[0].mxu0
  %v436 = vadd.f32 0.0, %v435
  %437 = vmatprep.mubr.bf16.mxu0 %v300
  %438 = vmatmul.mubr.bf16.gmra.mrb[0].mxu0 %v165
  %v439 = vpop.f32.mrb[0].mxu0
  %v440 = vadd.f32 0.0, %v439
  %v441 = vpop.f32.mrb[0].mxu0
  %v442 = vadd.f32 0.0, %v441
  %v443 = vpop.f32.mrb[0].mxu0
  %v444 = vadd.f32 0.0, %v443
  %v445 = vpop.f32.mrb[0].mxu0
  %v446 = vadd.f32 0.0, %v445
  %447 = vmatprep.mubr.bf16.mxu0 %v303
  %448 = vmatmul.mubr.bf16.gmra.mrb[0].mxu0 %v167
  %v449 = vpop.f32.mrb[0].mxu0
  %v450 = vadd.f32 0.0, %v449
  %v451 = vpop.f32.mrb[0].mxu0
  %v452 = vadd.f32 0.0, %v451
  %v453 = vpop.f32.mrb[0].mxu0
  %v454 = vadd.f32 0.0, %v453
  %v455 = vpop.f32.mrb[0].mxu0
  %v456 = vadd.f32 0.0, %v455
  %457 = vmatprep.mubr.bf16.mxu0 %v306
  %458 = vmatmul.mubr.bf16.gmra.mrb[0].mxu0 %v169
  %v459 = vpop.f32.mrb[0].mxu0
  %v460 = vadd.f32 0.0, %v459
  %v461 = vpop.f32.mrb[0].mxu0
  %v462 = vadd.f32 0.0, %v461
  %v463 = vpop.f32.mrb[0].mxu0
  %v464 = vadd.f32 0.0, %v463
  %v465 = vpop.f32.mrb[0].mxu0
  %v466 = vadd.f32 0.0, %v465
  %467 = vdwg.mxu0
  %s468 = scalar_lea.vmem %s1, 144
  %v469 = vld [vmem:[%s468] sm:$0xff]
  %v470 = vld [vmem:[%s468 + $0x8] sm:$0xff]
  %v471 = vld [vmem:[%s468 + $0x10] sm:$0xff]
  %v472 = vld [vmem:[%s468 + $0x18] sm:$0xff]
  %v473 = vld [vmem:[%s468 + $0x20] sm:$0xff]
  %v474 = vld [vmem:[%s468 + $0x28] sm:$0xff]
  %v475 = vld [vmem:[%s468 + $0x30] sm:$0xff]
  %v476 = vld [vmem:[%s468 + $0x38] sm:$0xff]
  %v477 = vld [vmem:[%s468 + $0x40] sm:$0xff]
  %v478 = vld [vmem:[%s468 + $0x48] sm:$0xff]
  %v479 = vld [vmem:[%s468 + $0x50] sm:$0xff]
  %v480 = vld [vmem:[%s468 + $0x58] sm:$0xff]
  %v481 = vld [vmem:[%s468 + $0x60] sm:$0xff]
  %v482 = vld [vmem:[%s468 + $0x68] sm:$0xff]
  %v483 = vld [vmem:[%s468 + $0x70] sm:$0xff]
  %v484 = vld [vmem:[%s468 + $0x78] sm:$0xff]
  %v485 = vld [vmem:[%s468 + $0x80] sm:$0xff]
  %v486 = vld [vmem:[%s468 + $0x88] sm:$0x33]
  %v505 = vunpack.c.l.b16 %v469
  %v506 = vunpack.c.h.b16 %v469
  %v507 = vunpack.c.l.b16 %v470
  %v508 = vunpack.c.h.b16 %v470
  %v509 = vunpack.c.l.b16 %v471
  %v510 = vunpack.c.h.b16 %v471
  %v511 = vunpack.c.l.b16 %v472
  %v512 = vunpack.c.h.b16 %v472
  %v513 = vunpack.c.l.b16 %v473
  %v514 = vunpack.c.h.b16 %v473
  %v515 = vunpack.c.l.b16 %v474
  %v516 = vunpack.c.h.b16 %v474
  %v517 = vunpack.c.l.b16 %v475
  %v518 = vunpack.c.h.b16 %v475
  %v519 = vunpack.c.l.b16 %v476
  %v520 = vunpack.c.h.b16 %v476
  %v521 = vunpack.c.l.b16 %v477
  %v522 = vunpack.c.h.b16 %v477
  %v523 = vunpack.c.l.b16 %v478
  %v524 = vunpack.c.h.b16 %v478
  %v525 = vunpack.c.l.b16 %v479
  %v526 = vunpack.c.h.b16 %v479
  %v527 = vunpack.c.l.b16 %v480
  %v528 = vunpack.c.h.b16 %v480
  %v529 = vunpack.c.l.b16 %v481
  %v530 = vunpack.c.h.b16 %v481
  %v531 = vunpack.c.l.b16 %v482
  %v532 = vunpack.c.h.b16 %v482
  %v533 = vunpack.c.l.b16 %v483
  %v534 = vunpack.c.h.b16 %v483
  %v535 = vunpack.c.l.b16 %v484
  %v536 = vunpack.c.h.b16 %v484
  %v537 = vunpack.c.l.b16 %v485
  %v538 = vunpack.c.h.b16 %v485
  %v539 = vunpack.c.l.b16 %v486
  %v540 = vunpack.c.h.b16 %v486
  %v541 = vpack.c.b16 %v507, %v505
  %v542 = vpack.c.b16 %v508, %v506
  %v543 = vpack.c.b16 %v511, %v509
  %v544 = vpack.c.b16 %v512, %v510
  %v545 = vpack.c.b16 %v515, %v513
  %v546 = vpack.c.b16 %v516, %v514
  %v547 = vpack.c.b16 %v519, %v517
  %v548 = vpack.c.b16 %v520, %v518
  %v549 = vpack.c.b16 %v523, %v521
  %v550 = vpack.c.b16 %v524, %v522
  %v551 = vpack.c.b16 %v527, %v525
  %v552 = vpack.c.b16 %v528, %v526
  %v553 = vpack.c.b16 %v531, %v529
  %v554 = vpack.c.b16 %v532, %v530
  %v555 = vpack.c.b16 %v535, %v533
  %v556 = vpack.c.b16 %v536, %v534
  %v557 = vpack.c.b16 %v539, %v537
  %v558 = vpack.c.b16 %v540, %v538
  %v576 = vsel %vm308, %v557, 0
  %v579 = vsel %vm308, %v558, 0
  %581 = vmatprep.subr.bf16.mxu0 %v542
  %582 = vmatpush1.bf16.msra.mxu0 %v541
  %583 = vmatprep.subr.bf16.mxu0 %v544
  %584 = vmatpush1.bf16.msra.mxu0 %v543
  %585 = vmatprep.subr.bf16.mxu0 %v546
  %586 = vmatpush1.bf16.msra.mxu0 %v545
  %587 = vmatprep.subr.bf16.mxu0 %v548
  %588 = vmatpush1.bf16.msra.mxu0 %v547
  %589 = vmatprep.subr.bf16.mxu0 %v550
  %590 = vmatpush1.bf16.msra.mxu0 %v549
  %591 = vmatprep.subr.bf16.mxu0 %v552
  %592 = vmatpush1.bf16.msra.mxu0 %v551
  %593 = vmatprep.subr.bf16.mxu0 %v554
  %594 = vmatpush1.bf16.msra.mxu0 %v553
  %595 = vmatprep.subr.bf16.mxu0 %v556
  %596 = vmatpush1.bf16.msra.mxu0 %v555
  %597 = vmatprep.subr.bf16.mxu0 %v579
  %598 = vmatpush1.bf16.msra.mxu0 %v576
  %599 = vmatprep.subr.bf16.mxu0 0
  %600 = vmatpush1.bf16.msra.mxu0 0
  %601 = vmatprep.subr.bf16.mxu0 0
  %602 = vmatpush1.bf16.msra.mxu0 0
  %603 = vmatprep.subr.bf16.mxu0 0
  %604 = vmatpush1.bf16.msra.mxu0 0
  %605 = vmatprep.subr.bf16.mxu0 0
  %606 = vmatpush1.bf16.msra.mxu0 0
  %607 = vmatprep.subr.bf16.mxu0 0
  %608 = vmatpush1.bf16.msra.mxu0 0
  %609 = vmatprep.subr.bf16.mxu0 0
  %610 = vmatpush1.bf16.msra.mxu0 0
  %611 = vmatprep.subr.bf16.mxu0 0
  %612 = vmatpush1.bf16.msra.mxu0 0
  %613 = vmatprep.mubr.bf16.mxu0 %v273
  %614 = vmatmul.mubr.bf16.gmra.mrb[0].mxu0 %v147
  %v615 = vpop.f32.mrb[0].mxu0
  %v616 = vadd.f32 0.0, %v615
  %v617 = vpop.f32.mrb[0].mxu0
  %v618 = vadd.f32 0.0, %v617
  %v619 = vpop.f32.mrb[0].mxu0
  %v620 = vadd.f32 0.0, %v619
  %v621 = vpop.f32.mrb[0].mxu0
  %v622 = vadd.f32 0.0, %v621
  %623 = vmatprep.mubr.bf16.mxu0 %v276
  %624 = vmatmul.mubr.bf16.gmra.mrb[0].mxu0 %v149
  %v625 = vpop.f32.mrb[0].mxu0
  %v626 = vadd.f32 0.0, %v625
  %v627 = vpop.f32.mrb[0].mxu0
  %v628 = vadd.f32 0.0, %v627
  %v629 = vpop.f32.mrb[0].mxu0
  %v630 = vadd.f32 0.0, %v629
  %v631 = vpop.f32.mrb[0].mxu0
  %v632 = vadd.f32 0.0, %v631
  %633 = vmatprep.mubr.bf16.mxu0 %v279
  %634 = vmatmul.mubr.bf16.gmra.mrb[0].mxu0 %v151
  %v635 = vpop.f32.mrb[0].mxu0
  %v636 = vadd.f32 0.0, %v635
  %v637 = vpop.f32.mrb[0].mxu0
  %v638 = vadd.f32 0.0, %v637
  %v639 = vpop.f32.mrb[0].mxu0
  %v640 = vadd.f32 0.0, %v639
  %v641 = vpop.f32.mrb[0].mxu0
  %v642 = vadd.f32 0.0, %v641
  %643 = vmatprep.mubr.bf16.mxu0 %v282
  %644 = vmatmul.mubr.bf16.gmra.mrb[0].mxu0 %v153
  %v645 = vpop.f32.mrb[0].mxu0
  %v646 = vadd.f32 0.0, %v645
  %v647 = vpop.f32.mrb[0].mxu0
  %v648 = vadd.f32 0.0, %v647
  %v649 = vpop.f32.mrb[0].mxu0
  %v650 = vadd.f32 0.0, %v649
  %v651 = vpop.f32.mrb[0].mxu0
  %v652 = vadd.f32 0.0, %v651
  %653 = vmatprep.mubr.bf16.mxu0 %v285
  %654 = vmatmul.mubr.bf16.gmra.mrb[0].mxu0 %v155
  %v655 = vpop.f32.mrb[0].mxu0
  %v656 = vadd.f32 0.0, %v655
  %v657 = vpop.f32.mrb[0].mxu0
  %v658 = vadd.f32 0.0, %v657
  %v659 = vpop.f32.mrb[0].mxu0
  %v660 = vadd.f32 0.0, %v659
  %v661 = vpop.f32.mrb[0].mxu0
  %v662 = vadd.f32 0.0, %v661
  %663 = vmatprep.mubr.bf16.mxu0 %v288
  %664 = vmatmul.mubr.bf16.gmra.mrb[0].mxu0 %v157
  %v665 = vpop.f32.mrb[0].mxu0
  %v666 = vadd.f32 0.0, %v665
  %v667 = vpop.f32.mrb[0].mxu0
  %v668 = vadd.f32 0.0, %v667
  %v669 = vpop.f32.mrb[0].mxu0
  %v670 = vadd.f32 0.0, %v669
  %v671 = vpop.f32.mrb[0].mxu0
  %v672 = vadd.f32 0.0, %v671
  %673 = vmatprep.mubr.bf16.mxu0 %v291
  %674 = vmatmul.mubr.bf16.gmra.mrb[0].mxu0 %v159
  %v675 = vpop.f32.mrb[0].mxu0
  %v676 = vadd.f32 0.0, %v675
  %v677 = vpop.f32.mrb[0].mxu0
  %v678 = vadd.f32 0.0, %v677
  %v679 = vpop.f32.mrb[0].mxu0
  %v680 = vadd.f32 0.0, %v679
  %v681 = vpop.f32.mrb[0].mxu0
  %v682 = vadd.f32 0.0, %v681
  %683 = vmatprep.mubr.bf16.mxu0 %v294
  %684 = vmatmul.mubr.bf16.gmra.mrb[0].mxu0 %v161
  %v685 = vpop.f32.mrb[0].mxu0
  %v686 = vadd.f32 0.0, %v685
  %v687 = vpop.f32.mrb[0].mxu0
  %v688 = vadd.f32 0.0, %v687
  %v689 = vpop.f32.mrb[0].mxu0
  %v690 = vadd.f32 0.0, %v689
  %v691 = vpop.f32.mrb[0].mxu0
  %v692 = vadd.f32 0.0, %v691
  %693 = vmatprep.mubr.bf16.mxu0 %v297
  %694 = vmatmul.mubr.bf16.gmra.mrb[0].mxu0 %v163
  %v695 = vpop.f32.mrb[0].mxu0
  %v696 = vadd.f32 0.0, %v695
  %v697 = vpop.f32.mrb[0].mxu0
  %v698 = vadd.f32 0.0, %v697
  %v699 = vpop.f32.mrb[0].mxu0
  %v700 = vadd.f32 0.0, %v699
  %v701 = vpop.f32.mrb[0].mxu0
  %v702 = vadd.f32 0.0, %v701
  %703 = vmatprep.mubr.bf16.mxu0 %v300
  %704 = vmatmul.mubr.bf16.gmra.mrb[0].mxu0 %v165
  %v705 = vpop.f32.mrb[0].mxu0
  %v706 = vadd.f32 0.0, %v705
  %v707 = vpop.f32.mrb[0].mxu0
  %v708 = vadd.f32 0.0, %v707
  %v709 = vpop.f32.mrb[0].mxu0
  %v710 = vadd.f32 0.0, %v709
  %v711 = vpop.f32.mrb[0].mxu0
  %v712 = vadd.f32 0.0, %v711
  %713 = vmatprep.mubr.bf16.mxu0 %v303
  %714 = vmatmul.mubr.bf16.gmra.mrb[0].mxu0 %v167
  %v715 = vpop.f32.mrb[0].mxu0
  %v716 = vadd.f32 0.0, %v715
  %v717 = vpop.f32.mrb[0].mxu0
  %v718 = vadd.f32 0.0, %v717
  %v719 = vpop.f32.mrb[0].mxu0
  %v720 = vadd.f32 0.0, %v719
  %v721 = vpop.f32.mrb[0].mxu0
  %v722 = vadd.f32 0.0, %v721
  %723 = vmatprep.mubr.bf16.mxu0 %v306
  %724 = vmatmul.mubr.bf16.gmra.mrb[0].mxu0 %v169
  %v725 = vpop.f32.mrb[0].mxu0
  %v726 = vadd.f32 0.0, %v725
  %v727 = vpop.f32.mrb[0].mxu0
  %v728 = vadd.f32 0.0, %v727
  %v729 = vpop.f32.mrb[0].mxu0
  %v730 = vadd.f32 0.0, %v729
  %v731 = vpop.f32.mrb[0].mxu0
  %v732 = vadd.f32 0.0, %v731
  %733 = vdwg.mxu0
  %v734 = vmax.f32 %v350, %v616
  %v735 = vmax.f32 %v352, %v618
  %v736 = vmax.f32 %v354, %v620
  %v737 = vmax.f32 %v356, %v622
  %v738 = vmax.f32 %v360, %v626
  %v739 = vmax.f32 %v362, %v628
  %v740 = vmax.f32 %v364, %v630
  %v741 = vmax.f32 %v366, %v632
  %v742 = vmax.f32 %v370, %v636
  %v743 = vmax.f32 %v372, %v638
  %v744 = vmax.f32 %v374, %v640
  %v745 = vmax.f32 %v376, %v642
  %v746 = vmax.f32 %v380, %v646
  %v747 = vmax.f32 %v382, %v648
  %v748 = vmax.f32 %v384, %v650
  %v749 = vmax.f32 %v386, %v652
  %v750 = vmax.f32 %v390, %v656
  %v751 = vmax.f32 %v392, %v658
  %v752 = vmax.f32 %v394, %v660
  %v753 = vmax.f32 %v396, %v662
  %v754 = vmax.f32 %v400, %v666
  %v755 = vmax.f32 %v402, %v668
  %v756 = vmax.f32 %v404, %v670
  %v757 = vmax.f32 %v406, %v672
  %v758 = vmax.f32 %v410, %v676
  %v759 = vmax.f32 %v412, %v678
  %v760 = vmax.f32 %v414, %v680
  %v761 = vmax.f32 %v416, %v682
  %v762 = vmax.f32 %v420, %v686
  %v763 = vmax.f32 %v422, %v688
  %v764 = vmax.f32 %v424, %v690
  %v765 = vmax.f32 %v426, %v692
  %v766 = vmax.f32 %v430, %v696
  %v767 = vmax.f32 %v432, %v698
  %v768 = vmax.f32 %v434, %v700
  %v769 = vmax.f32 %v436, %v702
  %v770 = vmax.f32 %v440, %v706
  %v771 = vmax.f32 %v442, %v708
  %v772 = vmax.f32 %v444, %v710
  %v773 = vmax.f32 %v446, %v712
  %v774 = vmax.f32 %v450, %v716
  %v775 = vmax.f32 %v452, %v718
  %v776 = vmax.f32 %v454, %v720
  %v777 = vmax.f32 %v456, %v722
  %v778 = vmax.f32 %v460, %v726
  %v779 = vmax.f32 %v462, %v728
  %v780 = vmax.f32 %v464, %v730
  %v781 = vmax.f32 %v466, %v732
  %s782 = scalar_lea.vmem %s0, 192
  %v783 = vld [vmem:[%s782] sm:$0xff]
  %v784 = vld [vmem:[%s782 + $0x8] sm:$0xff]
  %v785 = vld [vmem:[%s782 + $0x10] sm:$0xff]
  %v786 = vld [vmem:[%s782 + $0x18] sm:$0xff]
  %v787 = vld [vmem:[%s782 + $0x20] sm:$0xff]
  %v788 = vld [vmem:[%s782 + $0x28] sm:$0xff]
  %v789 = vld [vmem:[%s782 + $0x30] sm:$0xff]
  %v790 = vld [vmem:[%s782 + $0x38] sm:$0xff]
  %v791 = vld [vmem:[%s782 + $0x40] sm:$0xff]
  %v792 = vld [vmem:[%s782 + $0x48] sm:$0xff]
  %v793 = vld [vmem:[%s782 + $0x50] sm:$0xff]
  %v794 = vld [vmem:[%s782 + $0x58] sm:$0xff]
  %v795 = vld [vmem:[%s782 + $0x60] sm:$0xff]
  %v796 = vld [vmem:[%s782 + $0x68] sm:$0xff]
  %v797 = vld [vmem:[%s782 + $0x70] sm:$0xff]
  %v798 = vld [vmem:[%s782 + $0x78] sm:$0xff]
  %v799 = vld [vmem:[%s782 + $0x80] sm:$0xff]
  %v800 = vld [vmem:[%s782 + $0x88] sm:$0xff]
  %v801 = vld [vmem:[%s782 + $0x90] sm:$0xff]
  %v802 = vld [vmem:[%s782 + $0x98] sm:$0xff]
  %v803 = vld [vmem:[%s782 + $0xa0] sm:$0xff]
  %v804 = vld [vmem:[%s782 + $0xa8] sm:$0xff]
  %v805 = vld [vmem:[%s782 + $0xb0] sm:$0xff]
  %v806 = vld [vmem:[%s782 + $0xb8] sm:$0xff]
  %v831 = vunpack.c.l.b16 %v783
  %v832 = vunpack.c.h.b16 %v783
  %v833 = vunpack.c.l.b16 %v784
  %v834 = vunpack.c.h.b16 %v784
  %v835 = vunpack.c.l.b16 %v785
  %v836 = vunpack.c.h.b16 %v785
  %v837 = vunpack.c.l.b16 %v786
  %v838 = vunpack.c.h.b16 %v786
  %v839 = vunpack.c.l.b16 %v787
  %v840 = vunpack.c.h.b16 %v787
  %v841 = vunpack.c.l.b16 %v788
  %v842 = vunpack.c.h.b16 %v788
  %v843 = vunpack.c.l.b16 %v789
  %v844 = vunpack.c.h.b16 %v789
  %v845 = vunpack.c.l.b16 %v790
  %v846 = vunpack.c.h.b16 %v790
  %v847 = vunpack.c.l.b16 %v791
  %v848 = vunpack.c.h.b16 %v791
  %v849 = vunpack.c.l.b16 %v792
  %v850 = vunpack.c.h.b16 %v792
  %v851 = vunpack.c.l.b16 %v793
  %v852 = vunpack.c.h.b16 %v793
  %v853 = vunpack.c.l.b16 %v794
  %v854 = vunpack.c.h.b16 %v794
  %v855 = vunpack.c.l.b16 %v795
  %v856 = vunpack.c.h.b16 %v795
  %v857 = vunpack.c.l.b16 %v796
  %v858 = vunpack.c.h.b16 %v796
  %v859 = vunpack.c.l.b16 %v797
  %v860 = vunpack.c.h.b16 %v797
  %v861 = vunpack.c.l.b16 %v798
  %v862 = vunpack.c.h.b16 %v798
  %v863 = vunpack.c.l.b16 %v799
  %v864 = vunpack.c.h.b16 %v799
  %v865 = vunpack.c.l.b16 %v800
  %v866 = vunpack.c.h.b16 %v800
  %v867 = vunpack.c.l.b16 %v801
  %v868 = vunpack.c.h.b16 %v801
  %v869 = vunpack.c.l.b16 %v802
  %v870 = vunpack.c.h.b16 %v802
  %v871 = vunpack.c.l.b16 %v803
  %v872 = vunpack.c.h.b16 %v803
  %v873 = vunpack.c.l.b16 %v804
  %v874 = vunpack.c.h.b16 %v804
  %v875 = vunpack.c.l.b16 %v805
  %v876 = vunpack.c.h.b16 %v805
  %v877 = vunpack.c.l.b16 %v806
  %v878 = vunpack.c.h.b16 %v806
  %v879 = vpack.c.b16 %v833, %v831
  %v880 = vpack.c.b16 %v834, %v832
  %v881 = vpack.c.b16 %v837, %v835
  %v882 = vpack.c.b16 %v838, %v836
  %v883 = vpack.c.b16 %v841, %v839
  %v884 = vpack.c.b16 %v842, %v840
  %v885 = vpack.c.b16 %v845, %v843
  %v886 = vpack.c.b16 %v846, %v844
  %v887 = vpack.c.b16 %v849, %v847
  %v888 = vpack.c.b16 %v850, %v848
  %v889 = vpack.c.b16 %v853, %v851
  %v890 = vpack.c.b16 %v854, %v852
  %v891 = vpack.c.b16 %v857, %v855
  %v892 = vpack.c.b16 %v858, %v856
  %v893 = vpack.c.b16 %v861, %v859
  %v894 = vpack.c.b16 %v862, %v860
  %v895 = vpack.c.b16 %v865, %v863
  %v896 = vpack.c.b16 %v866, %v864
  %v897 = vpack.c.b16 %v869, %v867
  %v898 = vpack.c.b16 %v870, %v868
  %v899 = vpack.c.b16 %v873, %v871
  %v900 = vpack.c.b16 %v874, %v872
  %v901 = vpack.c.b16 %v877, %v875
  %v902 = vpack.c.b16 %v878, %v876
  %v916 = vsel %vm271, %v880, 0
  %v919 = vsel %vm271, %v882, 0
  %v922 = vsel %vm271, %v884, 0
  %v925 = vsel %vm271, %v886, 0
  %v928 = vsel %vm271, %v888, 0
  %v931 = vsel %vm271, %v890, 0
  %v934 = vsel %vm271, %v892, 0
  %v937 = vsel %vm271, %v894, 0
  %v940 = vsel %vm271, %v896, 0
  %v943 = vsel %vm271, %v898, 0
  %v946 = vsel %vm271, %v900, 0
  %v949 = vsel %vm271, %v902, 0
  %951 = vmatprep.subr.bf16.mxu0 %v238
  %952 = vmatpush1.bf16.msra.mxu0 %v237
  %953 = vmatprep.subr.bf16.mxu0 %v240
  %954 = vmatpush1.bf16.msra.mxu0 %v239
  %955 = vmatprep.subr.bf16.mxu0 %v242
  %956 = vmatpush1.bf16.msra.mxu0 %v241
  %957 = vmatprep.subr.bf16.mxu0 %v244
  %958 = vmatpush1.bf16.msra.mxu0 %v243
  %959 = vmatprep.subr.bf16.mxu0 %v246
  %960 = vmatpush1.bf16.msra.mxu0 %v245
  %961 = vmatprep.subr.bf16.mxu0 %v248
  %962 = vmatpush1.bf16.msra.mxu0 %v247
  %963 = vmatprep.subr.bf16.mxu0 %v250
  %964 = vmatpush1.bf16.msra.mxu0 %v249
  %965 = vmatprep.subr.bf16.mxu0 %v252
  %966 = vmatpush1.bf16.msra.mxu0 %v251
  %967 = vmatprep.subr.bf16.mxu0 %v313
  %968 = vmatpush1.bf16.msra.mxu0 %v310
  %969 = vmatprep.subr.bf16.mxu0 0
  %970 = vmatpush1.bf16.msra.mxu0 0
  %971 = vmatprep.subr.bf16.mxu0 0
  %972 = vmatpush1.bf16.msra.mxu0 0
  %973 = vmatprep.subr.bf16.mxu0 0
  %974 = vmatpush1.bf16.msra.mxu0 0
  %975 = vmatprep.subr.bf16.mxu0 0
  %976 = vmatpush1.bf16.msra.mxu0 0
  %977 = vmatprep.subr.bf16.mxu0 0
  %978 = vmatpush1.bf16.msra.mxu0 0
  %979 = vmatprep.subr.bf16.mxu0 0
  %980 = vmatpush1.bf16.msra.mxu0 0
  %981 = vmatprep.subr.bf16.mxu0 0
  %982 = vmatpush1.bf16.msra.mxu0 0
  %983 = vmatprep.mubr.bf16.mxu0 %v916
  %984 = vmatmul.mubr.bf16.gmra.mrb[0].mxu0 %v879
  %v985 = vpop.f32.mrb[0].mxu0
  %v986 = vadd.f32 0.0, %v985
  %v987 = vpop.f32.mrb[0].mxu0
  %v988 = vadd.f32 0.0, %v987
  %v989 = vpop.f32.mrb[0].mxu0
  %v990 = vadd.f32 0.0, %v989
  %v991 = vpop.f32.mrb[0].mxu0
  %v992 = vadd.f32 0.0, %v991
  %993 = vmatprep.mubr.bf16.mxu0 %v919
  %994 = vmatmul.mubr.bf16.gmra.mrb[0].mxu0 %v881
  %v995 = vpop.f32.mrb[0].mxu0
  %v996 = vadd.f32 0.0, %v995
  %v997 = vpop.f32.mrb[0].mxu0
  %v998 = vadd.f32 0.0, %v997
  %v999 = vpop.f32.mrb[0].mxu0
  %v1000 = vadd.f32 0.0, %v999
  %v1001 = vpop.f32.mrb[0].mxu0
  %v1002 = vadd.f32 0.0, %v1001
  %1003 = vmatprep.mubr.bf16.mxu0 %v922
  %1004 = vmatmul.mubr.bf16.gmra.mrb[0].mxu0 %v883
  %v1005 = vpop.f32.mrb[0].mxu0
  %v1006 = vadd.f32 0.0, %v1005
  %v1007 = vpop.f32.mrb[0].mxu0
  %v1008 = vadd.f32 0.0, %v1007
  %v1009 = vpop.f32.mrb[0].mxu0
  %v1010 = vadd.f32 0.0, %v1009
  %v1011 = vpop.f32.mrb[0].mxu0
  %v1012 = vadd.f32 0.0, %v1011
  %1013 = vmatprep.mubr.bf16.mxu0 %v925
  %1014 = vmatmul.mubr.bf16.gmra.mrb[0].mxu0 %v885
  %v1015 = vpop.f32.mrb[0].mxu0
  %v1016 = vadd.f32 0.0, %v1015
  %v1017 = vpop.f32.mrb[0].mxu0
  %v1018 = vadd.f32 0.0, %v1017
  %v1019 = vpop.f32.mrb[0].mxu0
  %v1020 = vadd.f32 0.0, %v1019
  %v1021 = vpop.f32.mrb[0].mxu0
  %v1022 = vadd.f32 0.0, %v1021
  %1023 = vmatprep.mubr.bf16.mxu0 %v928
  %1024 = vmatmul.mubr.bf16.gmra.mrb[0].mxu0 %v887
  %v1025 = vpop.f32.mrb[0].mxu0
  %v1026 = vadd.f32 0.0, %v1025
  %v1027 = vpop.f32.mrb[0].mxu0
  %v1028 = vadd.f32 0.0, %v1027
  %v1029 = vpop.f32.mrb[0].mxu0
  %v1030 = vadd.f32 0.0, %v1029
  %v1031 = vpop.f32.mrb[0].mxu0
  %v1032 = vadd.f32 0.0, %v1031
  %1033 = vmatprep.mubr.bf16.mxu0 %v931
  %1034 = vmatmul.mubr.bf16.gmra.mrb[0].mxu0 %v889
  %v1035 = vpop.f32.mrb[0].mxu0
  %v1036 = vadd.f32 0.0, %v1035
  %v1037 = vpop.f32.mrb[0].mxu0
  %v1038 = vadd.f32 0.0, %v1037
  %v1039 = vpop.f32.mrb[0].mxu0
  %v1040 = vadd.f32 0.0, %v1039
  %v1041 = vpop.f32.mrb[0].mxu0
  %v1042 = vadd.f32 0.0, %v1041
  %1043 = vmatprep.mubr.bf16.mxu0 %v934
  %1044 = vmatmul.mubr.bf16.gmra.mrb[0].mxu0 %v891
  %v1045 = vpop.f32.mrb[0].mxu0
  %v1046 = vadd.f32 0.0, %v1045
  %v1047 = vpop.f32.mrb[0].mxu0
  %v1048 = vadd.f32 0.0, %v1047
  %v1049 = vpop.f32.mrb[0].mxu0
  %v1050 = vadd.f32 0.0, %v1049
  %v1051 = vpop.f32.mrb[0].mxu0
  %v1052 = vadd.f32 0.0, %v1051
  %1053 = vmatprep.mubr.bf16.mxu0 %v937
  %1054 = vmatmul.mubr.bf16.gmra.mrb[0].mxu0 %v893
  %v1055 = vpop.f32.mrb[0].mxu0
  %v1056 = vadd.f32 0.0, %v1055
  %v1057 = vpop.f32.mrb[0].mxu0
  %v1058 = vadd.f32 0.0, %v1057
  %v1059 = vpop.f32.mrb[0].mxu0
  %v1060 = vadd.f32 0.0, %v1059
  %v1061 = vpop.f32.mrb[0].mxu0
  %v1062 = vadd.f32 0.0, %v1061
  %1063 = vmatprep.mubr.bf16.mxu0 %v940
  %1064 = vmatmul.mubr.bf16.gmra.mrb[0].mxu0 %v895
  %v1065 = vpop.f32.mrb[0].mxu0
  %v1066 = vadd.f32 0.0, %v1065
  %v1067 = vpop.f32.mrb[0].mxu0
  %v1068 = vadd.f32 0.0, %v1067
  %v1069 = vpop.f32.mrb[0].mxu0
  %v1070 = vadd.f32 0.0, %v1069
  %v1071 = vpop.f32.mrb[0].mxu0
  %v1072 = vadd.f32 0.0, %v1071
  %1073 = vmatprep.mubr.bf16.mxu0 %v943
  %1074 = vmatmul.mubr.bf16.gmra.mrb[0].mxu0 %v897
  %v1075 = vpop.f32.mrb[0].mxu0
  %v1076 = vadd.f32 0.0, %v1075
  %v1077 = vpop.f32.mrb[0].mxu0
  %v1078 = vadd.f32 0.0, %v1077
  %v1079 = vpop.f32.mrb[0].mxu0
  %v1080 = vadd.f32 0.0, %v1079
  %v1081 = vpop.f32.mrb[0].mxu0
  %v1082 = vadd.f32 0.0, %v1081
  %1083 = vmatprep.mubr.bf16.mxu0 %v946
  %1084 = vmatmul.mubr.bf16.gmra.mrb[0].mxu0 %v899
  %v1085 = vpop.f32.mrb[0].mxu0
  %v1086 = vadd.f32 0.0, %v1085
  %v1087 = vpop.f32.mrb[0].mxu0
  %v1088 = vadd.f32 0.0, %v1087
  %v1089 = vpop.f32.mrb[0].mxu0
  %v1090 = vadd.f32 0.0, %v1089
  %v1091 = vpop.f32.mrb[0].mxu0
  %v1092 = vadd.f32 0.0, %v1091
  %1093 = vmatprep.mubr.bf16.mxu0 %v949
  %1094 = vmatmul.mubr.bf16.gmra.mrb[0].mxu0 %v901
  %v1095 = vpop.f32.mrb[0].mxu0
  %v1096 = vadd.f32 0.0, %v1095
  %v1097 = vpop.f32.mrb[0].mxu0
  %v1098 = vadd.f32 0.0, %v1097
  %v1099 = vpop.f32.mrb[0].mxu0
  %v1100 = vadd.f32 0.0, %v1099
  %v1101 = vpop.f32.mrb[0].mxu0
  %v1102 = vadd.f32 0.0, %v1101
  %1103 = vdwg.mxu0
  %v1104 = vmax.f32 %v734, %v986
  %v1105 = vmax.f32 %v735, %v988
  %v1106 = vmax.f32 %v736, %v990
  %v1107 = vmax.f32 %v737, %v992
  %v1108 = vmax.f32 %v738, %v996
  %v1109 = vmax.f32 %v739, %v998
  %v1110 = vmax.f32 %v740, %v1000
  %v1111 = vmax.f32 %v741, %v1002
  %v1112 = vmax.f32 %v742, %v1006
  %v1113 = vmax.f32 %v743, %v1008
  %v1114 = vmax.f32 %v744, %v1010
  %v1115 = vmax.f32 %v745, %v1012
  %v1116 = vmax.f32 %v746, %v1016
  %v1117 = vmax.f32 %v747, %v1018
  %v1118 = vmax.f32 %v748, %v1020
  %v1119 = vmax.f32 %v749, %v1022
  %v1120 = vmax.f32 %v750, %v1026
  %v1121 = vmax.f32 %v751, %v1028
  %v1122 = vmax.f32 %v752, %v1030
  %v1123 = vmax.f32 %v753, %v1032
  %v1124 = vmax.f32 %v754, %v1036
  %v1125 = vmax.f32 %v755, %v1038
  %v1126 = vmax.f32 %v756, %v1040
  %v1127 = vmax.f32 %v757, %v1042
  %v1128 = vmax.f32 %v758, %v1046
  %v1129 = vmax.f32 %v759, %v1048
  %v1130 = vmax.f32 %v760, %v1050
  %v1131 = vmax.f32 %v761, %v1052
  %v1132 = vmax.f32 %v762, %v1056
  %v1133 = vmax.f32 %v763, %v1058
  %v1134 = vmax.f32 %v764, %v1060
  %v1135 = vmax.f32 %v765, %v1062
  %v1136 = vmax.f32 %v766, %v1066
  %v1137 = vmax.f32 %v767, %v1068
  %v1138 = vmax.f32 %v768, %v1070
  %v1139 = vmax.f32 %v769, %v1072
  %v1140 = vmax.f32 %v770, %v1076
  %v1141 = vmax.f32 %v771, %v1078
  %v1142 = vmax.f32 %v772, %v1080
  %v1143 = vmax.f32 %v773, %v1082
  %v1144 = vmax.f32 %v774, %v1086
  %v1145 = vmax.f32 %v775, %v1088
  %v1146 = vmax.f32 %v776, %v1090
  %v1147 = vmax.f32 %v777, %v1092
  %v1148 = vmax.f32 %v778, %v1096
  %v1149 = vmax.f32 %v779, %v1098
  %v1150 = vmax.f32 %v780, %v1100
  %v1151 = vmax.f32 %v781, %v1102
  %1152 = vmatprep.subr.bf16.mxu0 %v542
  %1153 = vmatpush1.bf16.msra.mxu0 %v541
  %1154 = vmatprep.subr.bf16.mxu0 %v544
  %1155 = vmatpush1.bf16.msra.mxu0 %v543
  %1156 = vmatprep.subr.bf16.mxu0 %v546
  %1157 = vmatpush1.bf16.msra.mxu0 %v545
  %1158 = vmatprep.subr.bf16.mxu0 %v548
  %1159 = vmatpush1.bf16.msra.mxu0 %v547
  %1160 = vmatprep.subr.bf16.mxu0 %v550
  %1161 = vmatpush1.bf16.msra.mxu0 %v549
  %1162 = vmatprep.subr.bf16.mxu0 %v552
  %1163 = vmatpush1.bf16.msra.mxu0 %v551
  %1164 = vmatprep.subr.bf16.mxu0 %v554
  %1165 = vmatpush1.bf16.msra.mxu0 %v553
  %1166 = vmatprep.subr.bf16.mxu0 %v556
  %1167 = vmatpush1.bf16.msra.mxu0 %v555
  %1168 = vmatprep.subr.bf16.mxu0 %v579
  %1169 = vmatpush1.bf16.msra.mxu0 %v576
  %1170 = vmatprep.subr.bf16.mxu0 0
  %1171 = vmatpush1.bf16.msra.mxu0 0
  %1172 = vmatprep.subr.bf16.mxu0 0
  %1173 = vmatpush1.bf16.msra.mxu0 0
  %1174 = vmatprep.subr.bf16.mxu0 0
  %1175 = vmatpush1.bf16.msra.mxu0 0
  %1176 = vmatprep.subr.bf16.mxu0 0
  %1177 = vmatpush1.bf16.msra.mxu0 0
  %1178 = vmatprep.subr.bf16.mxu0 0
  %1179 = vmatpush1.bf16.msra.mxu0 0
  %1180 = vmatprep.subr.bf16.mxu0 0
  %1181 = vmatpush1.bf16.msra.mxu0 0
  %1182 = vmatprep.subr.bf16.mxu0 0
  %1183 = vmatpush1.bf16.msra.mxu0 0
  %1184 = vmatprep.mubr.bf16.mxu0 %v916
  %1185 = vmatmul.mubr.bf16.gmra.mrb[0].mxu0 %v879
  %v1186 = vpop.f32.mrb[0].mxu0
  %v1187 = vadd.f32 0.0, %v1186
  %v1188 = vpop.f32.mrb[0].mxu0
  %v1189 = vadd.f32 0.0, %v1188
  %v1190 = vpop.f32.mrb[0].mxu0
  %v1191 = vadd.f32 0.0, %v1190
  %v1192 = vpop.f32.mrb[0].mxu0
  %v1193 = vadd.f32 0.0, %v1192
  %1194 = vmatprep.mubr.bf16.mxu0 %v919
  %1195 = vmatmul.mubr.bf16.gmra.mrb[0].mxu0 %v881
  %v1196 = vpop.f32.mrb[0].mxu0
  %v1197 = vadd.f32 0.0, %v1196
  %v1198 = vpop.f32.mrb[0].mxu0
  %v1199 = vadd.f32 0.0, %v1198
  %v1200 = vpop.f32.mrb[0].mxu0
  %v1201 = vadd.f32 0.0, %v1200
  %v1202 = vpop.f32.mrb[0].mxu0
  %v1203 = vadd.f32 0.0, %v1202
  %1204 = vmatprep.mubr.bf16.mxu0 %v922
  %1205 = vmatmul.mubr.bf16.gmra.mrb[0].mxu0 %v883
  %v1206 = vpop.f32.mrb[0].mxu0
  %v1207 = vadd.f32 0.0, %v1206
  %v1208 = vpop.f32.mrb[0].mxu0
  %v1209 = vadd.f32 0.0, %v1208
  %v1210 = vpop.f32.mrb[0].mxu0
  %v1211 = vadd.f32 0.0, %v1210
  %v1212 = vpop.f32.mrb[0].mxu0
  %v1213 = vadd.f32 0.0, %v1212
  %1214 = vmatprep.mubr.bf16.mxu0 %v925
  %1215 = vmatmul.mubr.bf16.gmra.mrb[0].mxu0 %v885
  %v1216 = vpop.f32.mrb[0].mxu0
  %v1217 = vadd.f32 0.0, %v1216
  %v1218 = vpop.f32.mrb[0].mxu0
  %v1219 = vadd.f32 0.0, %v1218
  %v1220 = vpop.f32.mrb[0].mxu0
  %v1221 = vadd.f32 0.0, %v1220
  %v1222 = vpop.f32.mrb[0].mxu0
  %v1223 = vadd.f32 0.0, %v1222
  %1224 = vmatprep.mubr.bf16.mxu0 %v928
  %1225 = vmatmul.mubr.bf16.gmra.mrb[0].mxu0 %v887
  %v1226 = vpop.f32.mrb[0].mxu0
  %v1227 = vadd.f32 0.0, %v1226
  %v1228 = vpop.f32.mrb[0].mxu0
  %v1229 = vadd.f32 0.0, %v1228
  %v1230 = vpop.f32.mrb[0].mxu0
  %v1231 = vadd.f32 0.0, %v1230
  %v1232 = vpop.f32.mrb[0].mxu0
  %v1233 = vadd.f32 0.0, %v1232
  %1234 = vmatprep.mubr.bf16.mxu0 %v931
  %1235 = vmatmul.mubr.bf16.gmra.mrb[0].mxu0 %v889
  %v1236 = vpop.f32.mrb[0].mxu0
  %v1237 = vadd.f32 0.0, %v1236
  %v1238 = vpop.f32.mrb[0].mxu0
  %v1239 = vadd.f32 0.0, %v1238
  %v1240 = vpop.f32.mrb[0].mxu0
  %v1241 = vadd.f32 0.0, %v1240
  %v1242 = vpop.f32.mrb[0].mxu0
  %v1243 = vadd.f32 0.0, %v1242
  %1244 = vmatprep.mubr.bf16.mxu0 %v934
  %1245 = vmatmul.mubr.bf16.gmra.mrb[0].mxu0 %v891
  %v1246 = vpop.f32.mrb[0].mxu0
  %v1247 = vadd.f32 0.0, %v1246
  %v1248 = vpop.f32.mrb[0].mxu0
  %v1249 = vadd.f32 0.0, %v1248
  %v1250 = vpop.f32.mrb[0].mxu0
  %v1251 = vadd.f32 0.0, %v1250
  %v1252 = vpop.f32.mrb[0].mxu0
  %v1253 = vadd.f32 0.0, %v1252
  %1254 = vmatprep.mubr.bf16.mxu0 %v937
  %1255 = vmatmul.mubr.bf16.gmra.mrb[0].mxu0 %v893
  %v1256 = vpop.f32.mrb[0].mxu0
  %v1257 = vadd.f32 0.0, %v1256
  %v1258 = vpop.f32.mrb[0].mxu0
  %v1259 = vadd.f32 0.0, %v1258
  %v1260 = vpop.f32.mrb[0].mxu0
  %v1261 = vadd.f32 0.0, %v1260
  %v1262 = vpop.f32.mrb[0].mxu0
  %v1263 = vadd.f32 0.0, %v1262
  %1264 = vmatprep.mubr.bf16.mxu0 %v940
  %1265 = vmatmul.mubr.bf16.gmra.mrb[0].mxu0 %v895
  %v1266 = vpop.f32.mrb[0].mxu0
  %v1267 = vadd.f32 0.0, %v1266
  %v1268 = vpop.f32.mrb[0].mxu0
  %v1269 = vadd.f32 0.0, %v1268
  %v1270 = vpop.f32.mrb[0].mxu0
  %v1271 = vadd.f32 0.0, %v1270
  %v1272 = vpop.f32.mrb[0].mxu0
  %v1273 = vadd.f32 0.0, %v1272
  %1274 = vmatprep.mubr.bf16.mxu0 %v943
  %1275 = vmatmul.mubr.bf16.gmra.mrb[0].mxu0 %v897
  %v1276 = vpop.f32.mrb[0].mxu0
  %v1277 = vadd.f32 0.0, %v1276
  %v1278 = vpop.f32.mrb[0].mxu0
  %v1279 = vadd.f32 0.0, %v1278
  %v1280 = vpop.f32.mrb[0].mxu0
  %v1281 = vadd.f32 0.0, %v1280
  %v1282 = vpop.f32.mrb[0].mxu0
  %v1283 = vadd.f32 0.0, %v1282
  %1284 = vmatprep.mubr.bf16.mxu0 %v946
  %1285 = vmatmul.mubr.bf16.gmra.mrb[0].mxu0 %v899
  %v1286 = vpop.f32.mrb[0].mxu0
  %v1287 = vadd.f32 0.0, %v1286
  %v1288 = vpop.f32.mrb[0].mxu0
  %v1289 = vadd.f32 0.0, %v1288
  %v1290 = vpop.f32.mrb[0].mxu0
  %v1291 = vadd.f32 0.0, %v1290
  %v1292 = vpop.f32.mrb[0].mxu0
  %v1293 = vadd.f32 0.0, %v1292
  %1294 = vmatprep.mubr.bf16.mxu0 %v949
  %1295 = vmatmul.mubr.bf16.gmra.mrb[0].mxu0 %v901
  %v1296 = vpop.f32.mrb[0].mxu0
  %v1297 = vadd.f32 0.0, %v1296
  %v1298 = vpop.f32.mrb[0].mxu0
  %v1299 = vadd.f32 0.0, %v1298
  %v1300 = vpop.f32.mrb[0].mxu0
  %v1301 = vadd.f32 0.0, %v1300
  %v1302 = vpop.f32.mrb[0].mxu0
  %v1303 = vadd.f32 0.0, %v1302
  %1304 = vdwg.mxu0
  %v1305 = vmax.f32 %v1104, %v1187
  %v1306 = vmax.f32 %v1105, %v1189
  %v1307 = vmax.f32 %v1106, %v1191
  %v1308 = vmax.f32 %v1107, %v1193
  %v1309 = vmax.f32 %v1108, %v1197
  %v1310 = vmax.f32 %v1109, %v1199
  %v1311 = vmax.f32 %v1110, %v1201
  %v1312 = vmax.f32 %v1111, %v1203
  %v1313 = vmax.f32 %v1112, %v1207
  %v1314 = vmax.f32 %v1113, %v1209
  %v1315 = vmax.f32 %v1114, %v1211
  %v1316 = vmax.f32 %v1115, %v1213
  %v1317 = vmax.f32 %v1116, %v1217
  %v1318 = vmax.f32 %v1117, %v1219
  %v1319 = vmax.f32 %v1118, %v1221
  %v1320 = vmax.f32 %v1119, %v1223
  %v1321 = vmax.f32 %v1120, %v1227
  %v1322 = vmax.f32 %v1121, %v1229
  %v1323 = vmax.f32 %v1122, %v1231
  %v1324 = vmax.f32 %v1123, %v1233
  %v1325 = vmax.f32 %v1124, %v1237
  %v1326 = vmax.f32 %v1125, %v1239
  %v1327 = vmax.f32 %v1126, %v1241
  %v1328 = vmax.f32 %v1127, %v1243
  %v1329 = vmax.f32 %v1128, %v1247
  %v1330 = vmax.f32 %v1129, %v1249
  %v1331 = vmax.f32 %v1130, %v1251
  %v1332 = vmax.f32 %v1131, %v1253
  %v1333 = vmax.f32 %v1132, %v1257
  %v1334 = vmax.f32 %v1133, %v1259
  %v1335 = vmax.f32 %v1134, %v1261
  %v1336 = vmax.f32 %v1135, %v1263
  %v1337 = vmax.f32 %v1136, %v1267
  %v1338 = vmax.f32 %v1137, %v1269
  %v1339 = vmax.f32 %v1138, %v1271
  %v1340 = vmax.f32 %v1139, %v1273
  %v1341 = vmax.f32 %v1140, %v1277
  %v1342 = vmax.f32 %v1141, %v1279
  %v1343 = vmax.f32 %v1142, %v1281
  %v1344 = vmax.f32 %v1143, %v1283
  %v1345 = vmax.f32 %v1144, %v1287
  %v1346 = vmax.f32 %v1145, %v1289
  %v1347 = vmax.f32 %v1146, %v1291
  %v1348 = vmax.f32 %v1147, %v1293
  %v1349 = vmax.f32 %v1148, %v1297
  %v1350 = vmax.f32 %v1149, %v1299
  %v1351 = vmax.f32 %v1150, %v1301
  %v1352 = vmax.f32 %v1151, %v1303
  %v1353 = vld [vmem:[%s2] sm:$0x3]
  %v1355 = vlaneseq
  %v1356 = vshrl.u32 %v1355, 7
  %v1357 = vsub.s32 0, %v1356
  %v1358 = vrot.slane %v1353, %v1357
  %v1359 = vlaneseq
  %v1360 = vshrl.u32 %v1359, 7
  %v1361 = vsub.s32 1, %v1360
  %v1362 = vrot.slane %v1353, %v1361
  %v1365 = vadd.f32 %v1305, %v1358
  %v1366 = vadd.f32 %v1306, %v1362
  %v1367 = vadd.f32 %v1307, %v1358
  %v1368 = vadd.f32 %v1308, %v1362
  %v1369 = vadd.f32 %v1309, %v1358
  %v1370 = vadd.f32 %v1310, %v1362
  %v1371 = vadd.f32 %v1311, %v1358
  %v1372 = vadd.f32 %v1312, %v1362
  %v1373 = vadd.f32 %v1313, %v1358
  %v1374 = vadd.f32 %v1314, %v1362
  %v1375 = vadd.f32 %v1315, %v1358
  %v1376 = vadd.f32 %v1316, %v1362
  %v1377 = vadd.f32 %v1317, %v1358
  %v1378 = vadd.f32 %v1318, %v1362
  %v1379 = vadd.f32 %v1319, %v1358
  %v1380 = vadd.f32 %v1320, %v1362
  %v1381 = vadd.f32 %v1321, %v1358
  %v1382 = vadd.f32 %v1322, %v1362
  %v1383 = vadd.f32 %v1323, %v1358
  %v1384 = vadd.f32 %v1324, %v1362
  %v1385 = vadd.f32 %v1325, %v1358
  %v1386 = vadd.f32 %v1326, %v1362
  %v1387 = vadd.f32 %v1327, %v1358
  %v1388 = vadd.f32 %v1328, %v1362
  %v1389 = vadd.f32 %v1329, %v1358
  %v1390 = vadd.f32 %v1330, %v1362
  %v1391 = vadd.f32 %v1331, %v1358
  %v1392 = vadd.f32 %v1332, %v1362
  %v1393 = vadd.f32 %v1333, %v1358
  %v1394 = vadd.f32 %v1334, %v1362
  %v1395 = vadd.f32 %v1335, %v1358
  %v1396 = vadd.f32 %v1336, %v1362
  %v1397 = vadd.f32 %v1337, %v1358
  %v1398 = vadd.f32 %v1338, %v1362
  %v1399 = vadd.f32 %v1339, %v1358
  %v1400 = vadd.f32 %v1340, %v1362
  %v1401 = vadd.f32 %v1341, %v1358
  %v1402 = vadd.f32 %v1342, %v1362
  %v1403 = vadd.f32 %v1343, %v1358
  %v1404 = vadd.f32 %v1344, %v1362
  %v1405 = vadd.f32 %v1345, %v1358
  %v1406 = vadd.f32 %v1346, %v1362
  %v1407 = vadd.f32 %v1347, %v1358
  %v1408 = vadd.f32 %v1348, %v1362
  %v1409 = vadd.f32 %v1349, %v1358
  %v1410 = vadd.f32 %v1350, %v1362
  %v1411 = vadd.f32 %v1351, %v1358
  %v1412 = vadd.f32 %v1352, %v1362
  %v1413 = vmax.f32 %v1365, 0.0
  %v1414 = vmax.f32 %v1366, 0.0
  %v1415 = vmax.f32 %v1367, 0.0
  %v1416 = vmax.f32 %v1368, 0.0
  %v1417 = vmax.f32 %v1369, 0.0
  %v1418 = vmax.f32 %v1370, 0.0
  %v1419 = vmax.f32 %v1371, 0.0
  %v1420 = vmax.f32 %v1372, 0.0
  %v1421 = vmax.f32 %v1373, 0.0
  %v1422 = vmax.f32 %v1374, 0.0
  %v1423 = vmax.f32 %v1375, 0.0
  %v1424 = vmax.f32 %v1376, 0.0
  %v1425 = vmax.f32 %v1377, 0.0
  %v1426 = vmax.f32 %v1378, 0.0
  %v1427 = vmax.f32 %v1379, 0.0
  %v1428 = vmax.f32 %v1380, 0.0
  %v1429 = vmax.f32 %v1381, 0.0
  %v1430 = vmax.f32 %v1382, 0.0
  %v1431 = vmax.f32 %v1383, 0.0
  %v1432 = vmax.f32 %v1384, 0.0
  %v1433 = vmax.f32 %v1385, 0.0
  %v1434 = vmax.f32 %v1386, 0.0
  %v1435 = vmax.f32 %v1387, 0.0
  %v1436 = vmax.f32 %v1388, 0.0
  %v1437 = vmax.f32 %v1389, 0.0
  %v1438 = vmax.f32 %v1390, 0.0
  %v1439 = vmax.f32 %v1391, 0.0
  %v1440 = vmax.f32 %v1392, 0.0
  %v1441 = vmax.f32 %v1393, 0.0
  %v1442 = vmax.f32 %v1394, 0.0
  %v1443 = vmax.f32 %v1395, 0.0
  %v1444 = vmax.f32 %v1396, 0.0
  %v1445 = vmax.f32 %v1397, 0.0
  %v1446 = vmax.f32 %v1398, 0.0
  %v1447 = vmax.f32 %v1399, 0.0
  %v1448 = vmax.f32 %v1400, 0.0
  %v1449 = vmax.f32 %v1401, 0.0
  %v1450 = vmax.f32 %v1402, 0.0
  %v1451 = vmax.f32 %v1403, 0.0
  %v1452 = vmax.f32 %v1404, 0.0
  %v1453 = vmax.f32 %v1405, 0.0
  %v1454 = vmax.f32 %v1406, 0.0
  %v1455 = vmax.f32 %v1407, 0.0
  %v1456 = vmax.f32 %v1408, 0.0
  %v1457 = vmax.f32 %v1409, 0.0
  %v1458 = vmax.f32 %v1410, 0.0
  %v1459 = vmax.f32 %v1411, 0.0
  %v1460 = vmax.f32 %v1412, 0.0
  %v1461 = vpack.c.bf16 %v1415, %v1413
  %v1462 = vpack.c.bf16 %v1416, %v1414
  %v1463 = vpack.c.bf16 %v1419, %v1417
  %v1464 = vpack.c.bf16 %v1420, %v1418
  %v1465 = vpack.c.bf16 %v1423, %v1421
  %v1466 = vpack.c.bf16 %v1424, %v1422
  %v1467 = vpack.c.bf16 %v1427, %v1425
  %v1468 = vpack.c.bf16 %v1428, %v1426
  %v1469 = vpack.c.bf16 %v1431, %v1429
  %v1470 = vpack.c.bf16 %v1432, %v1430
  %v1471 = vpack.c.bf16 %v1435, %v1433
  %v1472 = vpack.c.bf16 %v1436, %v1434
  %v1473 = vpack.c.bf16 %v1439, %v1437
  %v1474 = vpack.c.bf16 %v1440, %v1438
  %v1475 = vpack.c.bf16 %v1443, %v1441
  %v1476 = vpack.c.bf16 %v1444, %v1442
  %v1477 = vpack.c.bf16 %v1447, %v1445
  %v1478 = vpack.c.bf16 %v1448, %v1446
  %v1479 = vpack.c.bf16 %v1451, %v1449
  %v1480 = vpack.c.bf16 %v1452, %v1450
  %v1481 = vpack.c.bf16 %v1455, %v1453
  %v1482 = vpack.c.bf16 %v1456, %v1454
  %v1483 = vpack.c.bf16 %v1459, %v1457
  %v1484 = vpack.c.bf16 %v1460, %v1458
  %1485 = vst [vmem:[#allocation2] sm:$0xff] %v1461
  %vm1486 = vcmask 916480
  %1487 = vst.msk [vmem:[#allocation2 + $0x8] sm:$0xff] %vm1486, %v1462
  %1488 = vst [vmem:[#allocation2 + $0x10] sm:$0xff] %v1463
  %1489 = vst.msk [vmem:[#allocation2 + $0x18] sm:$0xff] %vm1486, %v1464
  %1490 = vst [vmem:[#allocation2 + $0x20] sm:$0xff] %v1465
  %1491 = vst.msk [vmem:[#allocation2 + $0x28] sm:$0xff] %vm1486, %v1466
  %1492 = vst [vmem:[#allocation2 + $0x30] sm:$0xff] %v1467
  %1493 = vst.msk [vmem:[#allocation2 + $0x38] sm:$0xff] %vm1486, %v1468
  %1494 = vst [vmem:[#allocation2 + $0x40] sm:$0xff] %v1469
  %1495 = vst.msk [vmem:[#allocation2 + $0x48] sm:$0xff] %vm1486, %v1470
  %1496 = vst [vmem:[#allocation2 + $0x50] sm:$0xff] %v1471
  %1497 = vst.msk [vmem:[#allocation2 + $0x58] sm:$0xff] %vm1486, %v1472
  %1498 = vst [vmem:[#allocation2 + $0x60] sm:$0xff] %v1473
  %1499 = vst.msk [vmem:[#allocation2 + $0x68] sm:$0xff] %vm1486, %v1474
  %1500 = vst [vmem:[#allocation2 + $0x70] sm:$0xff] %v1475
  %1501 = vst.msk [vmem:[#allocation2 + $0x78] sm:$0xff] %vm1486, %v1476
  %1502 = vst [vmem:[#allocation2 + $0x80] sm:$0xff] %v1477
  %1503 = vst.msk [vmem:[#allocation2 + $0x88] sm:$0xff] %vm1486, %v1478
  %1504 = vst [vmem:[#allocation2 + $0x90] sm:$0xff] %v1479
  %1505 = vst.msk [vmem:[#allocation2 + $0x98] sm:$0xff] %vm1486, %v1480
  %1506 = vst [vmem:[#allocation2 + $0xa0] sm:$0xff] %v1481
  %1507 = vst.msk [vmem:[#allocation2 + $0xa8] sm:$0xff] %vm1486, %v1482
  %1508 = vst [vmem:[#allocation2 + $0xb0] sm:$0xff] %v1483
  %1509 = vst.msk [vmem:[#allocation2 + $0xb8] sm:$0xff] %vm1486, %v1484
  %v1510 = vld [vmem:[#allocation2] sm:$0xff]
  %v1511 = vld [vmem:[#allocation2 + $0x8] sm:$0xff]
  %v1512 = vld [vmem:[#allocation2 + $0x10] sm:$0xff]
  %v1513 = vld [vmem:[#allocation2 + $0x18] sm:$0xff]
  %v1514 = vld [vmem:[#allocation2 + $0x20] sm:$0xff]
  %v1515 = vld [vmem:[#allocation2 + $0x28] sm:$0xff]
  %v1516 = vld [vmem:[#allocation2 + $0x30] sm:$0xff]
  %v1517 = vld [vmem:[#allocation2 + $0x38] sm:$0xff]
  %v1518 = vld [vmem:[#allocation2 + $0x60] sm:$0xff]
  %v1519 = vld [vmem:[#allocation2 + $0x68] sm:$0xff]
  %v1520 = vld [vmem:[#allocation2 + $0x70] sm:$0xff]
  %v1521 = vld [vmem:[#allocation2 + $0x78] sm:$0xff]
  %v1522 = vld [vmem:[#allocation2 + $0x80] sm:$0xff]
  %v1523 = vld [vmem:[#allocation2 + $0x88] sm:$0xff]
  %v1524 = vld [vmem:[#allocation2 + $0x90] sm:$0xff]
  %v1525 = vld [vmem:[#allocation2 + $0x98] sm:$0xff]
  %v1526 = vld [vmem:[#allocation2 + $0x40] sm:$0xff]
  %v1527 = vld [vmem:[#allocation2 + $0x48] sm:$0xff]
  %v1528 = vld [vmem:[#allocation2 + $0xa0] sm:$0xff]
  %v1529 = vld [vmem:[#allocation2 + $0xa8] sm:$0xff]
  %v1530 = vld [vmem:[#allocation2 + $0x50] sm:$0xff]
  %v1531 = vld [vmem:[#allocation2 + $0x58] sm:$0xff]
  %v1532 = vld [vmem:[#allocation2 + $0xb0] sm:$0xff]
  %v1533 = vld [vmem:[#allocation2 + $0xb8] sm:$0xff]
  %v1534 = vld [vmem:[%s3] sm:$0xff]
  %v1535 = vld [vmem:[%s3 + $0x8] sm:$0xff]
  %v1536 = vld [vmem:[%s3 + $0x10] sm:$0xff]
  %v1537 = vld [vmem:[%s3 + $0x18] sm:$0xff]
  %v1538 = vld [vmem:[%s3 + $0x20] sm:$0xff]
  %v1539 = vld [vmem:[%s3 + $0x28] sm:$0xff]
  %v1540 = vld [vmem:[%s3 + $0x30] sm:$0xff]
  %v1541 = vld [vmem:[%s3 + $0x38] sm:$0xff]
  %v1542 = vld [vmem:[%s3 + $0x40] sm:$0xff]
  %v1543 = vld [vmem:[%s3 + $0x48] sm:$0xff]
  %v1544 = vld [vmem:[%s3 + $0x50] sm:$0xff]
  %v1545 = vld [vmem:[%s3 + $0x58] sm:$0xff]
  %v1546 = vld [vmem:[%s3 + $0x60] sm:$0xff]
  %v1547 = vld [vmem:[%s3 + $0x68] sm:$0xff]
  %v1548 = vld [vmem:[%s3 + $0x70] sm:$0xff]
  %v1549 = vld [vmem:[%s3 + $0x78] sm:$0xff]
  %v1550 = vld [vmem:[%s3 + $0x80] sm:$0xff]
  %v1551 = vld [vmem:[%s3 + $0x88] sm:$0xff]
  %v1552 = vld [vmem:[%s3 + $0x90] sm:$0xff]
  %v1553 = vld [vmem:[%s3 + $0x98] sm:$0xff]
  %v1554 = vld [vmem:[%s3 + $0xa0] sm:$0xff]
  %v1555 = vld [vmem:[%s3 + $0xa8] sm:$0xff]
  %v1556 = vld [vmem:[%s3 + $0xb0] sm:$0xff]
  %v1557 = vld [vmem:[%s3 + $0xb8] sm:$0xff]
  %v1558 = vld [vmem:[%s3 + $0xc0] sm:$0xff]
  %v1559 = vld [vmem:[%s3 + $0xc8] sm:$0xff]
  %v1560 = vld [vmem:[%s3 + $0xd0] sm:$0xff]
  %v1561 = vld [vmem:[%s3 + $0xd8] sm:$0xff]
  %v1562 = vld [vmem:[%s3 + $0xe0] sm:$0xff]
  %v1563 = vld [vmem:[%s3 + $0xe8] sm:$0xff]
  %s1564 = scalar_lea.vmem %s3, 240
  %v1565 = vld [vmem:[%s1564] sm:$0xff]
  %v1566 = vld [vmem:[%s1564 + $0x8] sm:$0xff]
  %v1567 = vld [vmem:[%s1564 + $0x10] sm:$0xff]
  %v1568 = vld [vmem:[%s1564 + $0x18] sm:$0xff]
  %v1569 = vld [vmem:[%s1564 + $0x20] sm:$0xff]
  %v1570 = vld [vmem:[%s1564 + $0x28] sm:$0xff]
  %v1571 = vld [vmem:[%s1564 + $0x30] sm:$0xff]
  %v1572 = vld [vmem:[%s1564 + $0x38] sm:$0xff]
  %v1573 = vld [vmem:[%s1564 + $0x40] sm:$0xff]
  %v1574 = vld [vmem:[%s1564 + $0x48] sm:$0xff]
  %v1575 = vld [vmem:[%s1564 + $0x50] sm:$0xff]
  %v1576 = vld [vmem:[%s1564 + $0x58] sm:$0xff]
  %v1577 = vld [vmem:[%s1564 + $0x60] sm:$0xff]
  %v1578 = vld [vmem:[%s1564 + $0x68] sm:$0xff]
  %v1579 = vld [vmem:[%s1564 + $0x70] sm:$0xff]
  %v1580 = vld [vmem:[%s1564 + $0x78] sm:$0xff]
  %v1581 = vld [vmem:[%s1564 + $0x80] sm:$0xff]
  %v1582 = vld [vmem:[%s1564 + $0x88] sm:$0xff]
  %v1583 = vld [vmem:[%s1564 + $0x90] sm:$0xff]
  %v1584 = vld [vmem:[%s1564 + $0x98] sm:$0xff]
  %v1585 = vld [vmem:[%s1564 + $0xa0] sm:$0xff]
  %v1586 = vld [vmem:[%s1564 + $0xa8] sm:$0xff]
  %v1587 = vld [vmem:[%s1564 + $0xb0] sm:$0xff]
  %v1588 = vld [vmem:[%s1564 + $0xb8] sm:$0xff]
  %v1589 = vld [vmem:[%s1564 + $0xc0] sm:$0xff]
  %v1590 = vld [vmem:[%s1564 + $0xc8] sm:$0xff]
  %v1591 = vld [vmem:[%s1564 + $0xd0] sm:$0xff]
  %v1592 = vld [vmem:[%s1564 + $0xd8] sm:$0xff]
  %v1593 = vld [vmem:[%s1564 + $0xe0] sm:$0xff]
  %v1594 = vld [vmem:[%s1564 + $0xe8] sm:$0xff]
  %s1595 = scalar_lea.vmem %s3, 480
  %v1596 = vld [vmem:[%s1595] sm:$0xff]
  %v1597 = vld [vmem:[%s1595 + $0x8] sm:$0xff]
  %v1598 = vld [vmem:[%s1595 + $0x10] sm:$0xff]
  %v1599 = vld [vmem:[%s1595 + $0x18] sm:$0xff]
  %v1600 = vld [vmem:[%s1595 + $0x20] sm:$0xff]
  %v1601 = vld [vmem:[%s1595 + $0x28] sm:$0xff]
  %v1602 = vld [vmem:[%s1595 + $0x30] sm:$0xff]
  %v1603 = vld [vmem:[%s1595 + $0x38] sm:$0xff]
  %v1604 = vld [vmem:[%s1595 + $0x40] sm:$0xff]
  %v1605 = vld [vmem:[%s1595 + $0x48] sm:$0xff]
  %v1606 = vld [vmem:[%s1595 + $0x50] sm:$0xff]
  %v1607 = vld [vmem:[%s1595 + $0x58] sm:$0xff]
  %v1608 = vld [vmem:[%s1595 + $0x60] sm:$0xff]
  %v1609 = vld [vmem:[%s1595 + $0x68] sm:$0xff]
  %v1610 = vld [vmem:[%s1595 + $0x70] sm:$0xff]
  %v1611 = vld [vmem:[%s1595 + $0x78] sm:$0xff]
  %v1612 = vld [vmem:[%s1595 + $0x80] sm:$0xff]
  %v1613 = vld [vmem:[%s1595 + $0x88] sm:$0xff]
  %v1614 = vld [vmem:[%s1595 + $0x90] sm:$0xff]
  %v1615 = vld [vmem:[%s1595 + $0x98] sm:$0xff]
  %v1616 = vld [vmem:[%s1595 + $0xa0] sm:$0xff]
  %v1617 = vld [vmem:[%s1595 + $0xa8] sm:$0xff]
  %v1618 = vld [vmem:[%s1595 + $0xb0] sm:$0xff]
  %v1619 = vld [vmem:[%s1595 + $0xb8] sm:$0xff]
  %v1620 = vld [vmem:[%s1595 + $0xc0] sm:$0xff]
  %v1621 = vld [vmem:[%s1595 + $0xc8] sm:$0xff]
  %v1622 = vld [vmem:[%s1595 + $0xd0] sm:$0xff]
  %v1623 = vld [vmem:[%s1595 + $0xd8] sm:$0xff]
  %v1624 = vld [vmem:[%s1595 + $0xe0] sm:$0xff]
  %v1625 = vld [vmem:[%s1595 + $0xe8] sm:$0xff]
  %v1656 = vunpack.c.l.b16 %v1596
  %v1657 = vunpack.c.h.b16 %v1596
  %v1658 = vunpack.c.l.b16 %v1597
  %v1659 = vunpack.c.h.b16 %v1597
  %v1660 = vunpack.c.l.b16 %v1598
  %v1661 = vunpack.c.h.b16 %v1598
  %v1662 = vunpack.c.l.b16 %v1599
  %v1663 = vunpack.c.h.b16 %v1599
  %v1664 = vunpack.c.l.b16 %v1600
  %v1665 = vunpack.c.h.b16 %v1600
  %v1666 = vunpack.c.l.b16 %v1601
  %v1667 = vunpack.c.h.b16 %v1601
  %v1668 = vunpack.c.l.b16 %v1602
  %v1669 = vunpack.c.h.b16 %v1602
  %v1670 = vunpack.c.l.b16 %v1603
  %v1671 = vunpack.c.h.b16 %v1603
  %v1672 = vunpack.c.l.b16 %v1604
  %v1673 = vunpack.c.h.b16 %v1604
  %v1674 = vunpack.c.l.b16 %v1605
  %v1675 = vunpack.c.h.b16 %v1605
  %v1676 = vunpack.c.l.b16 %v1606
  %v1677 = vunpack.c.h.b16 %v1606
  %v1678 = vunpack.c.l.b16 %v1607
  %v1679 = vunpack.c.h.b16 %v1607
  %v1680 = vunpack.c.l.b16 %v1608
  %v1681 = vunpack.c.h.b16 %v1608
  %v1682 = vunpack.c.l.b16 %v1609
  %v1683 = vunpack.c.h.b16 %v1609
  %v1684 = vunpack.c.l.b16 %v1610
  %v1685 = vunpack.c.h.b16 %v1610
  %v1686 = vunpack.c.l.b16 %v1611
  %v1687 = vunpack.c.h.b16 %v1611
  %v1688 = vunpack.c.l.b16 %v1612
  %v1689 = vunpack.c.h.b16 %v1612
  %v1690 = vunpack.c.l.b16 %v1613
  %v1691 = vunpack.c.h.b16 %v1613
  %v1692 = vunpack.c.l.b16 %v1614
  %v1693 = vunpack.c.h.b16 %v1614
  %v1694 = vunpack.c.l.b16 %v1615
  %v1695 = vunpack.c.h.b16 %v1615
  %v1696 = vunpack.c.l.b16 %v1616
  %v1697 = vunpack.c.h.b16 %v1616
  %v1698 = vunpack.c.l.b16 %v1617
  %v1699 = vunpack.c.h.b16 %v1617
  %v1700 = vunpack.c.l.b16 %v1618
  %v1701 = vunpack.c.h.b16 %v1618
  %v1702 = vunpack.c.l.b16 %v1619
  %v1703 = vunpack.c.h.b16 %v1619
  %v1704 = vunpack.c.l.b16 %v1620
  %v1705 = vunpack.c.h.b16 %v1620
  %v1706 = vunpack.c.l.b16 %v1621
  %v1707 = vunpack.c.h.b16 %v1621
  %v1708 = vunpack.c.l.b16 %v1622
  %v1709 = vunpack.c.h.b16 %v1622
  %v1710 = vunpack.c.l.b16 %v1623
  %v1711 = vunpack.c.h.b16 %v1623
  %v1712 = vunpack.c.l.b16 %v1624
  %v1713 = vunpack.c.h.b16 %v1624
  %v1714 = vunpack.c.l.b16 %v1625
  %v1715 = vunpack.c.h.b16 %v1625
  %v1716 = vpack.c.b16 %v1658, %v1656
  %v1717 = vpack.c.b16 %v1659, %v1657
  %v1718 = vpack.c.b16 %v1662, %v1660
  %v1719 = vpack.c.b16 %v1663, %v1661
  %v1720 = vpack.c.b16 %v1666, %v1664
  %v1721 = vpack.c.b16 %v1667, %v1665
  %v1722 = vpack.c.b16 %v1670, %v1668
  %v1723 = vpack.c.b16 %v1671, %v1669
  %v1724 = vpack.c.b16 %v1674, %v1672
  %v1725 = vpack.c.b16 %v1675, %v1673
  %v1726 = vpack.c.b16 %v1678, %v1676
  %v1727 = vpack.c.b16 %v1679, %v1677
  %v1728 = vpack.c.b16 %v1682, %v1680
  %v1729 = vpack.c.b16 %v1683, %v1681
  %v1730 = vpack.c.b16 %v1686, %v1684
  %v1731 = vpack.c.b16 %v1687, %v1685
  %v1732 = vpack.c.b16 %v1690, %v1688
  %v1733 = vpack.c.b16 %v1691, %v1689
  %v1734 = vpack.c.b16 %v1694, %v1692
  %v1735 = vpack.c.b16 %v1695, %v1693
  %v1736 = vpack.c.b16 %v1698, %v1696
  %v1737 = vpack.c.b16 %v1699, %v1697
  %v1738 = vpack.c.b16 %v1702, %v1700
  %v1739 = vpack.c.b16 %v1703, %v1701
  %v1740 = vpack.c.b16 %v1706, %v1704
  %v1741 = vpack.c.b16 %v1707, %v1705
  %v1742 = vpack.c.b16 %v1710, %v1708
  %v1743 = vpack.c.b16 %v1711, %v1709
  %v1744 = vpack.c.b16 %v1714, %v1712
  %v1745 = vpack.c.b16 %v1715, %v1713
  %v1777 = vsel %vm1486, %v1519, 0
  %v1780 = vsel %vm1486, %v1521, 0
  %v1783 = vsel %vm1486, %v1523, 0
  %v1786 = vsel %vm1486, %v1525, 0
  %1788 = vmatprep.subr.bf16.mxu0 %v1717
  %1789 = vmatpush1.bf16.msra.mxu0 %v1716
  %1790 = vmatprep.subr.bf16.mxu0 %v1719
  %1791 = vmatpush1.bf16.msra.mxu0 %v1718
  %1792 = vmatprep.subr.bf16.mxu0 %v1721
  %1793 = vmatpush1.bf16.msra.mxu0 %v1720
  %1794 = vmatprep.subr.bf16.mxu0 %v1723
  %1795 = vmatpush1.bf16.msra.mxu0 %v1722
  %1796 = vmatprep.subr.bf16.mxu0 %v1725
  %1797 = vmatpush1.bf16.msra.mxu0 %v1724
  %1798 = vmatprep.subr.bf16.mxu0 %v1727
  %1799 = vmatpush1.bf16.msra.mxu0 %v1726
  %1800 = vmatprep.subr.bf16.mxu0 %v1729
  %1801 = vmatpush1.bf16.msra.mxu0 %v1728
  %1802 = vmatprep.subr.bf16.mxu0 %v1731
  %1803 = vmatpush1.bf16.msra.mxu0 %v1730
  %1804 = vmatprep.subr.bf16.mxu0 %v1733
  %1805 = vmatpush1.bf16.msra.mxu0 %v1732
  %1806 = vmatprep.subr.bf16.mxu0 %v1735
  %1807 = vmatpush1.bf16.msra.mxu0 %v1734
  %1808 = vmatprep.subr.bf16.mxu0 %v1737
  %1809 = vmatpush1.bf16.msra.mxu0 %v1736
  %1810 = vmatprep.subr.bf16.mxu0 %v1739
  %1811 = vmatpush1.bf16.msra.mxu0 %v1738
  %1812 = vmatprep.subr.bf16.mxu0 %v1741
  %1813 = vmatpush1.bf16.msra.mxu0 %v1740
  %1814 = vmatprep.subr.bf16.mxu0 %v1743
  %1815 = vmatpush1.bf16.msra.mxu0 %v1742
  %1816 = vmatprep.subr.bf16.mxu0 %v1745
  %1817 = vmatpush1.bf16.msra.mxu0 %v1744
  %1818 = vmatprep.subr.bf16.mxu0 0
  %1819 = vmatpush1.bf16.msra.mxu0 0
  %1820 = vmatprep.mubr.bf16.mxu0 %v1777
  %1821 = vmatmul.mubr.bf16.gmra.mrb[0].mxu0 %v1518
  %v1822 = vpop.f32.mrb[0].mxu0
  %v1823 = vadd.f32 0.0, %v1822
  %v1824 = vpop.f32.mrb[0].mxu0
  %v1825 = vadd.f32 0.0, %v1824
  %v1826 = vpop.f32.mrb[0].mxu0
  %v1827 = vadd.f32 0.0, %v1826
  %v1828 = vpop.f32.mrb[0].mxu0
  %v1829 = vadd.f32 0.0, %v1828
  %1830 = vmatprep.mubr.bf16.mxu0 %v1780
  %1831 = vmatmul.mubr.bf16.gmra.mrb[0].mxu0 %v1520
  %v1832 = vpop.f32.mrb[0].mxu0
  %v1833 = vadd.f32 0.0, %v1832
  %v1834 = vpop.f32.mrb[0].mxu0
  %v1835 = vadd.f32 0.0, %v1834
  %v1836 = vpop.f32.mrb[0].mxu0
  %v1837 = vadd.f32 0.0, %v1836
  %v1838 = vpop.f32.mrb[0].mxu0
  %v1839 = vadd.f32 0.0, %v1838
  %1840 = vmatprep.mubr.bf16.mxu0 %v1783
  %1841 = vmatmul.mubr.bf16.gmra.mrb[0].mxu0 %v1522
  %v1842 = vpop.f32.mrb[0].mxu0
  %v1843 = vadd.f32 0.0, %v1842
  %v1844 = vpop.f32.mrb[0].mxu0
  %v1845 = vadd.f32 0.0, %v1844
  %v1846 = vpop.f32.mrb[0].mxu0
  %v1847 = vadd.f32 0.0, %v1846
  %v1848 = vpop.f32.mrb[0].mxu0
  %v1849 = vadd.f32 0.0, %v1848
  %1850 = vmatprep.mubr.bf16.mxu0 %v1786
  %1851 = vmatmul.mubr.bf16.gmra.mrb[0].mxu0 %v1524
  %v1852 = vpop.f32.mrb[0].mxu0
  %v1853 = vadd.f32 0.0, %v1852
  %v1854 = vpop.f32.mrb[0].mxu0
  %v1855 = vadd.f32 0.0, %v1854
  %v1856 = vpop.f32.mrb[0].mxu0
  %v1857 = vadd.f32 0.0, %v1856
  %v1858 = vpop.f32.mrb[0].mxu0
  %v1859 = vadd.f32 0.0, %v1858
  %1860 = vdwg.mxu0
  %s1861 = scalar_lea.vmem %s3, 720
  %v1862 = vld [vmem:[%s1861] sm:$0xff]
  %v1863 = vld [vmem:[%s1861 + $0x8] sm:$0xff]
  %v1864 = vld [vmem:[%s1861 + $0x10] sm:$0xff]
  %v1865 = vld [vmem:[%s1861 + $0x18] sm:$0xff]
  %v1866 = vld [vmem:[%s1861 + $0x20] sm:$0xff]
  %v1867 = vld [vmem:[%s1861 + $0x28] sm:$0xff]
  %v1868 = vld [vmem:[%s1861 + $0x30] sm:$0xff]
  %v1869 = vld [vmem:[%s1861 + $0x38] sm:$0xff]
  %v1870 = vld [vmem:[%s1861 + $0x40] sm:$0xff]
  %v1871 = vld [vmem:[%s1861 + $0x48] sm:$0xff]
  %v1872 = vld [vmem:[%s1861 + $0x50] sm:$0xff]
  %v1873 = vld [vmem:[%s1861 + $0x58] sm:$0xff]
  %v1874 = vld [vmem:[%s1861 + $0x60] sm:$0xff]
  %v1875 = vld [vmem:[%s1861 + $0x68] sm:$0xff]
  %v1876 = vld [vmem:[%s1861 + $0x70] sm:$0xff]
  %v1877 = vld [vmem:[%s1861 + $0x78] sm:$0xff]
  %v1878 = vld [vmem:[%s1861 + $0x80] sm:$0xff]
  %v1879 = vld [vmem:[%s1861 + $0x88] sm:$0xff]
  %v1880 = vld [vmem:[%s1861 + $0x90] sm:$0xff]
  %v1881 = vld [vmem:[%s1861 + $0x98] sm:$0xff]
  %v1882 = vld [vmem:[%s1861 + $0xa0] sm:$0xff]
  %v1883 = vld [vmem:[%s1861 + $0xa8] sm:$0xff]
  %v1884 = vld [vmem:[%s1861 + $0xb0] sm:$0xff]
  %v1885 = vld [vmem:[%s1861 + $0xb8] sm:$0xff]
  %v1886 = vld [vmem:[%s1861 + $0xc0] sm:$0xff]
  %v1887 = vld [vmem:[%s1861 + $0xc8] sm:$0xff]
  %v1888 = vld [vmem:[%s1861 + $0xd0] sm:$0xff]
  %v1889 = vld [vmem:[%s1861 + $0xd8] sm:$0xff]
  %v1890 = vld [vmem:[%s1861 + $0xe0] sm:$0xff]
  %v1891 = vld [vmem:[%s1861 + $0xe8] sm:$0xff]
  %v1922 = vunpack.c.l.b16 %v1862
  %v1923 = vunpack.c.h.b16 %v1862
  %v1924 = vunpack.c.l.b16 %v1863
  %v1925 = vunpack.c.h.b16 %v1863
  %v1926 = vunpack.c.l.b16 %v1864
  %v1927 = vunpack.c.h.b16 %v1864
  %v1928 = vunpack.c.l.b16 %v1865
  %v1929 = vunpack.c.h.b16 %v1865
  %v1930 = vunpack.c.l.b16 %v1866
  %v1931 = vunpack.c.h.b16 %v1866
  %v1932 = vunpack.c.l.b16 %v1867
  %v1933 = vunpack.c.h.b16 %v1867
  %v1934 = vunpack.c.l.b16 %v1868
  %v1935 = vunpack.c.h.b16 %v1868
  %v1936 = vunpack.c.l.b16 %v1869
  %v1937 = vunpack.c.h.b16 %v1869
  %v1938 = vunpack.c.l.b16 %v1870
  %v1939 = vunpack.c.h.b16 %v1870
  %v1940 = vunpack.c.l.b16 %v1871
  %v1941 = vunpack.c.h.b16 %v1871
  %v1942 = vunpack.c.l.b16 %v1872
  %v1943 = vunpack.c.h.b16 %v1872
  %v1944 = vunpack.c.l.b16 %v1873
  %v1945 = vunpack.c.h.b16 %v1873
  %v1946 = vunpack.c.l.b16 %v1874
  %v1947 = vunpack.c.h.b16 %v1874
  %v1948 = vunpack.c.l.b16 %v1875
  %v1949 = vunpack.c.h.b16 %v1875
  %v1950 = vunpack.c.l.b16 %v1876
  %v1951 = vunpack.c.h.b16 %v1876
  %v1952 = vunpack.c.l.b16 %v1877
  %v1953 = vunpack.c.h.b16 %v1877
  %v1954 = vunpack.c.l.b16 %v1878
  %v1955 = vunpack.c.h.b16 %v1878
  %v1956 = vunpack.c.l.b16 %v1879
  %v1957 = vunpack.c.h.b16 %v1879
  %v1958 = vunpack.c.l.b16 %v1880
  %v1959 = vunpack.c.h.b16 %v1880
  %v1960 = vunpack.c.l.b16 %v1881
  %v1961 = vunpack.c.h.b16 %v1881
  %v1962 = vunpack.c.l.b16 %v1882
  %v1963 = vunpack.c.h.b16 %v1882
  %v1964 = vunpack.c.l.b16 %v1883
  %v1965 = vunpack.c.h.b16 %v1883
  %v1966 = vunpack.c.l.b16 %v1884
  %v1967 = vunpack.c.h.b16 %v1884
  %v1968 = vunpack.c.l.b16 %v1885
  %v1969 = vunpack.c.h.b16 %v1885
  %v1970 = vunpack.c.l.b16 %v1886
  %v1971 = vunpack.c.h.b16 %v1886
  %v1972 = vunpack.c.l.b16 %v1887
  %v1973 = vunpack.c.h.b16 %v1887
  %v1974 = vunpack.c.l.b16 %v1888
  %v1975 = vunpack.c.h.b16 %v1888
  %v1976 = vunpack.c.l.b16 %v1889
  %v1977 = vunpack.c.h.b16 %v1889
  %v1978 = vunpack.c.l.b16 %v1890
  %v1979 = vunpack.c.h.b16 %v1890
  %v1980 = vunpack.c.l.b16 %v1891
  %v1981 = vunpack.c.h.b16 %v1891
  %v1982 = vpack.c.b16 %v1924, %v1922
  %v1983 = vpack.c.b16 %v1925, %v1923
  %v1984 = vpack.c.b16 %v1928, %v1926
  %v1985 = vpack.c.b16 %v1929, %v1927
  %v1986 = vpack.c.b16 %v1932, %v1930
  %v1987 = vpack.c.b16 %v1933, %v1931
  %v1988 = vpack.c.b16 %v1936, %v1934
  %v1989 = vpack.c.b16 %v1937, %v1935
  %v1990 = vpack.c.b16 %v1940, %v1938
  %v1991 = vpack.c.b16 %v1941, %v1939
  %v1992 = vpack.c.b16 %v1944, %v1942
  %v1993 = vpack.c.b16 %v1945, %v1943
  %v1994 = vpack.c.b16 %v1948, %v1946
  %v1995 = vpack.c.b16 %v1949, %v1947
  %v1996 = vpack.c.b16 %v1952, %v1950
  %v1997 = vpack.c.b16 %v1953, %v1951
  %v1998 = vpack.c.b16 %v1956, %v1954
  %v1999 = vpack.c.b16 %v1957, %v1955
  %v2000 = vpack.c.b16 %v1960, %v1958
  %v2001 = vpack.c.b16 %v1961, %v1959
  %v2002 = vpack.c.b16 %v1964, %v1962
  %v2003 = vpack.c.b16 %v1965, %v1963
  %v2004 = vpack.c.b16 %v1968, %v1966
  %v2005 = vpack.c.b16 %v1969, %v1967
  %v2006 = vpack.c.b16 %v1972, %v1970
  %v2007 = vpack.c.b16 %v1973, %v1971
  %v2008 = vpack.c.b16 %v1976, %v1974
  %v2009 = vpack.c.b16 %v1977, %v1975
  %v2010 = vpack.c.b16 %v1980, %v1978
  %v2011 = vpack.c.b16 %v1981, %v1979
  %2042 = vmatprep.subr.bf16.mxu0 %v1983
  %2043 = vmatpush1.bf16.msra.mxu0 %v1982
  %2044 = vmatprep.subr.bf16.mxu0 %v1985
  %2045 = vmatpush1.bf16.msra.mxu0 %v1984
  %2046 = vmatprep.subr.bf16.mxu0 %v1987
  %2047 = vmatpush1.bf16.msra.mxu0 %v1986
  %2048 = vmatprep.subr.bf16.mxu0 %v1989
  %2049 = vmatpush1.bf16.msra.mxu0 %v1988
  %2050 = vmatprep.subr.bf16.mxu0 %v1991
  %2051 = vmatpush1.bf16.msra.mxu0 %v1990
  %2052 = vmatprep.subr.bf16.mxu0 %v1993
  %2053 = vmatpush1.bf16.msra.mxu0 %v1992
  %2054 = vmatprep.subr.bf16.mxu0 %v1995
  %2055 = vmatpush1.bf16.msra.mxu0 %v1994
  %2056 = vmatprep.subr.bf16.mxu0 %v1997
  %2057 = vmatpush1.bf16.msra.mxu0 %v1996
  %2058 = vmatprep.subr.bf16.mxu0 %v1999
  %2059 = vmatpush1.bf16.msra.mxu0 %v1998
  %2060 = vmatprep.subr.bf16.mxu0 %v2001
  %2061 = vmatpush1.bf16.msra.mxu0 %v2000
  %2062 = vmatprep.subr.bf16.mxu0 %v2003
  %2063 = vmatpush1.bf16.msra.mxu0 %v2002
  %2064 = vmatprep.subr.bf16.mxu0 %v2005
  %2065 = vmatpush1.bf16.msra.mxu0 %v2004
  %2066 = vmatprep.subr.bf16.mxu0 %v2007
  %2067 = vmatpush1.bf16.msra.mxu0 %v2006
  %2068 = vmatprep.subr.bf16.mxu0 %v2009
  %2069 = vmatpush1.bf16.msra.mxu0 %v2008
  %2070 = vmatprep.subr.bf16.mxu0 %v2011
  %2071 = vmatpush1.bf16.msra.mxu0 %v2010
  %2072 = vmatprep.subr.bf16.mxu0 0
  %2073 = vmatpush1.bf16.msra.mxu0 0
  %2074 = vmatprep.mubr.bf16.mxu0 %v1777
  %2075 = vmatmul.mubr.bf16.gmra.mrb[0].mxu0 %v1518
  %v2076 = vpop.f32.mrb[0].mxu0
  %v2077 = vadd.f32 0.0, %v2076
  %v2078 = vpop.f32.mrb[0].mxu0
  %v2079 = vadd.f32 0.0, %v2078
  %v2080 = vpop.f32.mrb[0].mxu0
  %v2081 = vadd.f32 0.0, %v2080
  %v2082 = vpop.f32.mrb[0].mxu0
  %v2083 = vadd.f32 0.0, %v2082
  %2084 = vmatprep.mubr.bf16.mxu0 %v1780
  %2085 = vmatmul.mubr.bf16.gmra.mrb[0].mxu0 %v1520
  %v2086 = vpop.f32.mrb[0].mxu0
  %v2087 = vadd.f32 0.0, %v2086
  %v2088 = vpop.f32.mrb[0].mxu0
  %v2089 = vadd.f32 0.0, %v2088
  %v2090 = vpop.f32.mrb[0].mxu0
  %v2091 = vadd.f32 0.0, %v2090
  %v2092 = vpop.f32.mrb[0].mxu0
  %v2093 = vadd.f32 0.0, %v2092
  %2094 = vmatprep.mubr.bf16.mxu0 %v1783
  %2095 = vmatmul.mubr.bf16.gmra.mrb[0].mxu0 %v1522
  %v2096 = vpop.f32.mrb[0].mxu0
  %v2097 = vadd.f32 0.0, %v2096
  %v2098 = vpop.f32.mrb[0].mxu0
  %v2099 = vadd.f32 0.0, %v2098
  %v2100 = vpop.f32.mrb[0].mxu0
  %v2101 = vadd.f32 0.0, %v2100
  %v2102 = vpop.f32.mrb[0].mxu0
  %v2103 = vadd.f32 0.0, %v2102
  %2104 = vmatprep.mubr.bf16.mxu0 %v1786
  %2105 = vmatmul.mubr.bf16.gmra.mrb[0].mxu0 %v1524
  %v2106 = vpop.f32.mrb[0].mxu0
  %v2107 = vadd.f32 0.0, %v2106
  %v2108 = vpop.f32.mrb[0].mxu0
  %v2109 = vadd.f32 0.0, %v2108
  %v2110 = vpop.f32.mrb[0].mxu0
  %v2111 = vadd.f32 0.0, %v2110
  %v2112 = vpop.f32.mrb[0].mxu0
  %v2113 = vadd.f32 0.0, %v2112
  %2114 = vdwg.mxu0
  %v2145 = vunpack.c.l.b16 %v1534
  %v2146 = vunpack.c.h.b16 %v1534
  %v2147 = vunpack.c.l.b16 %v1535
  %v2148 = vunpack.c.h.b16 %v1535
  %v2149 = vunpack.c.l.b16 %v1536
  %v2150 = vunpack.c.h.b16 %v1536
  %v2151 = vunpack.c.l.b16 %v1537
  %v2152 = vunpack.c.h.b16 %v1537
  %v2153 = vunpack.c.l.b16 %v1538
  %v2154 = vunpack.c.h.b16 %v1538
  %v2155 = vunpack.c.l.b16 %v1539
  %v2156 = vunpack.c.h.b16 %v1539
  %v2157 = vunpack.c.l.b16 %v1540
  %v2158 = vunpack.c.h.b16 %v1540
  %v2159 = vunpack.c.l.b16 %v1541
  %v2160 = vunpack.c.h.b16 %v1541
  %v2161 = vunpack.c.l.b16 %v1542
  %v2162 = vunpack.c.h.b16 %v1542
  %v2163 = vunpack.c.l.b16 %v1543
  %v2164 = vunpack.c.h.b16 %v1543
  %v2165 = vunpack.c.l.b16 %v1544
  %v2166 = vunpack.c.h.b16 %v1544
  %v2167 = vunpack.c.l.b16 %v1545
  %v2168 = vunpack.c.h.b16 %v1545
  %v2169 = vunpack.c.l.b16 %v1546
  %v2170 = vunpack.c.h.b16 %v1546
  %v2171 = vunpack.c.l.b16 %v1547
  %v2172 = vunpack.c.h.b16 %v1547
  %v2173 = vunpack.c.l.b16 %v1548
  %v2174 = vunpack.c.h.b16 %v1548
  %v2175 = vunpack.c.l.b16 %v1549
  %v2176 = vunpack.c.h.b16 %v1549
  %v2177 = vunpack.c.l.b16 %v1550
  %v2178 = vunpack.c.h.b16 %v1550
  %v2179 = vunpack.c.l.b16 %v1551
  %v2180 = vunpack.c.h.b16 %v1551
  %v2181 = vunpack.c.l.b16 %v1552
  %v2182 = vunpack.c.h.b16 %v1552
  %v2183 = vunpack.c.l.b16 %v1553
  %v2184 = vunpack.c.h.b16 %v1553
  %v2185 = vunpack.c.l.b16 %v1554
  %v2186 = vunpack.c.h.b16 %v1554
  %v2187 = vunpack.c.l.b16 %v1555
  %v2188 = vunpack.c.h.b16 %v1555
  %v2189 = vunpack.c.l.b16 %v1556
  %v2190 = vunpack.c.h.b16 %v1556
  %v2191 = vunpack.c.l.b16 %v1557
  %v2192 = vunpack.c.h.b16 %v1557
  %v2193 = vunpack.c.l.b16 %v1558
  %v2194 = vunpack.c.h.b16 %v1558
  %v2195 = vunpack.c.l.b16 %v1559
  %v2196 = vunpack.c.h.b16 %v1559
  %v2197 = vunpack.c.l.b16 %v1560
  %v2198 = vunpack.c.h.b16 %v1560
  %v2199 = vunpack.c.l.b16 %v1561
  %v2200 = vunpack.c.h.b16 %v1561
  %v2201 = vunpack.c.l.b16 %v1562
  %v2202 = vunpack.c.h.b16 %v1562
  %v2203 = vunpack.c.l.b16 %v1563
  %v2204 = vunpack.c.h.b16 %v1563
  %v2205 = vpack.c.b16 %v2147, %v2145
  %v2206 = vpack.c.b16 %v2148, %v2146
  %v2207 = vpack.c.b16 %v2151, %v2149
  %v2208 = vpack.c.b16 %v2152, %v2150
  %v2209 = vpack.c.b16 %v2155, %v2153
  %v2210 = vpack.c.b16 %v2156, %v2154
  %v2211 = vpack.c.b16 %v2159, %v2157
  %v2212 = vpack.c.b16 %v2160, %v2158
  %v2213 = vpack.c.b16 %v2163, %v2161
  %v2214 = vpack.c.b16 %v2164, %v2162
  %v2215 = vpack.c.b16 %v2167, %v2165
  %v2216 = vpack.c.b16 %v2168, %v2166
  %v2217 = vpack.c.b16 %v2171, %v2169
  %v2218 = vpack.c.b16 %v2172, %v2170
  %v2219 = vpack.c.b16 %v2175, %v2173
  %v2220 = vpack.c.b16 %v2176, %v2174
  %v2221 = vpack.c.b16 %v2179, %v2177
  %v2222 = vpack.c.b16 %v2180, %v2178
  %v2223 = vpack.c.b16 %v2183, %v2181
  %v2224 = vpack.c.b16 %v2184, %v2182
  %v2225 = vpack.c.b16 %v2187, %v2185
  %v2226 = vpack.c.b16 %v2188, %v2186
  %v2227 = vpack.c.b16 %v2191, %v2189
  %v2228 = vpack.c.b16 %v2192, %v2190
  %v2229 = vpack.c.b16 %v2195, %v2193
  %v2230 = vpack.c.b16 %v2196, %v2194
  %v2231 = vpack.c.b16 %v2199, %v2197
  %v2232 = vpack.c.b16 %v2200, %v2198
  %v2233 = vpack.c.b16 %v2203, %v2201
  %v2234 = vpack.c.b16 %v2204, %v2202
  %v2266 = vsel %vm1486, %v1511, 0
  %v2269 = vsel %vm1486, %v1513, 0
  %v2272 = vsel %vm1486, %v1515, 0
  %v2275 = vsel %vm1486, %v1517, 0
  %2277 = vmatprep.subr.bf16.mxu0 %v2206
  %2278 = vmatpush1.bf16.msra.mxu0 %v2205
  %2279 = vmatprep.subr.bf16.mxu0 %v2208
  %2280 = vmatpush1.bf16.msra.mxu0 %v2207
  %2281 = vmatprep.subr.bf16.mxu0 %v2210
  %2282 = vmatpush1.bf16.msra.mxu0 %v2209
  %2283 = vmatprep.subr.bf16.mxu0 %v2212
  %2284 = vmatpush1.bf16.msra.mxu0 %v2211
  %2285 = vmatprep.subr.bf16.mxu0 %v2214
  %2286 = vmatpush1.bf16.msra.mxu0 %v2213
  %2287 = vmatprep.subr.bf16.mxu0 %v2216
  %2288 = vmatpush1.bf16.msra.mxu0 %v2215
  %2289 = vmatprep.subr.bf16.mxu0 %v2218
  %2290 = vmatpush1.bf16.msra.mxu0 %v2217
  %2291 = vmatprep.subr.bf16.mxu0 %v2220
  %2292 = vmatpush1.bf16.msra.mxu0 %v2219
  %2293 = vmatprep.subr.bf16.mxu0 %v2222
  %2294 = vmatpush1.bf16.msra.mxu0 %v2221
  %2295 = vmatprep.subr.bf16.mxu0 %v2224
  %2296 = vmatpush1.bf16.msra.mxu0 %v2223
  %2297 = vmatprep.subr.bf16.mxu0 %v2226
  %2298 = vmatpush1.bf16.msra.mxu0 %v2225
  %2299 = vmatprep.subr.bf16.mxu0 %v2228
  %2300 = vmatpush1.bf16.msra.mxu0 %v2227
  %2301 = vmatprep.subr.bf16.mxu0 %v2230
  %2302 = vmatpush1.bf16.msra.mxu0 %v2229
  %2303 = vmatprep.subr.bf16.mxu0 %v2232
  %2304 = vmatpush1.bf16.msra.mxu0 %v2231
  %2305 = vmatprep.subr.bf16.mxu0 %v2234
  %2306 = vmatpush1.bf16.msra.mxu0 %v2233
  %2307 = vmatprep.subr.bf16.mxu0 0
  %2308 = vmatpush1.bf16.msra.mxu0 0
  %2309 = vmatprep.mubr.bf16.mxu0 %v2266
  %2310 = vmatmul.mubr.bf16.gmra.mrb[0].mxu0 %v1510
  %v2311 = vpop.f32.mrb[0].mxu0
  %v2312 = vadd.f32 %v1823, %v2311
  %v2313 = vpop.f32.mrb[0].mxu0
  %v2314 = vadd.f32 %v1825, %v2313
  %v2315 = vpop.f32.mrb[0].mxu0
  %v2316 = vadd.f32 %v1827, %v2315
  %v2317 = vpop.f32.mrb[0].mxu0
  %v2318 = vadd.f32 %v1829, %v2317
  %2319 = vmatprep.mubr.bf16.mxu0 %v2269
  %2320 = vmatmul.mubr.bf16.gmra.mrb[0].mxu0 %v1512
  %v2321 = vpop.f32.mrb[0].mxu0
  %v2322 = vadd.f32 %v1833, %v2321
  %v2323 = vpop.f32.mrb[0].mxu0
  %v2324 = vadd.f32 %v1835, %v2323
  %v2325 = vpop.f32.mrb[0].mxu0
  %v2326 = vadd.f32 %v1837, %v2325
  %v2327 = vpop.f32.mrb[0].mxu0
  %v2328 = vadd.f32 %v1839, %v2327
  %2329 = vmatprep.mubr.bf16.mxu0 %v2272
  %2330 = vmatmul.mubr.bf16.gmra.mrb[0].mxu0 %v1514
  %v2331 = vpop.f32.mrb[0].mxu0
  %v2332 = vadd.f32 %v1843, %v2331
  %v2333 = vpop.f32.mrb[0].mxu0
  %v2334 = vadd.f32 %v1845, %v2333
  %v2335 = vpop.f32.mrb[0].mxu0
  %v2336 = vadd.f32 %v1847, %v2335
  %v2337 = vpop.f32.mrb[0].mxu0
  %v2338 = vadd.f32 %v1849, %v2337
  %2339 = vmatprep.mubr.bf16.mxu0 %v2275
  %2340 = vmatmul.mubr.bf16.gmra.mrb[0].mxu0 %v1516
  %v2341 = vpop.f32.mrb[0].mxu0
  %v2342 = vadd.f32 %v1853, %v2341
  %v2343 = vpop.f32.mrb[0].mxu0
  %v2344 = vadd.f32 %v1855, %v2343
  %v2345 = vpop.f32.mrb[0].mxu0
  %v2346 = vadd.f32 %v1857, %v2345
  %v2347 = vpop.f32.mrb[0].mxu0
  %v2348 = vadd.f32 %v1859, %v2347
  %2349 = vdwg.mxu0
  %v2380 = vunpack.c.l.b16 %v1565
  %v2381 = vunpack.c.h.b16 %v1565
  %v2382 = vunpack.c.l.b16 %v1566
  %v2383 = vunpack.c.h.b16 %v1566
  %v2384 = vunpack.c.l.b16 %v1567
  %v2385 = vunpack.c.h.b16 %v1567
  %v2386 = vunpack.c.l.b16 %v1568
  %v2387 = vunpack.c.h.b16 %v1568
  %v2388 = vunpack.c.l.b16 %v1569
  %v2389 = vunpack.c.h.b16 %v1569
  %v2390 = vunpack.c.l.b16 %v1570
  %v2391 = vunpack.c.h.b16 %v1570
  %v2392 = vunpack.c.l.b16 %v1571
  %v2393 = vunpack.c.h.b16 %v1571
  %v2394 = vunpack.c.l.b16 %v1572
  %v2395 = vunpack.c.h.b16 %v1572
  %v2396 = vunpack.c.l.b16 %v1573
  %v2397 = vunpack.c.h.b16 %v1573
  %v2398 = vunpack.c.l.b16 %v1574
  %v2399 = vunpack.c.h.b16 %v1574
  %v2400 = vunpack.c.l.b16 %v1575
  %v2401 = vunpack.c.h.b16 %v1575
  %v2402 = vunpack.c.l.b16 %v1576
  %v2403 = vunpack.c.h.b16 %v1576
  %v2404 = vunpack.c.l.b16 %v1577
  %v2405 = vunpack.c.h.b16 %v1577
  %v2406 = vunpack.c.l.b16 %v1578
  %v2407 = vunpack.c.h.b16 %v1578
  %v2408 = vunpack.c.l.b16 %v1579
  %v2409 = vunpack.c.h.b16 %v1579
  %v2410 = vunpack.c.l.b16 %v1580
  %v2411 = vunpack.c.h.b16 %v1580
  %v2412 = vunpack.c.l.b16 %v1581
  %v2413 = vunpack.c.h.b16 %v1581
  %v2414 = vunpack.c.l.b16 %v1582
  %v2415 = vunpack.c.h.b16 %v1582
  %v2416 = vunpack.c.l.b16 %v1583
  %v2417 = vunpack.c.h.b16 %v1583
  %v2418 = vunpack.c.l.b16 %v1584
  %v2419 = vunpack.c.h.b16 %v1584
  %v2420 = vunpack.c.l.b16 %v1585
  %v2421 = vunpack.c.h.b16 %v1585
  %v2422 = vunpack.c.l.b16 %v1586
  %v2423 = vunpack.c.h.b16 %v1586
  %v2424 = vunpack.c.l.b16 %v1587
  %v2425 = vunpack.c.h.b16 %v1587
  %v2426 = vunpack.c.l.b16 %v1588
  %v2427 = vunpack.c.h.b16 %v1588
  %v2428 = vunpack.c.l.b16 %v1589
  %v2429 = vunpack.c.h.b16 %v1589
  %v2430 = vunpack.c.l.b16 %v1590
  %v2431 = vunpack.c.h.b16 %v1590
  %v2432 = vunpack.c.l.b16 %v1591
  %v2433 = vunpack.c.h.b16 %v1591
  %v2434 = vunpack.c.l.b16 %v1592
  %v2435 = vunpack.c.h.b16 %v1592
  %v2436 = vunpack.c.l.b16 %v1593
  %v2437 = vunpack.c.h.b16 %v1593
  %v2438 = vunpack.c.l.b16 %v1594
  %v2439 = vunpack.c.h.b16 %v1594
  %v2440 = vpack.c.b16 %v2382, %v2380
  %v2441 = vpack.c.b16 %v2383, %v2381
  %v2442 = vpack.c.b16 %v2386, %v2384
  %v2443 = vpack.c.b16 %v2387, %v2385
  %v2444 = vpack.c.b16 %v2390, %v2388
  %v2445 = vpack.c.b16 %v2391, %v2389
  %v2446 = vpack.c.b16 %v2394, %v2392
  %v2447 = vpack.c.b16 %v2395, %v2393
  %v2448 = vpack.c.b16 %v2398, %v2396
  %v2449 = vpack.c.b16 %v2399, %v2397
  %v2450 = vpack.c.b16 %v2402, %v2400
  %v2451 = vpack.c.b16 %v2403, %v2401
  %v2452 = vpack.c.b16 %v2406, %v2404
  %v2453 = vpack.c.b16 %v2407, %v2405
  %v2454 = vpack.c.b16 %v2410, %v2408
  %v2455 = vpack.c.b16 %v2411, %v2409
  %v2456 = vpack.c.b16 %v2414, %v2412
  %v2457 = vpack.c.b16 %v2415, %v2413
  %v2458 = vpack.c.b16 %v2418, %v2416
  %v2459 = vpack.c.b16 %v2419, %v2417
  %v2460 = vpack.c.b16 %v2422, %v2420
  %v2461 = vpack.c.b16 %v2423, %v2421
  %v2462 = vpack.c.b16 %v2426, %v2424
  %v2463 = vpack.c.b16 %v2427, %v2425
  %v2464 = vpack.c.b16 %v2430, %v2428
  %v2465 = vpack.c.b16 %v2431, %v2429
  %v2466 = vpack.c.b16 %v2434, %v2432
  %v2467 = vpack.c.b16 %v2435, %v2433
  %v2468 = vpack.c.b16 %v2438, %v2436
  %v2469 = vpack.c.b16 %v2439, %v2437
  %2500 = vmatprep.subr.bf16.mxu0 %v2441
  %2501 = vmatpush1.bf16.msra.mxu0 %v2440
  %2502 = vmatprep.subr.bf16.mxu0 %v2443
  %2503 = vmatpush1.bf16.msra.mxu0 %v2442
  %2504 = vmatprep.subr.bf16.mxu0 %v2445
  %2505 = vmatpush1.bf16.msra.mxu0 %v2444
  %2506 = vmatprep.subr.bf16.mxu0 %v2447
  %2507 = vmatpush1.bf16.msra.mxu0 %v2446
  %2508 = vmatprep.subr.bf16.mxu0 %v2449
  %2509 = vmatpush1.bf16.msra.mxu0 %v2448
  %2510 = vmatprep.subr.bf16.mxu0 %v2451
  %2511 = vmatpush1.bf16.msra.mxu0 %v2450
  %2512 = vmatprep.subr.bf16.mxu0 %v2453
  %2513 = vmatpush1.bf16.msra.mxu0 %v2452
  %2514 = vmatprep.subr.bf16.mxu0 %v2455
  %2515 = vmatpush1.bf16.msra.mxu0 %v2454
  %2516 = vmatprep.subr.bf16.mxu0 %v2457
  %2517 = vmatpush1.bf16.msra.mxu0 %v2456
  %2518 = vmatprep.subr.bf16.mxu0 %v2459
  %2519 = vmatpush1.bf16.msra.mxu0 %v2458
  %2520 = vmatprep.subr.bf16.mxu0 %v2461
  %2521 = vmatpush1.bf16.msra.mxu0 %v2460
  %2522 = vmatprep.subr.bf16.mxu0 %v2463
  %2523 = vmatpush1.bf16.msra.mxu0 %v2462
  %2524 = vmatprep.subr.bf16.mxu0 %v2465
  %2525 = vmatpush1.bf16.msra.mxu0 %v2464
  %2526 = vmatprep.subr.bf16.mxu0 %v2467
  %2527 = vmatpush1.bf16.msra.mxu0 %v2466
  %2528 = vmatprep.subr.bf16.mxu0 %v2469
  %2529 = vmatpush1.bf16.msra.mxu0 %v2468
  %2530 = vmatprep.subr.bf16.mxu0 0
  %2531 = vmatpush1.bf16.msra.mxu0 0
  %2532 = vmatprep.mubr.bf16.mxu0 %v2266
  %2533 = vmatmul.mubr.bf16.gmra.mrb[0].mxu0 %v1510
  %v2534 = vpop.f32.mrb[0].mxu0
  %v2535 = vadd.f32 %v2077, %v2534
  %v2536 = vpop.f32.mrb[0].mxu0
  %v2537 = vadd.f32 %v2079, %v2536
  %v2538 = vpop.f32.mrb[0].mxu0
  %v2539 = vadd.f32 %v2081, %v2538
  %v2540 = vpop.f32.mrb[0].mxu0
  %v2541 = vadd.f32 %v2083, %v2540
  %2542 = vmatprep.mubr.bf16.mxu0 %v2269
  %2543 = vmatmul.mubr.bf16.gmra.mrb[0].mxu0 %v1512
  %v2544 = vpop.f32.mrb[0].mxu0
  %v2545 = vadd.f32 %v2087, %v2544
  %v2546 = vpop.f32.mrb[0].mxu0
  %v2547 = vadd.f32 %v2089, %v2546
  %v2548 = vpop.f32.mrb[0].mxu0
  %v2549 = vadd.f32 %v2091, %v2548
  %v2550 = vpop.f32.mrb[0].mxu0
  %v2551 = vadd.f32 %v2093, %v2550
  %2552 = vmatprep.mubr.bf16.mxu0 %v2272
  %2553 = vmatmul.mubr.bf16.gmra.mrb[0].mxu0 %v1514
  %v2554 = vpop.f32.mrb[0].mxu0
  %v2555 = vadd.f32 %v2097, %v2554
  %v2556 = vpop.f32.mrb[0].mxu0
  %v2557 = vadd.f32 %v2099, %v2556
  %v2558 = vpop.f32.mrb[0].mxu0
  %v2559 = vadd.f32 %v2101, %v2558
  %v2560 = vpop.f32.mrb[0].mxu0
  %v2561 = vadd.f32 %v2103, %v2560
  %2562 = vmatprep.mubr.bf16.mxu0 %v2275
  %2563 = vmatmul.mubr.bf16.gmra.mrb[0].mxu0 %v1516
  %v2564 = vpop.f32.mrb[0].mxu0
  %v2565 = vadd.f32 %v2107, %v2564
  %v2566 = vpop.f32.mrb[0].mxu0
  %v2567 = vadd.f32 %v2109, %v2566
  %v2568 = vpop.f32.mrb[0].mxu0
  %v2569 = vadd.f32 %v2111, %v2568
  %v2570 = vpop.f32.mrb[0].mxu0
  %v2571 = vadd.f32 %v2113, %v2570
  %2572 = vdwg.mxu0
  %s2573 = scalar_lea.vmem %s3, 960
  %v2574 = vld [vmem:[%s2573] sm:$0xff]
  %v2575 = vld [vmem:[%s2573 + $0x8] sm:$0xff]
  %v2576 = vld [vmem:[%s2573 + $0x10] sm:$0xff]
  %v2577 = vld [vmem:[%s2573 + $0x18] sm:$0xff]
  %v2578 = vld [vmem:[%s2573 + $0x20] sm:$0xff]
  %v2579 = vld [vmem:[%s2573 + $0x28] sm:$0xff]
  %v2580 = vld [vmem:[%s2573 + $0x30] sm:$0xff]
  %v2581 = vld [vmem:[%s2573 + $0x38] sm:$0xff]
  %v2582 = vld [vmem:[%s2573 + $0x40] sm:$0xff]
  %v2583 = vld [vmem:[%s2573 + $0x48] sm:$0xff]
  %v2584 = vld [vmem:[%s2573 + $0x50] sm:$0xff]
  %v2585 = vld [vmem:[%s2573 + $0x58] sm:$0xff]
  %v2586 = vld [vmem:[%s2573 + $0x60] sm:$0xff]
  %v2587 = vld [vmem:[%s2573 + $0x68] sm:$0xff]
  %v2588 = vld [vmem:[%s2573 + $0x70] sm:$0xff]
  %v2589 = vld [vmem:[%s2573 + $0x78] sm:$0xff]
  %v2590 = vld [vmem:[%s2573 + $0x80] sm:$0xff]
  %v2591 = vld [vmem:[%s2573 + $0x88] sm:$0xff]
  %v2592 = vld [vmem:[%s2573 + $0x90] sm:$0xff]
  %v2593 = vld [vmem:[%s2573 + $0x98] sm:$0xff]
  %v2594 = vld [vmem:[%s2573 + $0xa0] sm:$0xff]
  %v2595 = vld [vmem:[%s2573 + $0xa8] sm:$0xff]
  %v2596 = vld [vmem:[%s2573 + $0xb0] sm:$0xff]
  %v2597 = vld [vmem:[%s2573 + $0xb8] sm:$0xff]
  %v2598 = vld [vmem:[%s2573 + $0xc0] sm:$0xff]
  %v2599 = vld [vmem:[%s2573 + $0xc8] sm:$0xff]
  %v2600 = vld [vmem:[%s2573 + $0xd0] sm:$0xff]
  %v2601 = vld [vmem:[%s2573 + $0xd8] sm:$0xff]
  %v2602 = vld [vmem:[%s2573 + $0xe0] sm:$0xff]
  %v2603 = vld [vmem:[%s2573 + $0xe8] sm:$0xff]
  %v2634 = vunpack.c.l.b16 %v2574
  %v2635 = vunpack.c.h.b16 %v2574
  %v2636 = vunpack.c.l.b16 %v2575
  %v2637 = vunpack.c.h.b16 %v2575
  %v2638 = vunpack.c.l.b16 %v2576
  %v2639 = vunpack.c.h.b16 %v2576
  %v2640 = vunpack.c.l.b16 %v2577
  %v2641 = vunpack.c.h.b16 %v2577
  %v2642 = vunpack.c.l.b16 %v2578
  %v2643 = vunpack.c.h.b16 %v2578
  %v2644 = vunpack.c.l.b16 %v2579
  %v2645 = vunpack.c.h.b16 %v2579
  %v2646 = vunpack.c.l.b16 %v2580
  %v2647 = vunpack.c.h.b16 %v2580
  %v2648 = vunpack.c.l.b16 %v2581
  %v2649 = vunpack.c.h.b16 %v2581
  %v2650 = vunpack.c.l.b16 %v2582
  %v2651 = vunpack.c.h.b16 %v2582
  %v2652 = vunpack.c.l.b16 %v2583
  %v2653 = vunpack.c.h.b16 %v2583
  %v2654 = vunpack.c.l.b16 %v2584
  %v2655 = vunpack.c.h.b16 %v2584
  %v2656 = vunpack.c.l.b16 %v2585
  %v2657 = vunpack.c.h.b16 %v2585
  %v2658 = vunpack.c.l.b16 %v2586
  %v2659 = vunpack.c.h.b16 %v2586
  %v2660 = vunpack.c.l.b16 %v2587
  %v2661 = vunpack.c.h.b16 %v2587
  %v2662 = vunpack.c.l.b16 %v2588
  %v2663 = vunpack.c.h.b16 %v2588
  %v2664 = vunpack.c.l.b16 %v2589
  %v2665 = vunpack.c.h.b16 %v2589
  %v2666 = vunpack.c.l.b16 %v2590
  %v2667 = vunpack.c.h.b16 %v2590
  %v2668 = vunpack.c.l.b16 %v2591
  %v2669 = vunpack.c.h.b16 %v2591
  %v2670 = vunpack.c.l.b16 %v2592
  %v2671 = vunpack.c.h.b16 %v2592
  %v2672 = vunpack.c.l.b16 %v2593
  %v2673 = vunpack.c.h.b16 %v2593
  %v2674 = vunpack.c.l.b16 %v2594
  %v2675 = vunpack.c.h.b16 %v2594
  %v2676 = vunpack.c.l.b16 %v2595
  %v2677 = vunpack.c.h.b16 %v2595
  %v2678 = vunpack.c.l.b16 %v2596
  %v2679 = vunpack.c.h.b16 %v2596
  %v2680 = vunpack.c.l.b16 %v2597
  %v2681 = vunpack.c.h.b16 %v2597
  %v2682 = vunpack.c.l.b16 %v2598
  %v2683 = vunpack.c.h.b16 %v2598
  %v2684 = vunpack.c.l.b16 %v2599
  %v2685 = vunpack.c.h.b16 %v2599
  %v2686 = vunpack.c.l.b16 %v2600
  %v2687 = vunpack.c.h.b16 %v2600
  %v2688 = vunpack.c.l.b16 %v2601
  %v2689 = vunpack.c.h.b16 %v2601
  %v2690 = vunpack.c.l.b16 %v2602
  %v2691 = vunpack.c.h.b16 %v2602
  %v2692 = vunpack.c.l.b16 %v2603
  %v2693 = vunpack.c.h.b16 %v2603
  %v2694 = vpack.c.b16 %v2636, %v2634
  %v2695 = vpack.c.b16 %v2637, %v2635
  %v2696 = vpack.c.b16 %v2640, %v2638
  %v2697 = vpack.c.b16 %v2641, %v2639
  %v2698 = vpack.c.b16 %v2644, %v2642
  %v2699 = vpack.c.b16 %v2645, %v2643
  %v2700 = vpack.c.b16 %v2648, %v2646
  %v2701 = vpack.c.b16 %v2649, %v2647
  %v2702 = vpack.c.b16 %v2652, %v2650
  %v2703 = vpack.c.b16 %v2653, %v2651
  %v2704 = vpack.c.b16 %v2656, %v2654
  %v2705 = vpack.c.b16 %v2657, %v2655
  %v2706 = vpack.c.b16 %v2660, %v2658
  %v2707 = vpack.c.b16 %v2661, %v2659
  %v2708 = vpack.c.b16 %v2664, %v2662
  %v2709 = vpack.c.b16 %v2665, %v2663
  %v2710 = vpack.c.b16 %v2668, %v2666
  %v2711 = vpack.c.b16 %v2669, %v2667
  %v2712 = vpack.c.b16 %v2672, %v2670
  %v2713 = vpack.c.b16 %v2673, %v2671
  %v2714 = vpack.c.b16 %v2676, %v2674
  %v2715 = vpack.c.b16 %v2677, %v2675
  %v2716 = vpack.c.b16 %v2680, %v2678
  %v2717 = vpack.c.b16 %v2681, %v2679
  %v2718 = vpack.c.b16 %v2684, %v2682
  %v2719 = vpack.c.b16 %v2685, %v2683
  %v2720 = vpack.c.b16 %v2688, %v2686
  %v2721 = vpack.c.b16 %v2689, %v2687
  %v2722 = vpack.c.b16 %v2692, %v2690
  %v2723 = vpack.c.b16 %v2693, %v2691
  %v2755 = vsel %vm1486, %v1527, 0
  %2757 = vmatprep.subr.bf16.mxu0 %v2695
  %2758 = vmatpush1.bf16.msra.mxu0 %v2694
  %2759 = vmatprep.subr.bf16.mxu0 %v2697
  %2760 = vmatpush1.bf16.msra.mxu0 %v2696
  %2761 = vmatprep.subr.bf16.mxu0 %v2699
  %2762 = vmatpush1.bf16.msra.mxu0 %v2698
  %2763 = vmatprep.subr.bf16.mxu0 %v2701
  %2764 = vmatpush1.bf16.msra.mxu0 %v2700
  %2765 = vmatprep.subr.bf16.mxu0 %v2703
  %2766 = vmatpush1.bf16.msra.mxu0 %v2702
  %2767 = vmatprep.subr.bf16.mxu0 %v2705
  %2768 = vmatpush1.bf16.msra.mxu0 %v2704
  %2769 = vmatprep.subr.bf16.mxu0 %v2707
  %2770 = vmatpush1.bf16.msra.mxu0 %v2706
  %2771 = vmatprep.subr.bf16.mxu0 %v2709
  %2772 = vmatpush1.bf16.msra.mxu0 %v2708
  %2773 = vmatprep.subr.bf16.mxu0 %v2711
  %2774 = vmatpush1.bf16.msra.mxu0 %v2710
  %2775 = vmatprep.subr.bf16.mxu0 %v2713
  %2776 = vmatpush1.bf16.msra.mxu0 %v2712
  %2777 = vmatprep.subr.bf16.mxu0 %v2715
  %2778 = vmatpush1.bf16.msra.mxu0 %v2714
  %2779 = vmatprep.subr.bf16.mxu0 %v2717
  %2780 = vmatpush1.bf16.msra.mxu0 %v2716
  %2781 = vmatprep.subr.bf16.mxu0 %v2719
  %2782 = vmatpush1.bf16.msra.mxu0 %v2718
  %2783 = vmatprep.subr.bf16.mxu0 %v2721
  %2784 = vmatpush1.bf16.msra.mxu0 %v2720
  %2785 = vmatprep.subr.bf16.mxu0 %v2723
  %2786 = vmatpush1.bf16.msra.mxu0 %v2722
  %2787 = vmatprep.subr.bf16.mxu0 0
  %2788 = vmatpush1.bf16.msra.mxu0 0
  %2789 = vmatprep.mubr.bf16.mxu0 %v2269
  %2790 = vmatmul.mubr.bf16.gmra.mrb[0].mxu0 %v1512
  %v2791 = vpop.f32.mrb[0].mxu0
  %v2792 = vadd.f32 0.0, %v2791
  %v2793 = vpop.f32.mrb[0].mxu0
  %v2794 = vadd.f32 0.0, %v2793
  %v2795 = vpop.f32.mrb[0].mxu0
  %v2796 = vadd.f32 0.0, %v2795
  %v2797 = vpop.f32.mrb[0].mxu0
  %v2798 = vadd.f32 0.0, %v2797
  %2799 = vmatprep.mubr.bf16.mxu0 %v2272
  %2800 = vmatmul.mubr.bf16.gmra.mrb[0].mxu0 %v1514
  %v2801 = vpop.f32.mrb[0].mxu0
  %v2802 = vadd.f32 0.0, %v2801
  %v2803 = vpop.f32.mrb[0].mxu0
  %v2804 = vadd.f32 0.0, %v2803
  %v2805 = vpop.f32.mrb[0].mxu0
  %v2806 = vadd.f32 0.0, %v2805
  %v2807 = vpop.f32.mrb[0].mxu0
  %v2808 = vadd.f32 0.0, %v2807
  %2809 = vmatprep.mubr.bf16.mxu0 %v2275
  %2810 = vmatmul.mubr.bf16.gmra.mrb[0].mxu0 %v1516
  %v2811 = vpop.f32.mrb[0].mxu0
  %v2812 = vadd.f32 0.0, %v2811
  %v2813 = vpop.f32.mrb[0].mxu0
  %v2814 = vadd.f32 0.0, %v2813
  %v2815 = vpop.f32.mrb[0].mxu0
  %v2816 = vadd.f32 0.0, %v2815
  %v2817 = vpop.f32.mrb[0].mxu0
  %v2818 = vadd.f32 0.0, %v2817
  %2819 = vmatprep.mubr.bf16.mxu0 %v2755
  %2820 = vmatmul.mubr.bf16.gmra.mrb[0].mxu0 %v1526
  %v2821 = vpop.f32.mrb[0].mxu0
  %v2822 = vadd.f32 0.0, %v2821
  %v2823 = vpop.f32.mrb[0].mxu0
  %v2824 = vadd.f32 0.0, %v2823
  %v2825 = vpop.f32.mrb[0].mxu0
  %v2826 = vadd.f32 0.0, %v2825
  %v2827 = vpop.f32.mrb[0].mxu0
  %v2828 = vadd.f32 0.0, %v2827
  %2829 = vdwg.mxu0
  %s2830 = scalar_lea.vmem %s3, 1200
  %v2831 = vld [vmem:[%s2830] sm:$0xff]
  %v2832 = vld [vmem:[%s2830 + $0x8] sm:$0xff]
  %v2833 = vld [vmem:[%s2830 + $0x10] sm:$0xff]
  %v2834 = vld [vmem:[%s2830 + $0x18] sm:$0xff]
  %v2835 = vld [vmem:[%s2830 + $0x20] sm:$0xff]
  %v2836 = vld [vmem:[%s2830 + $0x28] sm:$0xff]
  %v2837 = vld [vmem:[%s2830 + $0x30] sm:$0xff]
  %v2838 = vld [vmem:[%s2830 + $0x38] sm:$0xff]
  %v2839 = vld [vmem:[%s2830 + $0x40] sm:$0xff]
  %v2840 = vld [vmem:[%s2830 + $0x48] sm:$0xff]
  %v2841 = vld [vmem:[%s2830 + $0x50] sm:$0xff]
  %v2842 = vld [vmem:[%s2830 + $0x58] sm:$0xff]
  %v2843 = vld [vmem:[%s2830 + $0x60] sm:$0xff]
  %v2844 = vld [vmem:[%s2830 + $0x68] sm:$0xff]
  %v2845 = vld [vmem:[%s2830 + $0x70] sm:$0xff]
  %v2846 = vld [vmem:[%s2830 + $0x78] sm:$0xff]
  %v2847 = vld [vmem:[%s2830 + $0x80] sm:$0xff]
  %v2848 = vld [vmem:[%s2830 + $0x88] sm:$0xff]
  %v2849 = vld [vmem:[%s2830 + $0x90] sm:$0xff]
  %v2850 = vld [vmem:[%s2830 + $0x98] sm:$0xff]
  %v2851 = vld [vmem:[%s2830 + $0xa0] sm:$0xff]
  %v2852 = vld [vmem:[%s2830 + $0xa8] sm:$0xff]
  %v2853 = vld [vmem:[%s2830 + $0xb0] sm:$0xff]
  %v2854 = vld [vmem:[%s2830 + $0xb8] sm:$0xff]
  %v2855 = vld [vmem:[%s2830 + $0xc0] sm:$0xff]
  %v2856 = vld [vmem:[%s2830 + $0xc8] sm:$0xff]
  %v2857 = vld [vmem:[%s2830 + $0xd0] sm:$0xff]
  %v2858 = vld [vmem:[%s2830 + $0xd8] sm:$0xff]
  %v2859 = vld [vmem:[%s2830 + $0xe0] sm:$0xff]
  %v2860 = vld [vmem:[%s2830 + $0xe8] sm:$0xff]
  %v2891 = vunpack.c.l.b16 %v2831
  %v2892 = vunpack.c.h.b16 %v2831
  %v2893 = vunpack.c.l.b16 %v2832
  %v2894 = vunpack.c.h.b16 %v2832
  %v2895 = vunpack.c.l.b16 %v2833
  %v2896 = vunpack.c.h.b16 %v2833
  %v2897 = vunpack.c.l.b16 %v2834
  %v2898 = vunpack.c.h.b16 %v2834
  %v2899 = vunpack.c.l.b16 %v2835
  %v2900 = vunpack.c.h.b16 %v2835
  %v2901 = vunpack.c.l.b16 %v2836
  %v2902 = vunpack.c.h.b16 %v2836
  %v2903 = vunpack.c.l.b16 %v2837
  %v2904 = vunpack.c.h.b16 %v2837
  %v2905 = vunpack.c.l.b16 %v2838
  %v2906 = vunpack.c.h.b16 %v2838
  %v2907 = vunpack.c.l.b16 %v2839
  %v2908 = vunpack.c.h.b16 %v2839
  %v2909 = vunpack.c.l.b16 %v2840
  %v2910 = vunpack.c.h.b16 %v2840
  %v2911 = vunpack.c.l.b16 %v2841
  %v2912 = vunpack.c.h.b16 %v2841
  %v2913 = vunpack.c.l.b16 %v2842
  %v2914 = vunpack.c.h.b16 %v2842
  %v2915 = vunpack.c.l.b16 %v2843
  %v2916 = vunpack.c.h.b16 %v2843
  %v2917 = vunpack.c.l.b16 %v2844
  %v2918 = vunpack.c.h.b16 %v2844
  %v2919 = vunpack.c.l.b16 %v2845
  %v2920 = vunpack.c.h.b16 %v2845
  %v2921 = vunpack.c.l.b16 %v2846
  %v2922 = vunpack.c.h.b16 %v2846
  %v2923 = vunpack.c.l.b16 %v2847
  %v2924 = vunpack.c.h.b16 %v2847
  %v2925 = vunpack.c.l.b16 %v2848
  %v2926 = vunpack.c.h.b16 %v2848
  %v2927 = vunpack.c.l.b16 %v2849
  %v2928 = vunpack.c.h.b16 %v2849
  %v2929 = vunpack.c.l.b16 %v2850
  %v2930 = vunpack.c.h.b16 %v2850
  %v2931 = vunpack.c.l.b16 %v2851
  %v2932 = vunpack.c.h.b16 %v2851
  %v2933 = vunpack.c.l.b16 %v2852
  %v2934 = vunpack.c.h.b16 %v2852
  %v2935 = vunpack.c.l.b16 %v2853
  %v2936 = vunpack.c.h.b16 %v2853
  %v2937 = vunpack.c.l.b16 %v2854
  %v2938 = vunpack.c.h.b16 %v2854
  %v2939 = vunpack.c.l.b16 %v2855
  %v2940 = vunpack.c.h.b16 %v2855
  %v2941 = vunpack.c.l.b16 %v2856
  %v2942 = vunpack.c.h.b16 %v2856
  %v2943 = vunpack.c.l.b16 %v2857
  %v2944 = vunpack.c.h.b16 %v2857
  %v2945 = vunpack.c.l.b16 %v2858
  %v2946 = vunpack.c.h.b16 %v2858
  %v2947 = vunpack.c.l.b16 %v2859
  %v2948 = vunpack.c.h.b16 %v2859
  %v2949 = vunpack.c.l.b16 %v2860
  %v2950 = vunpack.c.h.b16 %v2860
  %v2951 = vpack.c.b16 %v2893, %v2891
  %v2952 = vpack.c.b16 %v2894, %v2892
  %v2953 = vpack.c.b16 %v2897, %v2895
  %v2954 = vpack.c.b16 %v2898, %v2896
  %v2955 = vpack.c.b16 %v2901, %v2899
  %v2956 = vpack.c.b16 %v2902, %v2900
  %v2957 = vpack.c.b16 %v2905, %v2903
  %v2958 = vpack.c.b16 %v2906, %v2904
  %v2959 = vpack.c.b16 %v2909, %v2907
  %v2960 = vpack.c.b16 %v2910, %v2908
  %v2961 = vpack.c.b16 %v2913, %v2911
  %v2962 = vpack.c.b16 %v2914, %v2912
  %v2963 = vpack.c.b16 %v2917, %v2915
  %v2964 = vpack.c.b16 %v2918, %v2916
  %v2965 = vpack.c.b16 %v2921, %v2919
  %v2966 = vpack.c.b16 %v2922, %v2920
  %v2967 = vpack.c.b16 %v2925, %v2923
  %v2968 = vpack.c.b16 %v2926, %v2924
  %v2969 = vpack.c.b16 %v2929, %v2927
  %v2970 = vpack.c.b16 %v2930, %v2928
  %v2971 = vpack.c.b16 %v2933, %v2931
  %v2972 = vpack.c.b16 %v2934, %v2932
  %v2973 = vpack.c.b16 %v2937, %v2935
  %v2974 = vpack.c.b16 %v2938, %v2936
  %v2975 = vpack.c.b16 %v2941, %v2939
  %v2976 = vpack.c.b16 %v2942, %v2940
  %v2977 = vpack.c.b16 %v2945, %v2943
  %v2978 = vpack.c.b16 %v2946, %v2944
  %v2979 = vpack.c.b16 %v2949, %v2947
  %v2980 = vpack.c.b16 %v2950, %v2948
  %3011 = vmatprep.subr.bf16.mxu0 %v2952
  %3012 = vmatpush1.bf16.msra.mxu0 %v2951
  %3013 = vmatprep.subr.bf16.mxu0 %v2954
  %3014 = vmatpush1.bf16.msra.mxu0 %v2953
  %3015 = vmatprep.subr.bf16.mxu0 %v2956
  %3016 = vmatpush1.bf16.msra.mxu0 %v2955
  %3017 = vmatprep.subr.bf16.mxu0 %v2958
  %3018 = vmatpush1.bf16.msra.mxu0 %v2957
  %3019 = vmatprep.subr.bf16.mxu0 %v2960
  %3020 = vmatpush1.bf16.msra.mxu0 %v2959
  %3021 = vmatprep.subr.bf16.mxu0 %v2962
  %3022 = vmatpush1.bf16.msra.mxu0 %v2961
  %3023 = vmatprep.subr.bf16.mxu0 %v2964
  %3024 = vmatpush1.bf16.msra.mxu0 %v2963
  %3025 = vmatprep.subr.bf16.mxu0 %v2966
  %3026 = vmatpush1.bf16.msra.mxu0 %v2965
  %3027 = vmatprep.subr.bf16.mxu0 %v2968
  %3028 = vmatpush1.bf16.msra.mxu0 %v2967
  %3029 = vmatprep.subr.bf16.mxu0 %v2970
  %3030 = vmatpush1.bf16.msra.mxu0 %v2969
  %3031 = vmatprep.subr.bf16.mxu0 %v2972
  %3032 = vmatpush1.bf16.msra.mxu0 %v2971
  %3033 = vmatprep.subr.bf16.mxu0 %v2974
  %3034 = vmatpush1.bf16.msra.mxu0 %v2973
  %3035 = vmatprep.subr.bf16.mxu0 %v2976
  %3036 = vmatpush1.bf16.msra.mxu0 %v2975
  %3037 = vmatprep.subr.bf16.mxu0 %v2978
  %3038 = vmatpush1.bf16.msra.mxu0 %v2977
  %3039 = vmatprep.subr.bf16.mxu0 %v2980
  %3040 = vmatpush1.bf16.msra.mxu0 %v2979
  %3041 = vmatprep.subr.bf16.mxu0 0
  %3042 = vmatpush1.bf16.msra.mxu0 0
  %3043 = vmatprep.mubr.bf16.mxu0 %v2269
  %3044 = vmatmul.mubr.bf16.gmra.mrb[0].mxu0 %v1512
  %v3045 = vpop.f32.mrb[0].mxu0
  %v3046 = vadd.f32 0.0, %v3045
  %v3047 = vpop.f32.mrb[0].mxu0
  %v3048 = vadd.f32 0.0, %v3047
  %v3049 = vpop.f32.mrb[0].mxu0
  %v3050 = vadd.f32 0.0, %v3049
  %v3051 = vpop.f32.mrb[0].mxu0
  %v3052 = vadd.f32 0.0, %v3051
  %3053 = vmatprep.mubr.bf16.mxu0 %v2272
  %3054 = vmatmul.mubr.bf16.gmra.mrb[0].mxu0 %v1514
  %v3055 = vpop.f32.mrb[0].mxu0
  %v3056 = vadd.f32 0.0, %v3055
  %v3057 = vpop.f32.mrb[0].mxu0
  %v3058 = vadd.f32 0.0, %v3057
  %v3059 = vpop.f32.mrb[0].mxu0
  %v3060 = vadd.f32 0.0, %v3059
  %v3061 = vpop.f32.mrb[0].mxu0
  %v3062 = vadd.f32 0.0, %v3061
  %3063 = vmatprep.mubr.bf16.mxu0 %v2275
  %3064 = vmatmul.mubr.bf16.gmra.mrb[0].mxu0 %v1516
  %v3065 = vpop.f32.mrb[0].mxu0
  %v3066 = vadd.f32 0.0, %v3065
  %v3067 = vpop.f32.mrb[0].mxu0
  %v3068 = vadd.f32 0.0, %v3067
  %v3069 = vpop.f32.mrb[0].mxu0
  %v3070 = vadd.f32 0.0, %v3069
  %v3071 = vpop.f32.mrb[0].mxu0
  %v3072 = vadd.f32 0.0, %v3071
  %3073 = vmatprep.mubr.bf16.mxu0 %v2755
  %3074 = vmatmul.mubr.bf16.gmra.mrb[0].mxu0 %v1526
  %v3075 = vpop.f32.mrb[0].mxu0
  %v3076 = vadd.f32 0.0, %v3075
  %v3077 = vpop.f32.mrb[0].mxu0
  %v3078 = vadd.f32 0.0, %v3077
  %v3079 = vpop.f32.mrb[0].mxu0
  %v3080 = vadd.f32 0.0, %v3079
  %v3081 = vpop.f32.mrb[0].mxu0
  %v3082 = vadd.f32 0.0, %v3081
  %3083 = vdwg.mxu0
  %v3084 = vadd.f32 %v2312, %v2792
  %v3085 = vadd.f32 %v2314, %v2794
  %v3086 = vadd.f32 %v2316, %v2796
  %v3087 = vadd.f32 %v2318, %v2798
  %v3088 = vadd.f32 %v2322, %v2802
  %v3089 = vadd.f32 %v2324, %v2804
  %v3090 = vadd.f32 %v2326, %v2806
  %v3091 = vadd.f32 %v2328, %v2808
  %v3092 = vadd.f32 %v2332, %v2812
  %v3093 = vadd.f32 %v2334, %v2814
  %v3094 = vadd.f32 %v2336, %v2816
  %v3095 = vadd.f32 %v2338, %v2818
  %v3096 = vadd.f32 %v2342, %v2822
  %v3097 = vadd.f32 %v2344, %v2824
  %v3098 = vadd.f32 %v2346, %v2826
  %v3099 = vadd.f32 %v2348, %v2828
  %v3100 = vadd.f32 %v2535, %v3046
  %v3101 = vadd.f32 %v2537, %v3048
  %v3102 = vadd.f32 %v2539, %v3050
  %v3103 = vadd.f32 %v2541, %v3052
  %v3104 = vadd.f32 %v2545, %v3056
  %v3105 = vadd.f32 %v2547, %v3058
  %v3106 = vadd.f32 %v2549, %v3060
  %v3107 = vadd.f32 %v2551, %v3062
  %v3108 = vadd.f32 %v2555, %v3066
  %v3109 = vadd.f32 %v2557, %v3068
  %v3110 = vadd.f32 %v2559, %v3070
  %v3111 = vadd.f32 %v2561, %v3072
  %v3112 = vadd.f32 %v2565, %v3076
  %v3113 = vadd.f32 %v2567, %v3078
  %v3114 = vadd.f32 %v2569, %v3080
  %v3115 = vadd.f32 %v2571, %v3082
  %s3116 = scalar_lea.vmem %s3, 1440
  %v3117 = vld [vmem:[%s3116] sm:$0xff]
  %v3118 = vld [vmem:[%s3116 + $0x8] sm:$0xff]
  %v3119 = vld [vmem:[%s3116 + $0x10] sm:$0xff]
  %v3120 = vld [vmem:[%s3116 + $0x18] sm:$0xff]
  %v3121 = vld [vmem:[%s3116 + $0x20] sm:$0xff]
  %v3122 = vld [vmem:[%s3116 + $0x28] sm:$0xff]
  %v3123 = vld [vmem:[%s3116 + $0x30] sm:$0xff]
  %v3124 = vld [vmem:[%s3116 + $0x38] sm:$0xff]
  %v3125 = vld [vmem:[%s3116 + $0x40] sm:$0xff]
  %v3126 = vld [vmem:[%s3116 + $0x48] sm:$0xff]
  %v3127 = vld [vmem:[%s3116 + $0x50] sm:$0xff]
  %v3128 = vld [vmem:[%s3116 + $0x58] sm:$0xff]
  %v3129 = vld [vmem:[%s3116 + $0x60] sm:$0xff]
  %v3130 = vld [vmem:[%s3116 + $0x68] sm:$0xff]
  %v3131 = vld [vmem:[%s3116 + $0x70] sm:$0xff]
  %v3132 = vld [vmem:[%s3116 + $0x78] sm:$0xff]
  %v3133 = vld [vmem:[%s3116 + $0x80] sm:$0xff]
  %v3134 = vld [vmem:[%s3116 + $0x88] sm:$0xff]
  %v3135 = vld [vmem:[%s3116 + $0x90] sm:$0xff]
  %v3136 = vld [vmem:[%s3116 + $0x98] sm:$0xff]
  %v3137 = vld [vmem:[%s3116 + $0xa0] sm:$0xff]
  %v3138 = vld [vmem:[%s3116 + $0xa8] sm:$0xff]
  %v3139 = vld [vmem:[%s3116 + $0xb0] sm:$0xff]
  %v3140 = vld [vmem:[%s3116 + $0xb8] sm:$0xff]
  %v3141 = vld [vmem:[%s3116 + $0xc0] sm:$0xff]
  %v3142 = vld [vmem:[%s3116 + $0xc8] sm:$0xff]
  %v3143 = vld [vmem:[%s3116 + $0xd0] sm:$0xff]
  %v3144 = vld [vmem:[%s3116 + $0xd8] sm:$0xff]
  %v3145 = vld [vmem:[%s3116 + $0xe0] sm:$0xff]
  %v3146 = vld [vmem:[%s3116 + $0xe8] sm:$0xff]
  %v3177 = vunpack.c.l.b16 %v3117
  %v3178 = vunpack.c.h.b16 %v3117
  %v3179 = vunpack.c.l.b16 %v3118
  %v3180 = vunpack.c.h.b16 %v3118
  %v3181 = vunpack.c.l.b16 %v3119
  %v3182 = vunpack.c.h.b16 %v3119
  %v3183 = vunpack.c.l.b16 %v3120
  %v3184 = vunpack.c.h.b16 %v3120
  %v3185 = vunpack.c.l.b16 %v3121
  %v3186 = vunpack.c.h.b16 %v3121
  %v3187 = vunpack.c.l.b16 %v3122
  %v3188 = vunpack.c.h.b16 %v3122
  %v3189 = vunpack.c.l.b16 %v3123
  %v3190 = vunpack.c.h.b16 %v3123
  %v3191 = vunpack.c.l.b16 %v3124
  %v3192 = vunpack.c.h.b16 %v3124
  %v3193 = vunpack.c.l.b16 %v3125
  %v3194 = vunpack.c.h.b16 %v3125
  %v3195 = vunpack.c.l.b16 %v3126
  %v3196 = vunpack.c.h.b16 %v3126
  %v3197 = vunpack.c.l.b16 %v3127
  %v3198 = vunpack.c.h.b16 %v3127
  %v3199 = vunpack.c.l.b16 %v3128
  %v3200 = vunpack.c.h.b16 %v3128
  %v3201 = vunpack.c.l.b16 %v3129
  %v3202 = vunpack.c.h.b16 %v3129
  %v3203 = vunpack.c.l.b16 %v3130
  %v3204 = vunpack.c.h.b16 %v3130
  %v3205 = vunpack.c.l.b16 %v3131
  %v3206 = vunpack.c.h.b16 %v3131
  %v3207 = vunpack.c.l.b16 %v3132
  %v3208 = vunpack.c.h.b16 %v3132
  %v3209 = vunpack.c.l.b16 %v3133
  %v3210 = vunpack.c.h.b16 %v3133
  %v3211 = vunpack.c.l.b16 %v3134
  %v3212 = vunpack.c.h.b16 %v3134
  %v3213 = vunpack.c.l.b16 %v3135
  %v3214 = vunpack.c.h.b16 %v3135
  %v3215 = vunpack.c.l.b16 %v3136
  %v3216 = vunpack.c.h.b16 %v3136
  %v3217 = vunpack.c.l.b16 %v3137
  %v3218 = vunpack.c.h.b16 %v3137
  %v3219 = vunpack.c.l.b16 %v3138
  %v3220 = vunpack.c.h.b16 %v3138
  %v3221 = vunpack.c.l.b16 %v3139
  %v3222 = vunpack.c.h.b16 %v3139
  %v3223 = vunpack.c.l.b16 %v3140
  %v3224 = vunpack.c.h.b16 %v3140
  %v3225 = vunpack.c.l.b16 %v3141
  %v3226 = vunpack.c.h.b16 %v3141
  %v3227 = vunpack.c.l.b16 %v3142
  %v3228 = vunpack.c.h.b16 %v3142
  %v3229 = vunpack.c.l.b16 %v3143
  %v3230 = vunpack.c.h.b16 %v3143
  %v3231 = vunpack.c.l.b16 %v3144
  %v3232 = vunpack.c.h.b16 %v3144
  %v3233 = vunpack.c.l.b16 %v3145
  %v3234 = vunpack.c.h.b16 %v3145
  %v3235 = vunpack.c.l.b16 %v3146
  %v3236 = vunpack.c.h.b16 %v3146
  %v3237 = vpack.c.b16 %v3179, %v3177
  %v3238 = vpack.c.b16 %v3180, %v3178
  %v3239 = vpack.c.b16 %v3183, %v3181
  %v3240 = vpack.c.b16 %v3184, %v3182
  %v3241 = vpack.c.b16 %v3187, %v3185
  %v3242 = vpack.c.b16 %v3188, %v3186
  %v3243 = vpack.c.b16 %v3191, %v3189
  %v3244 = vpack.c.b16 %v3192, %v3190
  %v3245 = vpack.c.b16 %v3195, %v3193
  %v3246 = vpack.c.b16 %v3196, %v3194
  %v3247 = vpack.c.b16 %v3199, %v3197
  %v3248 = vpack.c.b16 %v3200, %v3198
  %v3249 = vpack.c.b16 %v3203, %v3201
  %v3250 = vpack.c.b16 %v3204, %v3202
  %v3251 = vpack.c.b16 %v3207, %v3205
  %v3252 = vpack.c.b16 %v3208, %v3206
  %v3253 = vpack.c.b16 %v3211, %v3209
  %v3254 = vpack.c.b16 %v3212, %v3210
  %v3255 = vpack.c.b16 %v3215, %v3213
  %v3256 = vpack.c.b16 %v3216, %v3214
  %v3257 = vpack.c.b16 %v3219, %v3217
  %v3258 = vpack.c.b16 %v3220, %v3218
  %v3259 = vpack.c.b16 %v3223, %v3221
  %v3260 = vpack.c.b16 %v3224, %v3222
  %v3261 = vpack.c.b16 %v3227, %v3225
  %v3262 = vpack.c.b16 %v3228, %v3226
  %v3263 = vpack.c.b16 %v3231, %v3229
  %v3264 = vpack.c.b16 %v3232, %v3230
  %v3265 = vpack.c.b16 %v3235, %v3233
  %v3266 = vpack.c.b16 %v3236, %v3234
  %v3298 = vsel %vm1486, %v1529, 0
  %3300 = vmatprep.subr.bf16.mxu0 %v3238
  %3301 = vmatpush1.bf16.msra.mxu0 %v3237
  %3302 = vmatprep.subr.bf16.mxu0 %v3240
  %3303 = vmatpush1.bf16.msra.mxu0 %v3239
  %3304 = vmatprep.subr.bf16.mxu0 %v3242
  %3305 = vmatpush1.bf16.msra.mxu0 %v3241
  %3306 = vmatprep.subr.bf16.mxu0 %v3244
  %3307 = vmatpush1.bf16.msra.mxu0 %v3243
  %3308 = vmatprep.subr.bf16.mxu0 %v3246
  %3309 = vmatpush1.bf16.msra.mxu0 %v3245
  %3310 = vmatprep.subr.bf16.mxu0 %v3248
  %3311 = vmatpush1.bf16.msra.mxu0 %v3247
  %3312 = vmatprep.subr.bf16.mxu0 %v3250
  %3313 = vmatpush1.bf16.msra.mxu0 %v3249
  %3314 = vmatprep.subr.bf16.mxu0 %v3252
  %3315 = vmatpush1.bf16.msra.mxu0 %v3251
  %3316 = vmatprep.subr.bf16.mxu0 %v3254
  %3317 = vmatpush1.bf16.msra.mxu0 %v3253
  %3318 = vmatprep.subr.bf16.mxu0 %v3256
  %3319 = vmatpush1.bf16.msra.mxu0 %v3255
  %3320 = vmatprep.subr.bf16.mxu0 %v3258
  %3321 = vmatpush1.bf16.msra.mxu0 %v3257
  %3322 = vmatprep.subr.bf16.mxu0 %v3260
  %3323 = vmatpush1.bf16.msra.mxu0 %v3259
  %3324 = vmatprep.subr.bf16.mxu0 %v3262
  %3325 = vmatpush1.bf16.msra.mxu0 %v3261
  %3326 = vmatprep.subr.bf16.mxu0 %v3264
  %3327 = vmatpush1.bf16.msra.mxu0 %v3263
  %3328 = vmatprep.subr.bf16.mxu0 %v3266
  %3329 = vmatpush1.bf16.msra.mxu0 %v3265
  %3330 = vmatprep.subr.bf16.mxu0 0
  %3331 = vmatpush1.bf16.msra.mxu0 0
  %3332 = vmatprep.mubr.bf16.mxu0 %v1780
  %3333 = vmatmul.mubr.bf16.gmra.mrb[0].mxu0 %v1520
  %v3334 = vpop.f32.mrb[0].mxu0
  %v3335 = vadd.f32 0.0, %v3334
  %v3336 = vpop.f32.mrb[0].mxu0
  %v3337 = vadd.f32 0.0, %v3336
  %v3338 = vpop.f32.mrb[0].mxu0
  %v3339 = vadd.f32 0.0, %v3338
  %v3340 = vpop.f32.mrb[0].mxu0
  %v3341 = vadd.f32 0.0, %v3340
  %3342 = vmatprep.mubr.bf16.mxu0 %v1783
  %3343 = vmatmul.mubr.bf16.gmra.mrb[0].mxu0 %v1522
  %v3344 = vpop.f32.mrb[0].mxu0
  %v3345 = vadd.f32 0.0, %v3344
  %v3346 = vpop.f32.mrb[0].mxu0
  %v3347 = vadd.f32 0.0, %v3346
  %v3348 = vpop.f32.mrb[0].mxu0
  %v3349 = vadd.f32 0.0, %v3348
  %v3350 = vpop.f32.mrb[0].mxu0
  %v3351 = vadd.f32 0.0, %v3350
  %3352 = vmatprep.mubr.bf16.mxu0 %v1786
  %3353 = vmatmul.mubr.bf16.gmra.mrb[0].mxu0 %v1524
  %v3354 = vpop.f32.mrb[0].mxu0
  %v3355 = vadd.f32 0.0, %v3354
  %v3356 = vpop.f32.mrb[0].mxu0
  %v3357 = vadd.f32 0.0, %v3356
  %v3358 = vpop.f32.mrb[0].mxu0
  %v3359 = vadd.f32 0.0, %v3358
  %v3360 = vpop.f32.mrb[0].mxu0
  %v3361 = vadd.f32 0.0, %v3360
  %3362 = vmatprep.mubr.bf16.mxu0 %v3298
  %3363 = vmatmul.mubr.bf16.gmra.mrb[0].mxu0 %v1528
  %v3364 = vpop.f32.mrb[0].mxu0
  %v3365 = vadd.f32 0.0, %v3364
  %v3366 = vpop.f32.mrb[0].mxu0
  %v3367 = vadd.f32 0.0, %v3366
  %v3368 = vpop.f32.mrb[0].mxu0
  %v3369 = vadd.f32 0.0, %v3368
  %v3370 = vpop.f32.mrb[0].mxu0
  %v3371 = vadd.f32 0.0, %v3370
  %3372 = vdwg.mxu0
  %s3373 = scalar_lea.vmem %s3, 1680
  %v3374 = vld [vmem:[%s3373] sm:$0xff]
  %v3375 = vld [vmem:[%s3373 + $0x8] sm:$0xff]
  %v3376 = vld [vmem:[%s3373 + $0x10] sm:$0xff]
  %v3377 = vld [vmem:[%s3373 + $0x18] sm:$0xff]
  %v3378 = vld [vmem:[%s3373 + $0x20] sm:$0xff]
  %v3379 = vld [vmem:[%s3373 + $0x28] sm:$0xff]
  %v3380 = vld [vmem:[%s3373 + $0x30] sm:$0xff]
  %v3381 = vld [vmem:[%s3373 + $0x38] sm:$0xff]
  %v3382 = vld [vmem:[%s3373 + $0x40] sm:$0xff]
  %v3383 = vld [vmem:[%s3373 + $0x48] sm:$0xff]
  %v3384 = vld [vmem:[%s3373 + $0x50] sm:$0xff]
  %v3385 = vld [vmem:[%s3373 + $0x58] sm:$0xff]
  %v3386 = vld [vmem:[%s3373 + $0x60] sm:$0xff]
  %v3387 = vld [vmem:[%s3373 + $0x68] sm:$0xff]
  %v3388 = vld [vmem:[%s3373 + $0x70] sm:$0xff]
  %v3389 = vld [vmem:[%s3373 + $0x78] sm:$0xff]
  %v3390 = vld [vmem:[%s3373 + $0x80] sm:$0xff]
  %v3391 = vld [vmem:[%s3373 + $0x88] sm:$0xff]
  %v3392 = vld [vmem:[%s3373 + $0x90] sm:$0xff]
  %v3393 = vld [vmem:[%s3373 + $0x98] sm:$0xff]
  %v3394 = vld [vmem:[%s3373 + $0xa0] sm:$0xff]
  %v3395 = vld [vmem:[%s3373 + $0xa8] sm:$0xff]
  %v3396 = vld [vmem:[%s3373 + $0xb0] sm:$0xff]
  %v3397 = vld [vmem:[%s3373 + $0xb8] sm:$0xff]
  %v3398 = vld [vmem:[%s3373 + $0xc0] sm:$0xff]
  %v3399 = vld [vmem:[%s3373 + $0xc8] sm:$0xff]
  %v3400 = vld [vmem:[%s3373 + $0xd0] sm:$0xff]
  %v3401 = vld [vmem:[%s3373 + $0xd8] sm:$0xff]
  %v3402 = vld [vmem:[%s3373 + $0xe0] sm:$0xff]
  %v3403 = vld [vmem:[%s3373 + $0xe8] sm:$0xff]
  %v3434 = vunpack.c.l.b16 %v3374
  %v3435 = vunpack.c.h.b16 %v3374
  %v3436 = vunpack.c.l.b16 %v3375
  %v3437 = vunpack.c.h.b16 %v3375
  %v3438 = vunpack.c.l.b16 %v3376
  %v3439 = vunpack.c.h.b16 %v3376
  %v3440 = vunpack.c.l.b16 %v3377
  %v3441 = vunpack.c.h.b16 %v3377
  %v3442 = vunpack.c.l.b16 %v3378
  %v3443 = vunpack.c.h.b16 %v3378
  %v3444 = vunpack.c.l.b16 %v3379
  %v3445 = vunpack.c.h.b16 %v3379
  %v3446 = vunpack.c.l.b16 %v3380
  %v3447 = vunpack.c.h.b16 %v3380
  %v3448 = vunpack.c.l.b16 %v3381
  %v3449 = vunpack.c.h.b16 %v3381
  %v3450 = vunpack.c.l.b16 %v3382
  %v3451 = vunpack.c.h.b16 %v3382
  %v3452 = vunpack.c.l.b16 %v3383
  %v3453 = vunpack.c.h.b16 %v3383
  %v3454 = vunpack.c.l.b16 %v3384
  %v3455 = vunpack.c.h.b16 %v3384
  %v3456 = vunpack.c.l.b16 %v3385
  %v3457 = vunpack.c.h.b16 %v3385
  %v3458 = vunpack.c.l.b16 %v3386
  %v3459 = vunpack.c.h.b16 %v3386
  %v3460 = vunpack.c.l.b16 %v3387
  %v3461 = vunpack.c.h.b16 %v3387
  %v3462 = vunpack.c.l.b16 %v3388
  %v3463 = vunpack.c.h.b16 %v3388
  %v3464 = vunpack.c.l.b16 %v3389
  %v3465 = vunpack.c.h.b16 %v3389
  %v3466 = vunpack.c.l.b16 %v3390
  %v3467 = vunpack.c.h.b16 %v3390
  %v3468 = vunpack.c.l.b16 %v3391
  %v3469 = vunpack.c.h.b16 %v3391
  %v3470 = vunpack.c.l.b16 %v3392
  %v3471 = vunpack.c.h.b16 %v3392
  %v3472 = vunpack.c.l.b16 %v3393
  %v3473 = vunpack.c.h.b16 %v3393
  %v3474 = vunpack.c.l.b16 %v3394
  %v3475 = vunpack.c.h.b16 %v3394
  %v3476 = vunpack.c.l.b16 %v3395
  %v3477 = vunpack.c.h.b16 %v3395
  %v3478 = vunpack.c.l.b16 %v3396
  %v3479 = vunpack.c.h.b16 %v3396
  %v3480 = vunpack.c.l.b16 %v3397
  %v3481 = vunpack.c.h.b16 %v3397
  %v3482 = vunpack.c.l.b16 %v3398
  %v3483 = vunpack.c.h.b16 %v3398
  %v3484 = vunpack.c.l.b16 %v3399
  %v3485 = vunpack.c.h.b16 %v3399
  %v3486 = vunpack.c.l.b16 %v3400
  %v3487 = vunpack.c.h.b16 %v3400
  %v3488 = vunpack.c.l.b16 %v3401
  %v3489 = vunpack.c.h.b16 %v3401
  %v3490 = vunpack.c.l.b16 %v3402
  %v3491 = vunpack.c.h.b16 %v3402
  %v3492 = vunpack.c.l.b16 %v3403
  %v3493 = vunpack.c.h.b16 %v3403
  %v3494 = vpack.c.b16 %v3436, %v3434
  %v3495 = vpack.c.b16 %v3437, %v3435
  %v3496 = vpack.c.b16 %v3440, %v3438
  %v3497 = vpack.c.b16 %v3441, %v3439
  %v3498 = vpack.c.b16 %v3444, %v3442
  %v3499 = vpack.c.b16 %v3445, %v3443
  %v3500 = vpack.c.b16 %v3448, %v3446
  %v3501 = vpack.c.b16 %v3449, %v3447
  %v3502 = vpack.c.b16 %v3452, %v3450
  %v3503 = vpack.c.b16 %v3453, %v3451
  %v3504 = vpack.c.b16 %v3456, %v3454
  %v3505 = vpack.c.b16 %v3457, %v3455
  %v3506 = vpack.c.b16 %v3460, %v3458
  %v3507 = vpack.c.b16 %v3461, %v3459
  %v3508 = vpack.c.b16 %v3464, %v3462
  %v3509 = vpack.c.b16 %v3465, %v3463
  %v3510 = vpack.c.b16 %v3468, %v3466
  %v3511 = vpack.c.b16 %v3469, %v3467
  %v3512 = vpack.c.b16 %v3472, %v3470
  %v3513 = vpack.c.b16 %v3473, %v3471
  %v3514 = vpack.c.b16 %v3476, %v3474
  %v3515 = vpack.c.b16 %v3477, %v3475
  %v3516 = vpack.c.b16 %v3480, %v3478
  %v3517 = vpack.c.b16 %v3481, %v3479
  %v3518 = vpack.c.b16 %v3484, %v3482
  %v3519 = vpack.c.b16 %v3485, %v3483
  %v3520 = vpack.c.b16 %v3488, %v3486
  %v3521 = vpack.c.b16 %v3489, %v3487
  %v3522 = vpack.c.b16 %v3492, %v3490
  %v3523 = vpack.c.b16 %v3493, %v3491
  %3554 = vmatprep.subr.bf16.mxu0 %v3495
  %3555 = vmatpush1.bf16.msra.mxu0 %v3494
  %3556 = vmatprep.subr.bf16.mxu0 %v3497
  %3557 = vmatpush1.bf16.msra.mxu0 %v3496
  %3558 = vmatprep.subr.bf16.mxu0 %v3499
  %3559 = vmatpush1.bf16.msra.mxu0 %v3498
  %3560 = vmatprep.subr.bf16.mxu0 %v3501
  %3561 = vmatpush1.bf16.msra.mxu0 %v3500
  %3562 = vmatprep.subr.bf16.mxu0 %v3503
  %3563 = vmatpush1.bf16.msra.mxu0 %v3502
  %3564 = vmatprep.subr.bf16.mxu0 %v3505
  %3565 = vmatpush1.bf16.msra.mxu0 %v3504
  %3566 = vmatprep.subr.bf16.mxu0 %v3507
  %3567 = vmatpush1.bf16.msra.mxu0 %v3506
  %3568 = vmatprep.subr.bf16.mxu0 %v3509
  %3569 = vmatpush1.bf16.msra.mxu0 %v3508
  %3570 = vmatprep.subr.bf16.mxu0 %v3511
  %3571 = vmatpush1.bf16.msra.mxu0 %v3510
  %3572 = vmatprep.subr.bf16.mxu0 %v3513
  %3573 = vmatpush1.bf16.msra.mxu0 %v3512
  %3574 = vmatprep.subr.bf16.mxu0 %v3515
  %3575 = vmatpush1.bf16.msra.mxu0 %v3514
  %3576 = vmatprep.subr.bf16.mxu0 %v3517
  %3577 = vmatpush1.bf16.msra.mxu0 %v3516
  %3578 = vmatprep.subr.bf16.mxu0 %v3519
  %3579 = vmatpush1.bf16.msra.mxu0 %v3518
  %3580 = vmatprep.subr.bf16.mxu0 %v3521
  %3581 = vmatpush1.bf16.msra.mxu0 %v3520
  %3582 = vmatprep.subr.bf16.mxu0 %v3523
  %3583 = vmatpush1.bf16.msra.mxu0 %v3522
  %3584 = vmatprep.subr.bf16.mxu0 0
  %3585 = vmatpush1.bf16.msra.mxu0 0
  %3586 = vmatprep.mubr.bf16.mxu0 %v1780
  %3587 = vmatmul.mubr.bf16.gmra.mrb[0].mxu0 %v1520
  %v3588 = vpop.f32.mrb[0].mxu0
  %v3589 = vadd.f32 0.0, %v3588
  %v3590 = vpop.f32.mrb[0].mxu0
  %v3591 = vadd.f32 0.0, %v3590
  %v3592 = vpop.f32.mrb[0].mxu0
  %v3593 = vadd.f32 0.0, %v3592
  %v3594 = vpop.f32.mrb[0].mxu0
  %v3595 = vadd.f32 0.0, %v3594
  %3596 = vmatprep.mubr.bf16.mxu0 %v1783
  %3597 = vmatmul.mubr.bf16.gmra.mrb[0].mxu0 %v1522
  %v3598 = vpop.f32.mrb[0].mxu0
  %v3599 = vadd.f32 0.0, %v3598
  %v3600 = vpop.f32.mrb[0].mxu0
  %v3601 = vadd.f32 0.0, %v3600
  %v3602 = vpop.f32.mrb[0].mxu0
  %v3603 = vadd.f32 0.0, %v3602
  %v3604 = vpop.f32.mrb[0].mxu0
  %v3605 = vadd.f32 0.0, %v3604
  %3606 = vmatprep.mubr.bf16.mxu0 %v1786
  %3607 = vmatmul.mubr.bf16.gmra.mrb[0].mxu0 %v1524
  %v3608 = vpop.f32.mrb[0].mxu0
  %v3609 = vadd.f32 0.0, %v3608
  %v3610 = vpop.f32.mrb[0].mxu0
  %v3611 = vadd.f32 0.0, %v3610
  %v3612 = vpop.f32.mrb[0].mxu0
  %v3613 = vadd.f32 0.0, %v3612
  %v3614 = vpop.f32.mrb[0].mxu0
  %v3615 = vadd.f32 0.0, %v3614
  %3616 = vmatprep.mubr.bf16.mxu0 %v3298
  %3617 = vmatmul.mubr.bf16.gmra.mrb[0].mxu0 %v1528
  %v3618 = vpop.f32.mrb[0].mxu0
  %v3619 = vadd.f32 0.0, %v3618
  %v3620 = vpop.f32.mrb[0].mxu0
  %v3621 = vadd.f32 0.0, %v3620
  %v3622 = vpop.f32.mrb[0].mxu0
  %v3623 = vadd.f32 0.0, %v3622
  %v3624 = vpop.f32.mrb[0].mxu0
  %v3625 = vadd.f32 0.0, %v3624
  %3626 = vdwg.mxu0
  %v3627 = vadd.f32 %v3084, %v3335
  %v3628 = vadd.f32 %v3085, %v3337
  %v3629 = vadd.f32 %v3086, %v3339
  %v3630 = vadd.f32 %v3087, %v3341
  %v3631 = vadd.f32 %v3088, %v3345
  %v3632 = vadd.f32 %v3089, %v3347
  %v3633 = vadd.f32 %v3090, %v3349
  %v3634 = vadd.f32 %v3091, %v3351
  %v3635 = vadd.f32 %v3092, %v3355
  %v3636 = vadd.f32 %v3093, %v3357
  %v3637 = vadd.f32 %v3094, %v3359
  %v3638 = vadd.f32 %v3095, %v3361
  %v3639 = vadd.f32 %v3096, %v3365
  %v3640 = vadd.f32 %v3097, %v3367
  %v3641 = vadd.f32 %v3098, %v3369
  %v3642 = vadd.f32 %v3099, %v3371
  %v3643 = vadd.f32 %v3100, %v3589
  %v3644 = vadd.f32 %v3101, %v3591
  %v3645 = vadd.f32 %v3102, %v3593
  %v3646 = vadd.f32 %v3103, %v3595
  %v3647 = vadd.f32 %v3104, %v3599
  %v3648 = vadd.f32 %v3105, %v3601
  %v3649 = vadd.f32 %v3106, %v3603
  %v3650 = vadd.f32 %v3107, %v3605
  %v3651 = vadd.f32 %v3108, %v3609
  %v3652 = vadd.f32 %v3109, %v3611
  %v3653 = vadd.f32 %v3110, %v3613
  %v3654 = vadd.f32 %v3111, %v3615
  %v3655 = vadd.f32 %v3112, %v3619
  %v3656 = vadd.f32 %v3113, %v3621
  %v3657 = vadd.f32 %v3114, %v3623
  %v3658 = vadd.f32 %v3115, %v3625
  %s3659 = scalar_lea.vmem %s3, 1920
  %v3660 = vld [vmem:[%s3659] sm:$0xff]
  %v3661 = vld [vmem:[%s3659 + $0x8] sm:$0xff]
  %v3662 = vld [vmem:[%s3659 + $0x10] sm:$0xff]
  %v3663 = vld [vmem:[%s3659 + $0x18] sm:$0xff]
  %v3664 = vld [vmem:[%s3659 + $0x20] sm:$0xff]
  %v3665 = vld [vmem:[%s3659 + $0x28] sm:$0xff]
  %v3666 = vld [vmem:[%s3659 + $0x30] sm:$0xff]
  %v3667 = vld [vmem:[%s3659 + $0x38] sm:$0xff]
  %v3668 = vld [vmem:[%s3659 + $0x40] sm:$0xff]
  %v3669 = vld [vmem:[%s3659 + $0x48] sm:$0xff]
  %v3670 = vld [vmem:[%s3659 + $0x50] sm:$0xff]
  %v3671 = vld [vmem:[%s3659 + $0x58] sm:$0xff]
  %v3672 = vld [vmem:[%s3659 + $0x60] sm:$0xff]
  %v3673 = vld [vmem:[%s3659 + $0x68] sm:$0xff]
  %v3674 = vld [vmem:[%s3659 + $0x70] sm:$0xff]
  %v3675 = vld [vmem:[%s3659 + $0x78] sm:$0xff]
  %v3676 = vld [vmem:[%s3659 + $0x80] sm:$0xff]
  %v3677 = vld [vmem:[%s3659 + $0x88] sm:$0xff]
  %v3678 = vld [vmem:[%s3659 + $0x90] sm:$0xff]
  %v3679 = vld [vmem:[%s3659 + $0x98] sm:$0xff]
  %v3680 = vld [vmem:[%s3659 + $0xa0] sm:$0xff]
  %v3681 = vld [vmem:[%s3659 + $0xa8] sm:$0xff]
  %v3682 = vld [vmem:[%s3659 + $0xb0] sm:$0xff]
  %v3683 = vld [vmem:[%s3659 + $0xb8] sm:$0xff]
  %v3684 = vld [vmem:[%s3659 + $0xc0] sm:$0xff]
  %v3685 = vld [vmem:[%s3659 + $0xc8] sm:$0xff]
  %v3686 = vld [vmem:[%s3659 + $0xd0] sm:$0xff]
  %v3687 = vld [vmem:[%s3659 + $0xd8] sm:$0xff]
  %v3688 = vld [vmem:[%s3659 + $0xe0] sm:$0xff]
  %v3689 = vld [vmem:[%s3659 + $0xe8] sm:$0xff]
  %v3720 = vunpack.c.l.b16 %v3660
  %v3721 = vunpack.c.h.b16 %v3660
  %v3722 = vunpack.c.l.b16 %v3661
  %v3723 = vunpack.c.h.b16 %v3661
  %v3724 = vunpack.c.l.b16 %v3662
  %v3725 = vunpack.c.h.b16 %v3662
  %v3726 = vunpack.c.l.b16 %v3663
  %v3727 = vunpack.c.h.b16 %v3663
  %v3728 = vunpack.c.l.b16 %v3664
  %v3729 = vunpack.c.h.b16 %v3664
  %v3730 = vunpack.c.l.b16 %v3665
  %v3731 = vunpack.c.h.b16 %v3665
  %v3732 = vunpack.c.l.b16 %v3666
  %v3733 = vunpack.c.h.b16 %v3666
  %v3734 = vunpack.c.l.b16 %v3667
  %v3735 = vunpack.c.h.b16 %v3667
  %v3736 = vunpack.c.l.b16 %v3668
  %v3737 = vunpack.c.h.b16 %v3668
  %v3738 = vunpack.c.l.b16 %v3669
  %v3739 = vunpack.c.h.b16 %v3669
  %v3740 = vunpack.c.l.b16 %v3670
  %v3741 = vunpack.c.h.b16 %v3670
  %v3742 = vunpack.c.l.b16 %v3671
  %v3743 = vunpack.c.h.b16 %v3671
  %v3744 = vunpack.c.l.b16 %v3672
  %v3745 = vunpack.c.h.b16 %v3672
  %v3746 = vunpack.c.l.b16 %v3673
  %v3747 = vunpack.c.h.b16 %v3673
  %v3748 = vunpack.c.l.b16 %v3674
  %v3749 = vunpack.c.h.b16 %v3674
  %v3750 = vunpack.c.l.b16 %v3675
  %v3751 = vunpack.c.h.b16 %v3675
  %v3752 = vunpack.c.l.b16 %v3676
  %v3753 = vunpack.c.h.b16 %v3676
  %v3754 = vunpack.c.l.b16 %v3677
  %v3755 = vunpack.c.h.b16 %v3677
  %v3756 = vunpack.c.l.b16 %v3678
  %v3757 = vunpack.c.h.b16 %v3678
  %v3758 = vunpack.c.l.b16 %v3679
  %v3759 = vunpack.c.h.b16 %v3679
  %v3760 = vunpack.c.l.b16 %v3680
  %v3761 = vunpack.c.h.b16 %v3680
  %v3762 = vunpack.c.l.b16 %v3681
  %v3763 = vunpack.c.h.b16 %v3681
  %v3764 = vunpack.c.l.b16 %v3682
  %v3765 = vunpack.c.h.b16 %v3682
  %v3766 = vunpack.c.l.b16 %v3683
  %v3767 = vunpack.c.h.b16 %v3683
  %v3768 = vunpack.c.l.b16 %v3684
  %v3769 = vunpack.c.h.b16 %v3684
  %v3770 = vunpack.c.l.b16 %v3685
  %v3771 = vunpack.c.h.b16 %v3685
  %v3772 = vunpack.c.l.b16 %v3686
  %v3773 = vunpack.c.h.b16 %v3686
  %v3774 = vunpack.c.l.b16 %v3687
  %v3775 = vunpack.c.h.b16 %v3687
  %v3776 = vunpack.c.l.b16 %v3688
  %v3777 = vunpack.c.h.b16 %v3688
  %v3778 = vunpack.c.l.b16 %v3689
  %v3779 = vunpack.c.h.b16 %v3689
  %v3780 = vpack.c.b16 %v3722, %v3720
  %v3781 = vpack.c.b16 %v3723, %v3721
  %v3782 = vpack.c.b16 %v3726, %v3724
  %v3783 = vpack.c.b16 %v3727, %v3725
  %v3784 = vpack.c.b16 %v3730, %v3728
  %v3785 = vpack.c.b16 %v3731, %v3729
  %v3786 = vpack.c.b16 %v3734, %v3732
  %v3787 = vpack.c.b16 %v3735, %v3733
  %v3788 = vpack.c.b16 %v3738, %v3736
  %v3789 = vpack.c.b16 %v3739, %v3737
  %v3790 = vpack.c.b16 %v3742, %v3740
  %v3791 = vpack.c.b16 %v3743, %v3741
  %v3792 = vpack.c.b16 %v3746, %v3744
  %v3793 = vpack.c.b16 %v3747, %v3745
  %v3794 = vpack.c.b16 %v3750, %v3748
  %v3795 = vpack.c.b16 %v3751, %v3749
  %v3796 = vpack.c.b16 %v3754, %v3752
  %v3797 = vpack.c.b16 %v3755, %v3753
  %v3798 = vpack.c.b16 %v3758, %v3756
  %v3799 = vpack.c.b16 %v3759, %v3757
  %v3800 = vpack.c.b16 %v3762, %v3760
  %v3801 = vpack.c.b16 %v3763, %v3761
  %v3802 = vpack.c.b16 %v3766, %v3764
  %v3803 = vpack.c.b16 %v3767, %v3765
  %v3804 = vpack.c.b16 %v3770, %v3768
  %v3805 = vpack.c.b16 %v3771, %v3769
  %v3806 = vpack.c.b16 %v3774, %v3772
  %v3807 = vpack.c.b16 %v3775, %v3773
  %v3808 = vpack.c.b16 %v3778, %v3776
  %v3809 = vpack.c.b16 %v3779, %v3777
  %v3841 = vsel %vm1486, %v1531, 0
  %3843 = vmatprep.subr.bf16.mxu0 %v3781
  %3844 = vmatpush1.bf16.msra.mxu0 %v3780
  %3845 = vmatprep.subr.bf16.mxu0 %v3783
  %3846 = vmatpush1.bf16.msra.mxu0 %v3782
  %3847 = vmatprep.subr.bf16.mxu0 %v3785
  %3848 = vmatpush1.bf16.msra.mxu0 %v3784
  %3849 = vmatprep.subr.bf16.mxu0 %v3787
  %3850 = vmatpush1.bf16.msra.mxu0 %v3786
  %3851 = vmatprep.subr.bf16.mxu0 %v3789
  %3852 = vmatpush1.bf16.msra.mxu0 %v3788
  %3853 = vmatprep.subr.bf16.mxu0 %v3791
  %3854 = vmatpush1.bf16.msra.mxu0 %v3790
  %3855 = vmatprep.subr.bf16.mxu0 %v3793
  %3856 = vmatpush1.bf16.msra.mxu0 %v3792
  %3857 = vmatprep.subr.bf16.mxu0 %v3795
  %3858 = vmatpush1.bf16.msra.mxu0 %v3794
  %3859 = vmatprep.subr.bf16.mxu0 %v3797
  %3860 = vmatpush1.bf16.msra.mxu0 %v3796
  %3861 = vmatprep.subr.bf16.mxu0 %v3799
  %3862 = vmatpush1.bf16.msra.mxu0 %v3798
  %3863 = vmatprep.subr.bf16.mxu0 %v3801
  %3864 = vmatpush1.bf16.msra.mxu0 %v3800
  %3865 = vmatprep.subr.bf16.mxu0 %v3803
  %3866 = vmatpush1.bf16.msra.mxu0 %v3802
  %3867 = vmatprep.subr.bf16.mxu0 %v3805
  %3868 = vmatpush1.bf16.msra.mxu0 %v3804
  %3869 = vmatprep.subr.bf16.mxu0 %v3807
  %3870 = vmatpush1.bf16.msra.mxu0 %v3806
  %3871 = vmatprep.subr.bf16.mxu0 %v3809
  %3872 = vmatpush1.bf16.msra.mxu0 %v3808
  %3873 = vmatprep.subr.bf16.mxu0 0
  %3874 = vmatpush1.bf16.msra.mxu0 0
  %3875 = vmatprep.mubr.bf16.mxu0 %v2272
  %3876 = vmatmul.mubr.bf16.gmra.mrb[0].mxu0 %v1514
  %v3877 = vpop.f32.mrb[0].mxu0
  %v3878 = vadd.f32 0.0, %v3877
  %v3879 = vpop.f32.mrb[0].mxu0
  %v3880 = vadd.f32 0.0, %v3879
  %v3881 = vpop.f32.mrb[0].mxu0
  %v3882 = vadd.f32 0.0, %v3881
  %v3883 = vpop.f32.mrb[0].mxu0
  %v3884 = vadd.f32 0.0, %v3883
  %3885 = vmatprep.mubr.bf16.mxu0 %v2275
  %3886 = vmatmul.mubr.bf16.gmra.mrb[0].mxu0 %v1516
  %v3887 = vpop.f32.mrb[0].mxu0
  %v3888 = vadd.f32 0.0, %v3887
  %v3889 = vpop.f32.mrb[0].mxu0
  %v3890 = vadd.f32 0.0, %v3889
  %v3891 = vpop.f32.mrb[0].mxu0
  %v3892 = vadd.f32 0.0, %v3891
  %v3893 = vpop.f32.mrb[0].mxu0
  %v3894 = vadd.f32 0.0, %v3893
  %3895 = vmatprep.mubr.bf16.mxu0 %v2755
  %3896 = vmatmul.mubr.bf16.gmra.mrb[0].mxu0 %v1526
  %v3897 = vpop.f32.mrb[0].mxu0
  %v3898 = vadd.f32 0.0, %v3897
  %v3899 = vpop.f32.mrb[0].mxu0
  %v3900 = vadd.f32 0.0, %v3899
  %v3901 = vpop.f32.mrb[0].mxu0
  %v3902 = vadd.f32 0.0, %v3901
  %v3903 = vpop.f32.mrb[0].mxu0
  %v3904 = vadd.f32 0.0, %v3903
  %3905 = vmatprep.mubr.bf16.mxu0 %v3841
  %3906 = vmatmul.mubr.bf16.gmra.mrb[0].mxu0 %v1530
  %v3907 = vpop.f32.mrb[0].mxu0
  %v3908 = vadd.f32 0.0, %v3907
  %v3909 = vpop.f32.mrb[0].mxu0
  %v3910 = vadd.f32 0.0, %v3909
  %v3911 = vpop.f32.mrb[0].mxu0
  %v3912 = vadd.f32 0.0, %v3911
  %v3913 = vpop.f32.mrb[0].mxu0
  %v3914 = vadd.f32 0.0, %v3913
  %3915 = vdwg.mxu0
  %s3916 = scalar_lea.vmem %s3, 2160
  %v3917 = vld [vmem:[%s3916] sm:$0xff]
  %v3918 = vld [vmem:[%s3916 + $0x8] sm:$0xff]
  %v3919 = vld [vmem:[%s3916 + $0x10] sm:$0xff]
  %v3920 = vld [vmem:[%s3916 + $0x18] sm:$0xff]
  %v3921 = vld [vmem:[%s3916 + $0x20] sm:$0xff]
  %v3922 = vld [vmem:[%s3916 + $0x28] sm:$0xff]
  %v3923 = vld [vmem:[%s3916 + $0x30] sm:$0xff]
  %v3924 = vld [vmem:[%s3916 + $0x38] sm:$0xff]
  %v3925 = vld [vmem:[%s3916 + $0x40] sm:$0xff]
  %v3926 = vld [vmem:[%s3916 + $0x48] sm:$0xff]
  %v3927 = vld [vmem:[%s3916 + $0x50] sm:$0xff]
  %v3928 = vld [vmem:[%s3916 + $0x58] sm:$0xff]
  %v3929 = vld [vmem:[%s3916 + $0x60] sm:$0xff]
  %v3930 = vld [vmem:[%s3916 + $0x68] sm:$0xff]
  %v3931 = vld [vmem:[%s3916 + $0x70] sm:$0xff]
  %v3932 = vld [vmem:[%s3916 + $0x78] sm:$0xff]
  %v3933 = vld [vmem:[%s3916 + $0x80] sm:$0xff]
  %v3934 = vld [vmem:[%s3916 + $0x88] sm:$0xff]
  %v3935 = vld [vmem:[%s3916 + $0x90] sm:$0xff]
  %v3936 = vld [vmem:[%s3916 + $0x98] sm:$0xff]
  %v3937 = vld [vmem:[%s3916 + $0xa0] sm:$0xff]
  %v3938 = vld [vmem:[%s3916 + $0xa8] sm:$0xff]
  %v3939 = vld [vmem:[%s3916 + $0xb0] sm:$0xff]
  %v3940 = vld [vmem:[%s3916 + $0xb8] sm:$0xff]
  %v3941 = vld [vmem:[%s3916 + $0xc0] sm:$0xff]
  %v3942 = vld [vmem:[%s3916 + $0xc8] sm:$0xff]
  %v3943 = vld [vmem:[%s3916 + $0xd0] sm:$0xff]
  %v3944 = vld [vmem:[%s3916 + $0xd8] sm:$0xff]
  %v3945 = vld [vmem:[%s3916 + $0xe0] sm:$0xff]
  %v3946 = vld [vmem:[%s3916 + $0xe8] sm:$0xff]
  %v3977 = vunpack.c.l.b16 %v3917
  %v3978 = vunpack.c.h.b16 %v3917
  %v3979 = vunpack.c.l.b16 %v3918
  %v3980 = vunpack.c.h.b16 %v3918
  %v3981 = vunpack.c.l.b16 %v3919
  %v3982 = vunpack.c.h.b16 %v3919
  %v3983 = vunpack.c.l.b16 %v3920
  %v3984 = vunpack.c.h.b16 %v3920
  %v3985 = vunpack.c.l.b16 %v3921
  %v3986 = vunpack.c.h.b16 %v3921
  %v3987 = vunpack.c.l.b16 %v3922
  %v3988 = vunpack.c.h.b16 %v3922
  %v3989 = vunpack.c.l.b16 %v3923
  %v3990 = vunpack.c.h.b16 %v3923
  %v3991 = vunpack.c.l.b16 %v3924
  %v3992 = vunpack.c.h.b16 %v3924
  %v3993 = vunpack.c.l.b16 %v3925
  %v3994 = vunpack.c.h.b16 %v3925
  %v3995 = vunpack.c.l.b16 %v3926
  %v3996 = vunpack.c.h.b16 %v3926
  %v3997 = vunpack.c.l.b16 %v3927
  %v3998 = vunpack.c.h.b16 %v3927
  %v3999 = vunpack.c.l.b16 %v3928
  %v4000 = vunpack.c.h.b16 %v3928
  %v4001 = vunpack.c.l.b16 %v3929
  %v4002 = vunpack.c.h.b16 %v3929
  %v4003 = vunpack.c.l.b16 %v3930
  %v4004 = vunpack.c.h.b16 %v3930
  %v4005 = vunpack.c.l.b16 %v3931
  %v4006 = vunpack.c.h.b16 %v3931
  %v4007 = vunpack.c.l.b16 %v3932
  %v4008 = vunpack.c.h.b16 %v3932
  %v4009 = vunpack.c.l.b16 %v3933
  %v4010 = vunpack.c.h.b16 %v3933
  %v4011 = vunpack.c.l.b16 %v3934
  %v4012 = vunpack.c.h.b16 %v3934
  %v4013 = vunpack.c.l.b16 %v3935
  %v4014 = vunpack.c.h.b16 %v3935
  %v4015 = vunpack.c.l.b16 %v3936
  %v4016 = vunpack.c.h.b16 %v3936
  %v4017 = vunpack.c.l.b16 %v3937
  %v4018 = vunpack.c.h.b16 %v3937
  %v4019 = vunpack.c.l.b16 %v3938
  %v4020 = vunpack.c.h.b16 %v3938
  %v4021 = vunpack.c.l.b16 %v3939
  %v4022 = vunpack.c.h.b16 %v3939
  %v4023 = vunpack.c.l.b16 %v3940
  %v4024 = vunpack.c.h.b16 %v3940
  %v4025 = vunpack.c.l.b16 %v3941
  %v4026 = vunpack.c.h.b16 %v3941
  %v4027 = vunpack.c.l.b16 %v3942
  %v4028 = vunpack.c.h.b16 %v3942
  %v4029 = vunpack.c.l.b16 %v3943
  %v4030 = vunpack.c.h.b16 %v3943
  %v4031 = vunpack.c.l.b16 %v3944
  %v4032 = vunpack.c.h.b16 %v3944
  %v4033 = vunpack.c.l.b16 %v3945
  %v4034 = vunpack.c.h.b16 %v3945
  %v4035 = vunpack.c.l.b16 %v3946
  %v4036 = vunpack.c.h.b16 %v3946
  %v4037 = vpack.c.b16 %v3979, %v3977
  %v4038 = vpack.c.b16 %v3980, %v3978
  %v4039 = vpack.c.b16 %v3983, %v3981
  %v4040 = vpack.c.b16 %v3984, %v3982
  %v4041 = vpack.c.b16 %v3987, %v3985
  %v4042 = vpack.c.b16 %v3988, %v3986
  %v4043 = vpack.c.b16 %v3991, %v3989
  %v4044 = vpack.c.b16 %v3992, %v3990
  %v4045 = vpack.c.b16 %v3995, %v3993
  %v4046 = vpack.c.b16 %v3996, %v3994
  %v4047 = vpack.c.b16 %v3999, %v3997
  %v4048 = vpack.c.b16 %v4000, %v3998
  %v4049 = vpack.c.b16 %v4003, %v4001
  %v4050 = vpack.c.b16 %v4004, %v4002
  %v4051 = vpack.c.b16 %v4007, %v4005
  %v4052 = vpack.c.b16 %v4008, %v4006
  %v4053 = vpack.c.b16 %v4011, %v4009
  %v4054 = vpack.c.b16 %v4012, %v4010
  %v4055 = vpack.c.b16 %v4015, %v4013
  %v4056 = vpack.c.b16 %v4016, %v4014
  %v4057 = vpack.c.b16 %v4019, %v4017
  %v4058 = vpack.c.b16 %v4020, %v4018
  %v4059 = vpack.c.b16 %v4023, %v4021
  %v4060 = vpack.c.b16 %v4024, %v4022
  %v4061 = vpack.c.b16 %v4027, %v4025
  %v4062 = vpack.c.b16 %v4028, %v4026
  %v4063 = vpack.c.b16 %v4031, %v4029
  %v4064 = vpack.c.b16 %v4032, %v4030
  %v4065 = vpack.c.b16 %v4035, %v4033
  %v4066 = vpack.c.b16 %v4036, %v4034
  %4097 = vmatprep.subr.bf16.mxu0 %v4038
  %4098 = vmatpush1.bf16.msra.mxu0 %v4037
  %4099 = vmatprep.subr.bf16.mxu0 %v4040
  %4100 = vmatpush1.bf16.msra.mxu0 %v4039
  %4101 = vmatprep.subr.bf16.mxu0 %v4042
  %4102 = vmatpush1.bf16.msra.mxu0 %v4041
  %4103 = vmatprep.subr.bf16.mxu0 %v4044
  %4104 = vmatpush1.bf16.msra.mxu0 %v4043
  %4105 = vmatprep.subr.bf16.mxu0 %v4046
  %4106 = vmatpush1.bf16.msra.mxu0 %v4045
  %4107 = vmatprep.subr.bf16.mxu0 %v4048
  %4108 = vmatpush1.bf16.msra.mxu0 %v4047
  %4109 = vmatprep.subr.bf16.mxu0 %v4050
  %4110 = vmatpush1.bf16.msra.mxu0 %v4049
  %4111 = vmatprep.subr.bf16.mxu0 %v4052
  %4112 = vmatpush1.bf16.msra.mxu0 %v4051
  %4113 = vmatprep.subr.bf16.mxu0 %v4054
  %4114 = vmatpush1.bf16.msra.mxu0 %v4053
  %4115 = vmatprep.subr.bf16.mxu0 %v4056
  %4116 = vmatpush1.bf16.msra.mxu0 %v4055
  %4117 = vmatprep.subr.bf16.mxu0 %v4058
  %4118 = vmatpush1.bf16.msra.mxu0 %v4057
  %4119 = vmatprep.subr.bf16.mxu0 %v4060
  %4120 = vmatpush1.bf16.msra.mxu0 %v4059
  %4121 = vmatprep.subr.bf16.mxu0 %v4062
  %4122 = vmatpush1.bf16.msra.mxu0 %v4061
  %4123 = vmatprep.subr.bf16.mxu0 %v4064
  %4124 = vmatpush1.bf16.msra.mxu0 %v4063
  %4125 = vmatprep.subr.bf16.mxu0 %v4066
  %4126 = vmatpush1.bf16.msra.mxu0 %v4065
  %4127 = vmatprep.subr.bf16.mxu0 0
  %4128 = vmatpush1.bf16.msra.mxu0 0
  %4129 = vmatprep.mubr.bf16.mxu0 %v2272
  %4130 = vmatmul.mubr.bf16.gmra.mrb[0].mxu0 %v1514
  %v4131 = vpop.f32.mrb[0].mxu0
  %v4132 = vadd.f32 0.0, %v4131
  %v4133 = vpop.f32.mrb[0].mxu0
  %v4134 = vadd.f32 0.0, %v4133
  %v4135 = vpop.f32.mrb[0].mxu0
  %v4136 = vadd.f32 0.0, %v4135
  %v4137 = vpop.f32.mrb[0].mxu0
  %v4138 = vadd.f32 0.0, %v4137
  %4139 = vmatprep.mubr.bf16.mxu0 %v2275
  %4140 = vmatmul.mubr.bf16.gmra.mrb[0].mxu0 %v1516
  %v4141 = vpop.f32.mrb[0].mxu0
  %v4142 = vadd.f32 0.0, %v4141
  %v4143 = vpop.f32.mrb[0].mxu0
  %v4144 = vadd.f32 0.0, %v4143
  %v4145 = vpop.f32.mrb[0].mxu0
  %v4146 = vadd.f32 0.0, %v4145
  %v4147 = vpop.f32.mrb[0].mxu0
  %v4148 = vadd.f32 0.0, %v4147
  %4149 = vmatprep.mubr.bf16.mxu0 %v2755
  %4150 = vmatmul.mubr.bf16.gmra.mrb[0].mxu0 %v1526
  %v4151 = vpop.f32.mrb[0].mxu0
  %v4152 = vadd.f32 0.0, %v4151
  %v4153 = vpop.f32.mrb[0].mxu0
  %v4154 = vadd.f32 0.0, %v4153
  %v4155 = vpop.f32.mrb[0].mxu0
  %v4156 = vadd.f32 0.0, %v4155
  %v4157 = vpop.f32.mrb[0].mxu0
  %v4158 = vadd.f32 0.0, %v4157
  %4159 = vmatprep.mubr.bf16.mxu0 %v3841
  %4160 = vmatmul.mubr.bf16.gmra.mrb[0].mxu0 %v1530
  %v4161 = vpop.f32.mrb[0].mxu0
  %v4162 = vadd.f32 0.0, %v4161
  %v4163 = vpop.f32.mrb[0].mxu0
  %v4164 = vadd.f32 0.0, %v4163
  %v4165 = vpop.f32.mrb[0].mxu0
  %v4166 = vadd.f32 0.0, %v4165
  %v4167 = vpop.f32.mrb[0].mxu0
  %v4168 = vadd.f32 0.0, %v4167
  %4169 = vdwg.mxu0
  %v4170 = vadd.f32 %v3627, %v3878
  %v4171 = vadd.f32 %v3628, %v3880
  %v4172 = vadd.f32 %v3629, %v3882
  %v4173 = vadd.f32 %v3630, %v3884
  %v4174 = vadd.f32 %v3631, %v3888
  %v4175 = vadd.f32 %v3632, %v3890
  %v4176 = vadd.f32 %v3633, %v3892
  %v4177 = vadd.f32 %v3634, %v3894
  %v4178 = vadd.f32 %v3635, %v3898
  %v4179 = vadd.f32 %v3636, %v3900
  %v4180 = vadd.f32 %v3637, %v3902
  %v4181 = vadd.f32 %v3638, %v3904
  %v4182 = vadd.f32 %v3639, %v3908
  %v4183 = vadd.f32 %v3640, %v3910
  %v4184 = vadd.f32 %v3641, %v3912
  %v4185 = vadd.f32 %v3642, %v3914
  %v4186 = vadd.f32 %v3643, %v4132
  %v4187 = vadd.f32 %v3644, %v4134
  %v4188 = vadd.f32 %v3645, %v4136
  %v4189 = vadd.f32 %v3646, %v4138
  %v4190 = vadd.f32 %v3647, %v4142
  %v4191 = vadd.f32 %v3648, %v4144
  %v4192 = vadd.f32 %v3649, %v4146
  %v4193 = vadd.f32 %v3650, %v4148
  %v4194 = vadd.f32 %v3651, %v4152
  %v4195 = vadd.f32 %v3652, %v4154
  %v4196 = vadd.f32 %v3653, %v4156
  %v4197 = vadd.f32 %v3654, %v4158
  %v4198 = vadd.f32 %v3655, %v4162
  %v4199 = vadd.f32 %v3656, %v4164
  %v4200 = vadd.f32 %v3657, %v4166
  %v4201 = vadd.f32 %v3658, %v4168
  %v4202 = vmax.f32 %v4170, %v4186
  %v4203 = vmax.f32 %v4171, %v4187
  %v4204 = vmax.f32 %v4172, %v4188
  %v4205 = vmax.f32 %v4173, %v4189
  %v4206 = vmax.f32 %v4174, %v4190
  %v4207 = vmax.f32 %v4175, %v4191
  %v4208 = vmax.f32 %v4176, %v4192
  %v4209 = vmax.f32 %v4177, %v4193
  %v4210 = vmax.f32 %v4178, %v4194
  %v4211 = vmax.f32 %v4179, %v4195
  %v4212 = vmax.f32 %v4180, %v4196
  %v4213 = vmax.f32 %v4181, %v4197
  %v4214 = vmax.f32 %v4182, %v4198
  %v4215 = vmax.f32 %v4183, %v4199
  %v4216 = vmax.f32 %v4184, %v4200
  %v4217 = vmax.f32 %v4185, %v4201
  %4218 = vmatprep.subr.bf16.mxu0 %v1717
  %4219 = vmatpush1.bf16.msra.mxu0 %v1716
  %4220 = vmatprep.subr.bf16.mxu0 %v1719
  %4221 = vmatpush1.bf16.msra.mxu0 %v1718
  %4222 = vmatprep.subr.bf16.mxu0 %v1721
  %4223 = vmatpush1.bf16.msra.mxu0 %v1720
  %4224 = vmatprep.subr.bf16.mxu0 %v1723
  %4225 = vmatpush1.bf16.msra.mxu0 %v1722
  %4226 = vmatprep.subr.bf16.mxu0 %v1725
  %4227 = vmatpush1.bf16.msra.mxu0 %v1724
  %4228 = vmatprep.subr.bf16.mxu0 %v1727
  %4229 = vmatpush1.bf16.msra.mxu0 %v1726
  %4230 = vmatprep.subr.bf16.mxu0 %v1729
  %4231 = vmatpush1.bf16.msra.mxu0 %v1728
  %4232 = vmatprep.subr.bf16.mxu0 %v1731
  %4233 = vmatpush1.bf16.msra.mxu0 %v1730
  %4234 = vmatprep.subr.bf16.mxu0 %v1733
  %4235 = vmatpush1.bf16.msra.mxu0 %v1732
  %4236 = vmatprep.subr.bf16.mxu0 %v1735
  %4237 = vmatpush1.bf16.msra.mxu0 %v1734
  %4238 = vmatprep.subr.bf16.mxu0 %v1737
  %4239 = vmatpush1.bf16.msra.mxu0 %v1736
  %4240 = vmatprep.subr.bf16.mxu0 %v1739
  %4241 = vmatpush1.bf16.msra.mxu0 %v1738
  %4242 = vmatprep.subr.bf16.mxu0 %v1741
  %4243 = vmatpush1.bf16.msra.mxu0 %v1740
  %4244 = vmatprep.subr.bf16.mxu0 %v1743
  %4245 = vmatpush1.bf16.msra.mxu0 %v1742
  %4246 = vmatprep.subr.bf16.mxu0 %v1745
  %4247 = vmatpush1.bf16.msra.mxu0 %v1744
  %4248 = vmatprep.subr.bf16.mxu0 0
  %4249 = vmatpush1.bf16.msra.mxu0 0
  %4250 = vmatprep.mubr.bf16.mxu0 %v2269
  %4251 = vmatmul.mubr.bf16.gmra.mrb[0].mxu0 %v1512
  %v4252 = vpop.f32.mrb[0].mxu0
  %v4253 = vadd.f32 0.0, %v4252
  %v4254 = vpop.f32.mrb[0].mxu0
  %v4255 = vadd.f32 0.0, %v4254
  %v4256 = vpop.f32.mrb[0].mxu0
  %v4257 = vadd.f32 0.0, %v4256
  %v4258 = vpop.f32.mrb[0].mxu0
  %v4259 = vadd.f32 0.0, %v4258
  %4260 = vmatprep.mubr.bf16.mxu0 %v2272
  %4261 = vmatmul.mubr.bf16.gmra.mrb[0].mxu0 %v1514
  %v4262 = vpop.f32.mrb[0].mxu0
  %v4263 = vadd.f32 0.0, %v4262
  %v4264 = vpop.f32.mrb[0].mxu0
  %v4265 = vadd.f32 0.0, %v4264
  %v4266 = vpop.f32.mrb[0].mxu0
  %v4267 = vadd.f32 0.0, %v4266
  %v4268 = vpop.f32.mrb[0].mxu0
  %v4269 = vadd.f32 0.0, %v4268
  %4270 = vmatprep.mubr.bf16.mxu0 %v2275
  %4271 = vmatmul.mubr.bf16.gmra.mrb[0].mxu0 %v1516
  %v4272 = vpop.f32.mrb[0].mxu0
  %v4273 = vadd.f32 0.0, %v4272
  %v4274 = vpop.f32.mrb[0].mxu0
  %v4275 = vadd.f32 0.0, %v4274
  %v4276 = vpop.f32.mrb[0].mxu0
  %v4277 = vadd.f32 0.0, %v4276
  %v4278 = vpop.f32.mrb[0].mxu0
  %v4279 = vadd.f32 0.0, %v4278
  %4280 = vmatprep.mubr.bf16.mxu0 %v2755
  %4281 = vmatmul.mubr.bf16.gmra.mrb[0].mxu0 %v1526
  %v4282 = vpop.f32.mrb[0].mxu0
  %v4283 = vadd.f32 0.0, %v4282
  %v4284 = vpop.f32.mrb[0].mxu0
  %v4285 = vadd.f32 0.0, %v4284
  %v4286 = vpop.f32.mrb[0].mxu0
  %v4287 = vadd.f32 0.0, %v4286
  %v4288 = vpop.f32.mrb[0].mxu0
  %v4289 = vadd.f32 0.0, %v4288
  %4290 = vdwg.mxu0
  %4291 = vmatprep.subr.bf16.mxu0 %v1983
  %4292 = vmatpush1.bf16.msra.mxu0 %v1982
  %4293 = vmatprep.subr.bf16.mxu0 %v1985
  %4294 = vmatpush1.bf16.msra.mxu0 %v1984
  %4295 = vmatprep.subr.bf16.mxu0 %v1987
  %4296 = vmatpush1.bf16.msra.mxu0 %v1986
  %4297 = vmatprep.subr.bf16.mxu0 %v1989
  %4298 = vmatpush1.bf16.msra.mxu0 %v1988
  %4299 = vmatprep.subr.bf16.mxu0 %v1991
  %4300 = vmatpush1.bf16.msra.mxu0 %v1990
  %4301 = vmatprep.subr.bf16.mxu0 %v1993
  %4302 = vmatpush1.bf16.msra.mxu0 %v1992
  %4303 = vmatprep.subr.bf16.mxu0 %v1995
  %4304 = vmatpush1.bf16.msra.mxu0 %v1994
  %4305 = vmatprep.subr.bf16.mxu0 %v1997
  %4306 = vmatpush1.bf16.msra.mxu0 %v1996
  %4307 = vmatprep.subr.bf16.mxu0 %v1999
  %4308 = vmatpush1.bf16.msra.mxu0 %v1998
  %4309 = vmatprep.subr.bf16.mxu0 %v2001
  %4310 = vmatpush1.bf16.msra.mxu0 %v2000
  %4311 = vmatprep.subr.bf16.mxu0 %v2003
  %4312 = vmatpush1.bf16.msra.mxu0 %v2002
  %4313 = vmatprep.subr.bf16.mxu0 %v2005
  %4314 = vmatpush1.bf16.msra.mxu0 %v2004
  %4315 = vmatprep.subr.bf16.mxu0 %v2007
  %4316 = vmatpush1.bf16.msra.mxu0 %v2006
  %4317 = vmatprep.subr.bf16.mxu0 %v2009
  %4318 = vmatpush1.bf16.msra.mxu0 %v2008
  %4319 = vmatprep.subr.bf16.mxu0 %v2011
  %4320 = vmatpush1.bf16.msra.mxu0 %v2010
  %4321 = vmatprep.subr.bf16.mxu0 0
  %4322 = vmatpush1.bf16.msra.mxu0 0
  %4323 = vmatprep.mubr.bf16.mxu0 %v2269
  %4324 = vmatmul.mubr.bf16.gmra.mrb[0].mxu0 %v1512
  %v4325 = vpop.f32.mrb[0].mxu0
  %v4326 = vadd.f32 0.0, %v4325
  %v4327 = vpop.f32.mrb[0].mxu0
  %v4328 = vadd.f32 0.0, %v4327
  %v4329 = vpop.f32.mrb[0].mxu0
  %v4330 = vadd.f32 0.0, %v4329
  %v4331 = vpop.f32.mrb[0].mxu0
  %v4332 = vadd.f32 0.0, %v4331
  %4333 = vmatprep.mubr.bf16.mxu0 %v2272
  %4334 = vmatmul.mubr.bf16.gmra.mrb[0].mxu0 %v1514
  %v4335 = vpop.f32.mrb[0].mxu0
  %v4336 = vadd.f32 0.0, %v4335
  %v4337 = vpop.f32.mrb[0].mxu0
  %v4338 = vadd.f32 0.0, %v4337
  %v4339 = vpop.f32.mrb[0].mxu0
  %v4340 = vadd.f32 0.0, %v4339
  %v4341 = vpop.f32.mrb[0].mxu0
  %v4342 = vadd.f32 0.0, %v4341
  %4343 = vmatprep.mubr.bf16.mxu0 %v2275
  %4344 = vmatmul.mubr.bf16.gmra.mrb[0].mxu0 %v1516
  %v4345 = vpop.f32.mrb[0].mxu0
  %v4346 = vadd.f32 0.0, %v4345
  %v4347 = vpop.f32.mrb[0].mxu0
  %v4348 = vadd.f32 0.0, %v4347
  %v4349 = vpop.f32.mrb[0].mxu0
  %v4350 = vadd.f32 0.0, %v4349
  %v4351 = vpop.f32.mrb[0].mxu0
  %v4352 = vadd.f32 0.0, %v4351
  %4353 = vmatprep.mubr.bf16.mxu0 %v2755
  %4354 = vmatmul.mubr.bf16.gmra.mrb[0].mxu0 %v1526
  %v4355 = vpop.f32.mrb[0].mxu0
  %v4356 = vadd.f32 0.0, %v4355
  %v4357 = vpop.f32.mrb[0].mxu0
  %v4358 = vadd.f32 0.0, %v4357
  %v4359 = vpop.f32.mrb[0].mxu0
  %v4360 = vadd.f32 0.0, %v4359
  %v4361 = vpop.f32.mrb[0].mxu0
  %v4362 = vadd.f32 0.0, %v4361
  %4363 = vdwg.mxu0
  %4364 = vmatprep.subr.bf16.mxu0 %v2206
  %4365 = vmatpush1.bf16.msra.mxu0 %v2205
  %4366 = vmatprep.subr.bf16.mxu0 %v2208
  %4367 = vmatpush1.bf16.msra.mxu0 %v2207
  %4368 = vmatprep.subr.bf16.mxu0 %v2210
  %4369 = vmatpush1.bf16.msra.mxu0 %v2209
  %4370 = vmatprep.subr.bf16.mxu0 %v2212
  %4371 = vmatpush1.bf16.msra.mxu0 %v2211
  %4372 = vmatprep.subr.bf16.mxu0 %v2214
  %4373 = vmatpush1.bf16.msra.mxu0 %v2213
  %4374 = vmatprep.subr.bf16.mxu0 %v2216
  %4375 = vmatpush1.bf16.msra.mxu0 %v2215
  %4376 = vmatprep.subr.bf16.mxu0 %v2218
  %4377 = vmatpush1.bf16.msra.mxu0 %v2217
  %4378 = vmatprep.subr.bf16.mxu0 %v2220
  %4379 = vmatpush1.bf16.msra.mxu0 %v2219
  %4380 = vmatprep.subr.bf16.mxu0 %v2222
  %4381 = vmatpush1.bf16.msra.mxu0 %v2221
  %4382 = vmatprep.subr.bf16.mxu0 %v2224
  %4383 = vmatpush1.bf16.msra.mxu0 %v2223
  %4384 = vmatprep.subr.bf16.mxu0 %v2226
  %4385 = vmatpush1.bf16.msra.mxu0 %v2225
  %4386 = vmatprep.subr.bf16.mxu0 %v2228
  %4387 = vmatpush1.bf16.msra.mxu0 %v2227
  %4388 = vmatprep.subr.bf16.mxu0 %v2230
  %4389 = vmatpush1.bf16.msra.mxu0 %v2229
  %4390 = vmatprep.subr.bf16.mxu0 %v2232
  %4391 = vmatpush1.bf16.msra.mxu0 %v2231
  %4392 = vmatprep.subr.bf16.mxu0 %v2234
  %4393 = vmatpush1.bf16.msra.mxu0 %v2233
  %4394 = vmatprep.subr.bf16.mxu0 0
  %4395 = vmatpush1.bf16.msra.mxu0 0
  %4396 = vmatprep.mubr.bf16.mxu0 %v1777
  %4397 = vmatmul.mubr.bf16.gmra.mrb[0].mxu0 %v1518
  %v4398 = vpop.f32.mrb[0].mxu0
  %v4399 = vadd.f32 %v4253, %v4398
  %v4400 = vpop.f32.mrb[0].mxu0
  %v4401 = vadd.f32 %v4255, %v4400
  %v4402 = vpop.f32.mrb[0].mxu0
  %v4403 = vadd.f32 %v4257, %v4402
  %v4404 = vpop.f32.mrb[0].mxu0
  %v4405 = vadd.f32 %v4259, %v4404
  %4406 = vmatprep.mubr.bf16.mxu0 %v1780
  %4407 = vmatmul.mubr.bf16.gmra.mrb[0].mxu0 %v1520
  %v4408 = vpop.f32.mrb[0].mxu0
  %v4409 = vadd.f32 %v4263, %v4408
  %v4410 = vpop.f32.mrb[0].mxu0
  %v4411 = vadd.f32 %v4265, %v4410
  %v4412 = vpop.f32.mrb[0].mxu0
  %v4413 = vadd.f32 %v4267, %v4412
  %v4414 = vpop.f32.mrb[0].mxu0
  %v4415 = vadd.f32 %v4269, %v4414
  %4416 = vmatprep.mubr.bf16.mxu0 %v1783
  %4417 = vmatmul.mubr.bf16.gmra.mrb[0].mxu0 %v1522
  %v4418 = vpop.f32.mrb[0].mxu0
  %v4419 = vadd.f32 %v4273, %v4418
  %v4420 = vpop.f32.mrb[0].mxu0
  %v4421 = vadd.f32 %v4275, %v4420
  %v4422 = vpop.f32.mrb[0].mxu0
  %v4423 = vadd.f32 %v4277, %v4422
  %v4424 = vpop.f32.mrb[0].mxu0
  %v4425 = vadd.f32 %v4279, %v4424
  %4426 = vmatprep.mubr.bf16.mxu0 %v1786
  %4427 = vmatmul.mubr.bf16.gmra.mrb[0].mxu0 %v1524
  %v4428 = vpop.f32.mrb[0].mxu0
  %v4429 = vadd.f32 %v4283, %v4428
  %v4430 = vpop.f32.mrb[0].mxu0
  %v4431 = vadd.f32 %v4285, %v4430
  %v4432 = vpop.f32.mrb[0].mxu0
  %v4433 = vadd.f32 %v4287, %v4432
  %v4434 = vpop.f32.mrb[0].mxu0
  %v4435 = vadd.f32 %v4289, %v4434
  %4436 = vdwg.mxu0
  %4437 = vmatprep.subr.bf16.mxu0 %v2441
  %4438 = vmatpush1.bf16.msra.mxu0 %v2440
  %4439 = vmatprep.subr.bf16.mxu0 %v2443
  %4440 = vmatpush1.bf16.msra.mxu0 %v2442
  %4441 = vmatprep.subr.bf16.mxu0 %v2445
  %4442 = vmatpush1.bf16.msra.mxu0 %v2444
  %4443 = vmatprep.subr.bf16.mxu0 %v2447
  %4444 = vmatpush1.bf16.msra.mxu0 %v2446
  %4445 = vmatprep.subr.bf16.mxu0 %v2449
  %4446 = vmatpush1.bf16.msra.mxu0 %v2448
  %4447 = vmatprep.subr.bf16.mxu0 %v2451
  %4448 = vmatpush1.bf16.msra.mxu0 %v2450
  %4449 = vmatprep.subr.bf16.mxu0 %v2453
  %4450 = vmatpush1.bf16.msra.mxu0 %v2452
  %4451 = vmatprep.subr.bf16.mxu0 %v2455
  %4452 = vmatpush1.bf16.msra.mxu0 %v2454
  %4453 = vmatprep.subr.bf16.mxu0 %v2457
  %4454 = vmatpush1.bf16.msra.mxu0 %v2456
  %4455 = vmatprep.subr.bf16.mxu0 %v2459
  %4456 = vmatpush1.bf16.msra.mxu0 %v2458
  %4457 = vmatprep.subr.bf16.mxu0 %v2461
  %4458 = vmatpush1.bf16.msra.mxu0 %v2460
  %4459 = vmatprep.subr.bf16.mxu0 %v2463
  %4460 = vmatpush1.bf16.msra.mxu0 %v2462
  %4461 = vmatprep.subr.bf16.mxu0 %v2465
  %4462 = vmatpush1.bf16.msra.mxu0 %v2464
  %4463 = vmatprep.subr.bf16.mxu0 %v2467
  %4464 = vmatpush1.bf16.msra.mxu0 %v2466
  %4465 = vmatprep.subr.bf16.mxu0 %v2469
  %4466 = vmatpush1.bf16.msra.mxu0 %v2468
  %4467 = vmatprep.subr.bf16.mxu0 0
  %4468 = vmatpush1.bf16.msra.mxu0 0
  %4469 = vmatprep.mubr.bf16.mxu0 %v1777
  %4470 = vmatmul.mubr.bf16.gmra.mrb[0].mxu0 %v1518
  %v4471 = vpop.f32.mrb[0].mxu0
  %v4472 = vadd.f32 %v4326, %v4471
  %v4473 = vpop.f32.mrb[0].mxu0
  %v4474 = vadd.f32 %v4328, %v4473
  %v4475 = vpop.f32.mrb[0].mxu0
  %v4476 = vadd.f32 %v4330, %v4475
  %v4477 = vpop.f32.mrb[0].mxu0
  %v4478 = vadd.f32 %v4332, %v4477
  %4479 = vmatprep.mubr.bf16.mxu0 %v1780
  %4480 = vmatmul.mubr.bf16.gmra.mrb[0].mxu0 %v1520
  %v4481 = vpop.f32.mrb[0].mxu0
  %v4482 = vadd.f32 %v4336, %v4481
  %v4483 = vpop.f32.mrb[0].mxu0
  %v4484 = vadd.f32 %v4338, %v4483
  %v4485 = vpop.f32.mrb[0].mxu0
  %v4486 = vadd.f32 %v4340, %v4485
  %v4487 = vpop.f32.mrb[0].mxu0
  %v4488 = vadd.f32 %v4342, %v4487
  %4489 = vmatprep.mubr.bf16.mxu0 %v1783
  %4490 = vmatmul.mubr.bf16.gmra.mrb[0].mxu0 %v1522
  %v4491 = vpop.f32.mrb[0].mxu0
  %v4492 = vadd.f32 %v4346, %v4491
  %v4493 = vpop.f32.mrb[0].mxu0
  %v4494 = vadd.f32 %v4348, %v4493
  %v4495 = vpop.f32.mrb[0].mxu0
  %v4496 = vadd.f32 %v4350, %v4495
  %v4497 = vpop.f32.mrb[0].mxu0
  %v4498 = vadd.f32 %v4352, %v4497
  %4499 = vmatprep.mubr.bf16.mxu0 %v1786
  %4500 = vmatmul.mubr.bf16.gmra.mrb[0].mxu0 %v1524
  %v4501 = vpop.f32.mrb[0].mxu0
  %v4502 = vadd.f32 %v4356, %v4501
  %v4503 = vpop.f32.mrb[0].mxu0
  %v4504 = vadd.f32 %v4358, %v4503
  %v4505 = vpop.f32.mrb[0].mxu0
  %v4506 = vadd.f32 %v4360, %v4505
  %v4507 = vpop.f32.mrb[0].mxu0
  %v4508 = vadd.f32 %v4362, %v4507
  %4509 = vdwg.mxu0
  %4510 = vmatprep.subr.bf16.mxu0 %v2695
  %4511 = vmatpush1.bf16.msra.mxu0 %v2694
  %4512 = vmatprep.subr.bf16.mxu0 %v2697
  %4513 = vmatpush1.bf16.msra.mxu0 %v2696
  %4514 = vmatprep.subr.bf16.mxu0 %v2699
  %4515 = vmatpush1.bf16.msra.mxu0 %v2698
  %4516 = vmatprep.subr.bf16.mxu0 %v2701
  %4517 = vmatpush1.bf16.msra.mxu0 %v2700
  %4518 = vmatprep.subr.bf16.mxu0 %v2703
  %4519 = vmatpush1.bf16.msra.mxu0 %v2702
  %4520 = vmatprep.subr.bf16.mxu0 %v2705
  %4521 = vmatpush1.bf16.msra.mxu0 %v2704
  %4522 = vmatprep.subr.bf16.mxu0 %v2707
  %4523 = vmatpush1.bf16.msra.mxu0 %v2706
  %4524 = vmatprep.subr.bf16.mxu0 %v2709
  %4525 = vmatpush1.bf16.msra.mxu0 %v2708
  %4526 = vmatprep.subr.bf16.mxu0 %v2711
  %4527 = vmatpush1.bf16.msra.mxu0 %v2710
  %4528 = vmatprep.subr.bf16.mxu0 %v2713
  %4529 = vmatpush1.bf16.msra.mxu0 %v2712
  %4530 = vmatprep.subr.bf16.mxu0 %v2715
  %4531 = vmatpush1.bf16.msra.mxu0 %v2714
  %4532 = vmatprep.subr.bf16.mxu0 %v2717
  %4533 = vmatpush1.bf16.msra.mxu0 %v2716
  %4534 = vmatprep.subr.bf16.mxu0 %v2719
  %4535 = vmatpush1.bf16.msra.mxu0 %v2718
  %4536 = vmatprep.subr.bf16.mxu0 %v2721
  %4537 = vmatpush1.bf16.msra.mxu0 %v2720
  %4538 = vmatprep.subr.bf16.mxu0 %v2723
  %4539 = vmatpush1.bf16.msra.mxu0 %v2722
  %4540 = vmatprep.subr.bf16.mxu0 0
  %4541 = vmatpush1.bf16.msra.mxu0 0
  %4542 = vmatprep.mubr.bf16.mxu0 %v1780
  %4543 = vmatmul.mubr.bf16.gmra.mrb[0].mxu0 %v1520
  %v4544 = vpop.f32.mrb[0].mxu0
  %v4545 = vadd.f32 0.0, %v4544
  %v4546 = vpop.f32.mrb[0].mxu0
  %v4547 = vadd.f32 0.0, %v4546
  %v4548 = vpop.f32.mrb[0].mxu0
  %v4549 = vadd.f32 0.0, %v4548
  %v4550 = vpop.f32.mrb[0].mxu0
  %v4551 = vadd.f32 0.0, %v4550
  %4552 = vmatprep.mubr.bf16.mxu0 %v1783
  %4553 = vmatmul.mubr.bf16.gmra.mrb[0].mxu0 %v1522
  %v4554 = vpop.f32.mrb[0].mxu0
  %v4555 = vadd.f32 0.0, %v4554
  %v4556 = vpop.f32.mrb[0].mxu0
  %v4557 = vadd.f32 0.0, %v4556
  %v4558 = vpop.f32.mrb[0].mxu0
  %v4559 = vadd.f32 0.0, %v4558
  %v4560 = vpop.f32.mrb[0].mxu0
  %v4561 = vadd.f32 0.0, %v4560
  %4562 = vmatprep.mubr.bf16.mxu0 %v1786
  %4563 = vmatmul.mubr.bf16.gmra.mrb[0].mxu0 %v1524
  %v4564 = vpop.f32.mrb[0].mxu0
  %v4565 = vadd.f32 0.0, %v4564
  %v4566 = vpop.f32.mrb[0].mxu0
  %v4567 = vadd.f32 0.0, %v4566
  %v4568 = vpop.f32.mrb[0].mxu0
  %v4569 = vadd.f32 0.0, %v4568
  %v4570 = vpop.f32.mrb[0].mxu0
  %v4571 = vadd.f32 0.0, %v4570
  %4572 = vmatprep.mubr.bf16.mxu0 %v3298
  %4573 = vmatmul.mubr.bf16.gmra.mrb[0].mxu0 %v1528
  %v4574 = vpop.f32.mrb[0].mxu0
  %v4575 = vadd.f32 0.0, %v4574
  %v4576 = vpop.f32.mrb[0].mxu0
  %v4577 = vadd.f32 0.0, %v4576
  %v4578 = vpop.f32.mrb[0].mxu0
  %v4579 = vadd.f32 0.0, %v4578
  %v4580 = vpop.f32.mrb[0].mxu0
  %v4581 = vadd.f32 0.0, %v4580
  %4582 = vdwg.mxu0
  %4583 = vmatprep.subr.bf16.mxu0 %v2952
  %4584 = vmatpush1.bf16.msra.mxu0 %v2951
  %4585 = vmatprep.subr.bf16.mxu0 %v2954
  %4586 = vmatpush1.bf16.msra.mxu0 %v2953
  %4587 = vmatprep.subr.bf16.mxu0 %v2956
  %4588 = vmatpush1.bf16.msra.mxu0 %v2955
  %4589 = vmatprep.subr.bf16.mxu0 %v2958
  %4590 = vmatpush1.bf16.msra.mxu0 %v2957
  %4591 = vmatprep.subr.bf16.mxu0 %v2960
  %4592 = vmatpush1.bf16.msra.mxu0 %v2959
  %4593 = vmatprep.subr.bf16.mxu0 %v2962
  %4594 = vmatpush1.bf16.msra.mxu0 %v2961
  %4595 = vmatprep.subr.bf16.mxu0 %v2964
  %4596 = vmatpush1.bf16.msra.mxu0 %v2963
  %4597 = vmatprep.subr.bf16.mxu0 %v2966
  %4598 = vmatpush1.bf16.msra.mxu0 %v2965
  %4599 = vmatprep.subr.bf16.mxu0 %v2968
  %4600 = vmatpush1.bf16.msra.mxu0 %v2967
  %4601 = vmatprep.subr.bf16.mxu0 %v2970
  %4602 = vmatpush1.bf16.msra.mxu0 %v2969
  %4603 = vmatprep.subr.bf16.mxu0 %v2972
  %4604 = vmatpush1.bf16.msra.mxu0 %v2971
  %4605 = vmatprep.subr.bf16.mxu0 %v2974
  %4606 = vmatpush1.bf16.msra.mxu0 %v2973
  %4607 = vmatprep.subr.bf16.mxu0 %v2976
  %4608 = vmatpush1.bf16.msra.mxu0 %v2975
  %4609 = vmatprep.subr.bf16.mxu0 %v2978
  %4610 = vmatpush1.bf16.msra.mxu0 %v2977
  %4611 = vmatprep.subr.bf16.mxu0 %v2980
  %4612 = vmatpush1.bf16.msra.mxu0 %v2979
  %4613 = vmatprep.subr.bf16.mxu0 0
  %4614 = vmatpush1.bf16.msra.mxu0 0
  %4615 = vmatprep.mubr.bf16.mxu0 %v1780
  %4616 = vmatmul.mubr.bf16.gmra.mrb[0].mxu0 %v1520
  %v4617 = vpop.f32.mrb[0].mxu0
  %v4618 = vadd.f32 0.0, %v4617
  %v4619 = vpop.f32.mrb[0].mxu0
  %v4620 = vadd.f32 0.0, %v4619
  %v4621 = vpop.f32.mrb[0].mxu0
  %v4622 = vadd.f32 0.0, %v4621
  %v4623 = vpop.f32.mrb[0].mxu0
  %v4624 = vadd.f32 0.0, %v4623
  %4625 = vmatprep.mubr.bf16.mxu0 %v1783
  %4626 = vmatmul.mubr.bf16.gmra.mrb[0].mxu0 %v1522
  %v4627 = vpop.f32.mrb[0].mxu0
  %v4628 = vadd.f32 0.0, %v4627
  %v4629 = vpop.f32.mrb[0].mxu0
  %v4630 = vadd.f32 0.0, %v4629
  %v4631 = vpop.f32.mrb[0].mxu0
  %v4632 = vadd.f32 0.0, %v4631
  %v4633 = vpop.f32.mrb[0].mxu0
  %v4634 = vadd.f32 0.0, %v4633
  %4635 = vmatprep.mubr.bf16.mxu0 %v1786
  %4636 = vmatmul.mubr.bf16.gmra.mrb[0].mxu0 %v1524
  %v4637 = vpop.f32.mrb[0].mxu0
  %v4638 = vadd.f32 0.0, %v4637
  %v4639 = vpop.f32.mrb[0].mxu0
  %v4640 = vadd.f32 0.0, %v4639
  %v4641 = vpop.f32.mrb[0].mxu0
  %v4642 = vadd.f32 0.0, %v4641
  %v4643 = vpop.f32.mrb[0].mxu0
  %v4644 = vadd.f32 0.0, %v4643
  %4645 = vmatprep.mubr.bf16.mxu0 %v3298
  %4646 = vmatmul.mubr.bf16.gmra.mrb[0].mxu0 %v1528
  %v4647 = vpop.f32.mrb[0].mxu0
  %v4648 = vadd.f32 0.0, %v4647
  %v4649 = vpop.f32.mrb[0].mxu0
  %v4650 = vadd.f32 0.0, %v4649
  %v4651 = vpop.f32.mrb[0].mxu0
  %v4652 = vadd.f32 0.0, %v4651
  %v4653 = vpop.f32.mrb[0].mxu0
  %v4654 = vadd.f32 0.0, %v4653
  %4655 = vdwg.mxu0
  %v4656 = vadd.f32 %v4399, %v4545
  %v4657 = vadd.f32 %v4401, %v4547
  %v4658 = vadd.f32 %v4403, %v4549
  %v4659 = vadd.f32 %v4405, %v4551
  %v4660 = vadd.f32 %v4409, %v4555
  %v4661 = vadd.f32 %v4411, %v4557
  %v4662 = vadd.f32 %v4413, %v4559
  %v4663 = vadd.f32 %v4415, %v4561
  %v4664 = vadd.f32 %v4419, %v4565
  %v4665 = vadd.f32 %v4421, %v4567
  %v4666 = vadd.f32 %v4423, %v4569
  %v4667 = vadd.f32 %v4425, %v4571
  %v4668 = vadd.f32 %v4429, %v4575
  %v4669 = vadd.f32 %v4431, %v4577
  %v4670 = vadd.f32 %v4433, %v4579
  %v4671 = vadd.f32 %v4435, %v4581
  %v4672 = vadd.f32 %v4472, %v4618
  %v4673 = vadd.f32 %v4474, %v4620
  %v4674 = vadd.f32 %v4476, %v4622
  %v4675 = vadd.f32 %v4478, %v4624
  %v4676 = vadd.f32 %v4482, %v4628
  %v4677 = vadd.f32 %v4484, %v4630
  %v4678 = vadd.f32 %v4486, %v4632
  %v4679 = vadd.f32 %v4488, %v4634
  %v4680 = vadd.f32 %v4492, %v4638
  %v4681 = vadd.f32 %v4494, %v4640
  %v4682 = vadd.f32 %v4496, %v4642
  %v4683 = vadd.f32 %v4498, %v4644
  %v4684 = vadd.f32 %v4502, %v4648
  %v4685 = vadd.f32 %v4504, %v4650
  %v4686 = vadd.f32 %v4506, %v4652
  %v4687 = vadd.f32 %v4508, %v4654
  %4688 = vmatprep.subr.bf16.mxu0 %v3238
  %4689 = vmatpush1.bf16.msra.mxu0 %v3237
  %4690 = vmatprep.subr.bf16.mxu0 %v3240
  %4691 = vmatpush1.bf16.msra.mxu0 %v3239
  %4692 = vmatprep.subr.bf16.mxu0 %v3242
  %4693 = vmatpush1.bf16.msra.mxu0 %v3241
  %4694 = vmatprep.subr.bf16.mxu0 %v3244
  %4695 = vmatpush1.bf16.msra.mxu0 %v3243
  %4696 = vmatprep.subr.bf16.mxu0 %v3246
  %4697 = vmatpush1.bf16.msra.mxu0 %v3245
  %4698 = vmatprep.subr.bf16.mxu0 %v3248
  %4699 = vmatpush1.bf16.msra.mxu0 %v3247
  %4700 = vmatprep.subr.bf16.mxu0 %v3250
  %4701 = vmatpush1.bf16.msra.mxu0 %v3249
  %4702 = vmatprep.subr.bf16.mxu0 %v3252
  %4703 = vmatpush1.bf16.msra.mxu0 %v3251
  %4704 = vmatprep.subr.bf16.mxu0 %v3254
  %4705 = vmatpush1.bf16.msra.mxu0 %v3253
  %4706 = vmatprep.subr.bf16.mxu0 %v3256
  %4707 = vmatpush1.bf16.msra.mxu0 %v3255
  %4708 = vmatprep.subr.bf16.mxu0 %v3258
  %4709 = vmatpush1.bf16.msra.mxu0 %v3257
  %4710 = vmatprep.subr.bf16.mxu0 %v3260
  %4711 = vmatpush1.bf16.msra.mxu0 %v3259
  %4712 = vmatprep.subr.bf16.mxu0 %v3262
  %4713 = vmatpush1.bf16.msra.mxu0 %v3261
  %4714 = vmatprep.subr.bf16.mxu0 %v3264
  %4715 = vmatpush1.bf16.msra.mxu0 %v3263
  %4716 = vmatprep.subr.bf16.mxu0 %v3266
  %4717 = vmatpush1.bf16.msra.mxu0 %v3265
  %4718 = vmatprep.subr.bf16.mxu0 0
  %4719 = vmatpush1.bf16.msra.mxu0 0
  %4720 = vmatprep.mubr.bf16.mxu0 %v2272
  %4721 = vmatmul.mubr.bf16.gmra.mrb[0].mxu0 %v1514
  %v4722 = vpop.f32.mrb[0].mxu0
  %v4723 = vadd.f32 0.0, %v4722
  %v4724 = vpop.f32.mrb[0].mxu0
  %v4725 = vadd.f32 0.0, %v4724
  %v4726 = vpop.f32.mrb[0].mxu0
  %v4727 = vadd.f32 0.0, %v4726
  %v4728 = vpop.f32.mrb[0].mxu0
  %v4729 = vadd.f32 0.0, %v4728
  %4730 = vmatprep.mubr.bf16.mxu0 %v2275
  %4731 = vmatmul.mubr.bf16.gmra.mrb[0].mxu0 %v1516
  %v4732 = vpop.f32.mrb[0].mxu0
  %v4733 = vadd.f32 0.0, %v4732
  %v4734 = vpop.f32.mrb[0].mxu0
  %v4735 = vadd.f32 0.0, %v4734
  %v4736 = vpop.f32.mrb[0].mxu0
  %v4737 = vadd.f32 0.0, %v4736
  %v4738 = vpop.f32.mrb[0].mxu0
  %v4739 = vadd.f32 0.0, %v4738
  %4740 = vmatprep.mubr.bf16.mxu0 %v2755
  %4741 = vmatmul.mubr.bf16.gmra.mrb[0].mxu0 %v1526
  %v4742 = vpop.f32.mrb[0].mxu0
  %v4743 = vadd.f32 0.0, %v4742
  %v4744 = vpop.f32.mrb[0].mxu0
  %v4745 = vadd.f32 0.0, %v4744
  %v4746 = vpop.f32.mrb[0].mxu0
  %v4747 = vadd.f32 0.0, %v4746
  %v4748 = vpop.f32.mrb[0].mxu0
  %v4749 = vadd.f32 0.0, %v4748
  %4750 = vmatprep.mubr.bf16.mxu0 %v3841
  %4751 = vmatmul.mubr.bf16.gmra.mrb[0].mxu0 %v1530
  %v4752 = vpop.f32.mrb[0].mxu0
  %v4753 = vadd.f32 0.0, %v4752
  %v4754 = vpop.f32.mrb[0].mxu0
  %v4755 = vadd.f32 0.0, %v4754
  %v4756 = vpop.f32.mrb[0].mxu0
  %v4757 = vadd.f32 0.0, %v4756
  %v4758 = vpop.f32.mrb[0].mxu0
  %v4759 = vadd.f32 0.0, %v4758
  %4760 = vdwg.mxu0
  %4761 = vmatprep.subr.bf16.mxu0 %v3495
  %4762 = vmatpush1.bf16.msra.mxu0 %v3494
  %4763 = vmatprep.subr.bf16.mxu0 %v3497
  %4764 = vmatpush1.bf16.msra.mxu0 %v3496
  %4765 = vmatprep.subr.bf16.mxu0 %v3499
  %4766 = vmatpush1.bf16.msra.mxu0 %v3498
  %4767 = vmatprep.subr.bf16.mxu0 %v3501
  %4768 = vmatpush1.bf16.msra.mxu0 %v3500
  %4769 = vmatprep.subr.bf16.mxu0 %v3503
  %4770 = vmatpush1.bf16.msra.mxu0 %v3502
  %4771 = vmatprep.subr.bf16.mxu0 %v3505
  %4772 = vmatpush1.bf16.msra.mxu0 %v3504
  %4773 = vmatprep.subr.bf16.mxu0 %v3507
  %4774 = vmatpush1.bf16.msra.mxu0 %v3506
  %4775 = vmatprep.subr.bf16.mxu0 %v3509
  %4776 = vmatpush1.bf16.msra.mxu0 %v3508
  %4777 = vmatprep.subr.bf16.mxu0 %v3511
  %4778 = vmatpush1.bf16.msra.mxu0 %v3510
  %4779 = vmatprep.subr.bf16.mxu0 %v3513
  %4780 = vmatpush1.bf16.msra.mxu0 %v3512
  %4781 = vmatprep.subr.bf16.mxu0 %v3515
  %4782 = vmatpush1.bf16.msra.mxu0 %v3514
  %4783 = vmatprep.subr.bf16.mxu0 %v3517
  %4784 = vmatpush1.bf16.msra.mxu0 %v3516
  %4785 = vmatprep.subr.bf16.mxu0 %v3519
  %4786 = vmatpush1.bf16.msra.mxu0 %v3518
  %4787 = vmatprep.subr.bf16.mxu0 %v3521
  %4788 = vmatpush1.bf16.msra.mxu0 %v3520
  %4789 = vmatprep.subr.bf16.mxu0 %v3523
  %4790 = vmatpush1.bf16.msra.mxu0 %v3522
  %4791 = vmatprep.subr.bf16.mxu0 0
  %4792 = vmatpush1.bf16.msra.mxu0 0
  %4793 = vmatprep.mubr.bf16.mxu0 %v2272
  %4794 = vmatmul.mubr.bf16.gmra.mrb[0].mxu0 %v1514
  %v4795 = vpop.f32.mrb[0].mxu0
  %v4796 = vadd.f32 0.0, %v4795
  %v4797 = vpop.f32.mrb[0].mxu0
  %v4798 = vadd.f32 0.0, %v4797
  %v4799 = vpop.f32.mrb[0].mxu0
  %v4800 = vadd.f32 0.0, %v4799
  %v4801 = vpop.f32.mrb[0].mxu0
  %v4802 = vadd.f32 0.0, %v4801
  %4803 = vmatprep.mubr.bf16.mxu0 %v2275
  %4804 = vmatmul.mubr.bf16.gmra.mrb[0].mxu0 %v1516
  %v4805 = vpop.f32.mrb[0].mxu0
  %v4806 = vadd.f32 0.0, %v4805
  %v4807 = vpop.f32.mrb[0].mxu0
  %v4808 = vadd.f32 0.0, %v4807
  %v4809 = vpop.f32.mrb[0].mxu0
  %v4810 = vadd.f32 0.0, %v4809
  %v4811 = vpop.f32.mrb[0].mxu0
  %v4812 = vadd.f32 0.0, %v4811
  %4813 = vmatprep.mubr.bf16.mxu0 %v2755
  %4814 = vmatmul.mubr.bf16.gmra.mrb[0].mxu0 %v1526
  %v4815 = vpop.f32.mrb[0].mxu0
  %v4816 = vadd.f32 0.0, %v4815
  %v4817 = vpop.f32.mrb[0].mxu0
  %v4818 = vadd.f32 0.0, %v4817
  %v4819 = vpop.f32.mrb[0].mxu0
  %v4820 = vadd.f32 0.0, %v4819
  %v4821 = vpop.f32.mrb[0].mxu0
  %v4822 = vadd.f32 0.0, %v4821
  %4823 = vmatprep.mubr.bf16.mxu0 %v3841
  %4824 = vmatmul.mubr.bf16.gmra.mrb[0].mxu0 %v1530
  %v4825 = vpop.f32.mrb[0].mxu0
  %v4826 = vadd.f32 0.0, %v4825
  %v4827 = vpop.f32.mrb[0].mxu0
  %v4828 = vadd.f32 0.0, %v4827
  %v4829 = vpop.f32.mrb[0].mxu0
  %v4830 = vadd.f32 0.0, %v4829
  %v4831 = vpop.f32.mrb[0].mxu0
  %v4832 = vadd.f32 0.0, %v4831
  %4833 = vdwg.mxu0
  %v4834 = vadd.f32 %v4656, %v4723
  %v4835 = vadd.f32 %v4657, %v4725
  %v4836 = vadd.f32 %v4658, %v4727
  %v4837 = vadd.f32 %v4659, %v4729
  %v4838 = vadd.f32 %v4660, %v4733
  %v4839 = vadd.f32 %v4661, %v4735
  %v4840 = vadd.f32 %v4662, %v4737
  %v4841 = vadd.f32 %v4663, %v4739
  %v4842 = vadd.f32 %v4664, %v4743
  %v4843 = vadd.f32 %v4665, %v4745
  %v4844 = vadd.f32 %v4666, %v4747
  %v4845 = vadd.f32 %v4667, %v4749
  %v4846 = vadd.f32 %v4668, %v4753
  %v4847 = vadd.f32 %v4669, %v4755
  %v4848 = vadd.f32 %v4670, %v4757
  %v4849 = vadd.f32 %v4671, %v4759
  %v4850 = vadd.f32 %v4672, %v4796
  %v4851 = vadd.f32 %v4673, %v4798
  %v4852 = vadd.f32 %v4674, %v4800
  %v4853 = vadd.f32 %v4675, %v4802
  %v4854 = vadd.f32 %v4676, %v4806
  %v4855 = vadd.f32 %v4677, %v4808
  %v4856 = vadd.f32 %v4678, %v4810
  %v4857 = vadd.f32 %v4679, %v4812
  %v4858 = vadd.f32 %v4680, %v4816
  %v4859 = vadd.f32 %v4681, %v4818
  %v4860 = vadd.f32 %v4682, %v4820
  %v4861 = vadd.f32 %v4683, %v4822
  %v4862 = vadd.f32 %v4684, %v4826
  %v4863 = vadd.f32 %v4685, %v4828
  %v4864 = vadd.f32 %v4686, %v4830
  %v4865 = vadd.f32 %v4687, %v4832
  %v4867 = vsel %vm1486, %v1533, 0
  %4869 = vmatprep.subr.bf16.mxu0 %v3781
  %4870 = vmatpush1.bf16.msra.mxu0 %v3780
  %4871 = vmatprep.subr.bf16.mxu0 %v3783
  %4872 = vmatpush1.bf16.msra.mxu0 %v3782
  %4873 = vmatprep.subr.bf16.mxu0 %v3785
  %4874 = vmatpush1.bf16.msra.mxu0 %v3784
  %4875 = vmatprep.subr.bf16.mxu0 %v3787
  %4876 = vmatpush1.bf16.msra.mxu0 %v3786
  %4877 = vmatprep.subr.bf16.mxu0 %v3789
  %4878 = vmatpush1.bf16.msra.mxu0 %v3788
  %4879 = vmatprep.subr.bf16.mxu0 %v3791
  %4880 = vmatpush1.bf16.msra.mxu0 %v3790
  %4881 = vmatprep.subr.bf16.mxu0 %v3793
  %4882 = vmatpush1.bf16.msra.mxu0 %v3792
  %4883 = vmatprep.subr.bf16.mxu0 %v3795
  %4884 = vmatpush1.bf16.msra.mxu0 %v3794
  %4885 = vmatprep.subr.bf16.mxu0 %v3797
  %4886 = vmatpush1.bf16.msra.mxu0 %v3796
  %4887 = vmatprep.subr.bf16.mxu0 %v3799
  %4888 = vmatpush1.bf16.msra.mxu0 %v3798
  %4889 = vmatprep.subr.bf16.mxu0 %v3801
  %4890 = vmatpush1.bf16.msra.mxu0 %v3800
  %4891 = vmatprep.subr.bf16.mxu0 %v3803
  %4892 = vmatpush1.bf16.msra.mxu0 %v3802
  %4893 = vmatprep.subr.bf16.mxu0 %v3805
  %4894 = vmatpush1.bf16.msra.mxu0 %v3804
  %4895 = vmatprep.subr.bf16.mxu0 %v3807
  %4896 = vmatpush1.bf16.msra.mxu0 %v3806
  %4897 = vmatprep.subr.bf16.mxu0 %v3809
  %4898 = vmatpush1.bf16.msra.mxu0 %v3808
  %4899 = vmatprep.subr.bf16.mxu0 0
  %4900 = vmatpush1.bf16.msra.mxu0 0
  %4901 = vmatprep.mubr.bf16.mxu0 %v1783
  %4902 = vmatmul.mubr.bf16.gmra.mrb[0].mxu0 %v1522
  %v4903 = vpop.f32.mrb[0].mxu0
  %v4904 = vadd.f32 0.0, %v4903
  %v4905 = vpop.f32.mrb[0].mxu0
  %v4906 = vadd.f32 0.0, %v4905
  %v4907 = vpop.f32.mrb[0].mxu0
  %v4908 = vadd.f32 0.0, %v4907
  %v4909 = vpop.f32.mrb[0].mxu0
  %v4910 = vadd.f32 0.0, %v4909
  %4911 = vmatprep.mubr.bf16.mxu0 %v1786
  %4912 = vmatmul.mubr.bf16.gmra.mrb[0].mxu0 %v1524
  %v4913 = vpop.f32.mrb[0].mxu0
  %v4914 = vadd.f32 0.0, %v4913
  %v4915 = vpop.f32.mrb[0].mxu0
  %v4916 = vadd.f32 0.0, %v4915
  %v4917 = vpop.f32.mrb[0].mxu0
  %v4918 = vadd.f32 0.0, %v4917
  %v4919 = vpop.f32.mrb[0].mxu0
  %v4920 = vadd.f32 0.0, %v4919
  %4921 = vmatprep.mubr.bf16.mxu0 %v3298
  %4922 = vmatmul.mubr.bf16.gmra.mrb[0].mxu0 %v1528
  %v4923 = vpop.f32.mrb[0].mxu0
  %v4924 = vadd.f32 0.0, %v4923
  %v4925 = vpop.f32.mrb[0].mxu0
  %v4926 = vadd.f32 0.0, %v4925
  %v4927 = vpop.f32.mrb[0].mxu0
  %v4928 = vadd.f32 0.0, %v4927
  %v4929 = vpop.f32.mrb[0].mxu0
  %v4930 = vadd.f32 0.0, %v4929
  %4931 = vmatprep.mubr.bf16.mxu0 %v4867
  %4932 = vmatmul.mubr.bf16.gmra.mrb[0].mxu0 %v1532
  %v4933 = vpop.f32.mrb[0].mxu0
  %v4934 = vadd.f32 0.0, %v4933
  %v4935 = vpop.f32.mrb[0].mxu0
  %v4936 = vadd.f32 0.0, %v4935
  %v4937 = vpop.f32.mrb[0].mxu0
  %v4938 = vadd.f32 0.0, %v4937
  %v4939 = vpop.f32.mrb[0].mxu0
  %v4940 = vadd.f32 0.0, %v4939
  %4941 = vdwg.mxu0
  %4942 = vmatprep.subr.bf16.mxu0 %v4038
  %4943 = vmatpush1.bf16.msra.mxu0 %v4037
  %4944 = vmatprep.subr.bf16.mxu0 %v4040
  %4945 = vmatpush1.bf16.msra.mxu0 %v4039
  %4946 = vmatprep.subr.bf16.mxu0 %v4042
  %4947 = vmatpush1.bf16.msra.mxu0 %v4041
  %4948 = vmatprep.subr.bf16.mxu0 %v4044
  %4949 = vmatpush1.bf16.msra.mxu0 %v4043
  %4950 = vmatprep.subr.bf16.mxu0 %v4046
  %4951 = vmatpush1.bf16.msra.mxu0 %v4045
  %4952 = vmatprep.subr.bf16.mxu0 %v4048
  %4953 = vmatpush1.bf16.msra.mxu0 %v4047
  %4954 = vmatprep.subr.bf16.mxu0 %v4050
  %4955 = vmatpush1.bf16.msra.mxu0 %v4049
  %4956 = vmatprep.subr.bf16.mxu0 %v4052
  %4957 = vmatpush1.bf16.msra.mxu0 %v4051
  %4958 = vmatprep.subr.bf16.mxu0 %v4054
  %4959 = vmatpush1.bf16.msra.mxu0 %v4053
  %4960 = vmatprep.subr.bf16.mxu0 %v4056
  %4961 = vmatpush1.bf16.msra.mxu0 %v4055
  %4962 = vmatprep.subr.bf16.mxu0 %v4058
  %4963 = vmatpush1.bf16.msra.mxu0 %v4057
  %4964 = vmatprep.subr.bf16.mxu0 %v4060
  %4965 = vmatpush1.bf16.msra.mxu0 %v4059
  %4966 = vmatprep.subr.bf16.mxu0 %v4062
  %4967 = vmatpush1.bf16.msra.mxu0 %v4061
  %4968 = vmatprep.subr.bf16.mxu0 %v4064
  %4969 = vmatpush1.bf16.msra.mxu0 %v4063
  %4970 = vmatprep.subr.bf16.mxu0 %v4066
  %4971 = vmatpush1.bf16.msra.mxu0 %v4065
  %4972 = vmatprep.subr.bf16.mxu0 0
  %4973 = vmatpush1.bf16.msra.mxu0 0
  %4974 = vmatprep.mubr.bf16.mxu0 %v1783
  %4975 = vmatmul.mubr.bf16.gmra.mrb[0].mxu0 %v1522
  %v4976 = vpop.f32.mrb[0].mxu0
  %v4977 = vadd.f32 0.0, %v4976
  %v4978 = vpop.f32.mrb[0].mxu0
  %v4979 = vadd.f32 0.0, %v4978
  %v4980 = vpop.f32.mrb[0].mxu0
  %v4981 = vadd.f32 0.0, %v4980
  %v4982 = vpop.f32.mrb[0].mxu0
  %v4983 = vadd.f32 0.0, %v4982
  %4984 = vmatprep.mubr.bf16.mxu0 %v1786
  %4985 = vmatmul.mubr.bf16.gmra.mrb[0].mxu0 %v1524
  %v4986 = vpop.f32.mrb[0].mxu0
  %v4987 = vadd.f32 0.0, %v4986
  %v4988 = vpop.f32.mrb[0].mxu0
  %v4989 = vadd.f32 0.0, %v4988
  %v4990 = vpop.f32.mrb[0].mxu0
  %v4991 = vadd.f32 0.0, %v4990
  %v4992 = vpop.f32.mrb[0].mxu0
  %v4993 = vadd.f32 0.0, %v4992
  %4994 = vmatprep.mubr.bf16.mxu0 %v3298
  %4995 = vmatmul.mubr.bf16.gmra.mrb[0].mxu0 %v1528
  %v4996 = vpop.f32.mrb[0].mxu0
  %v4997 = vadd.f32 0.0, %v4996
  %v4998 = vpop.f32.mrb[0].mxu0
  %v4999 = vadd.f32 0.0, %v4998
  %v5000 = vpop.f32.mrb[0].mxu0
  %v5001 = vadd.f32 0.0, %v5000
  %v5002 = vpop.f32.mrb[0].mxu0
  %v5003 = vadd.f32 0.0, %v5002
  %5004 = vmatprep.mubr.bf16.mxu0 %v4867
  %5005 = vmatmul.mubr.bf16.gmra.mrb[0].mxu0 %v1532
  %v5006 = vpop.f32.mrb[0].mxu0
  %v5007 = vadd.f32 0.0, %v5006
  %v5008 = vpop.f32.mrb[0].mxu0
  %v5009 = vadd.f32 0.0, %v5008
  %v5010 = vpop.f32.mrb[0].mxu0
  %v5011 = vadd.f32 0.0, %v5010
  %v5012 = vpop.f32.mrb[0].mxu0
  %v5013 = vadd.f32 0.0, %v5012
  %5014 = vdwg.mxu0
  %v5015 = vadd.f32 %v4834, %v4904
  %v5016 = vadd.f32 %v4835, %v4906
  %v5017 = vadd.f32 %v4836, %v4908
  %v5018 = vadd.f32 %v4837, %v4910
  %v5019 = vadd.f32 %v4838, %v4914
  %v5020 = vadd.f32 %v4839, %v4916
  %v5021 = vadd.f32 %v4840, %v4918
  %v5022 = vadd.f32 %v4841, %v4920
  %v5023 = vadd.f32 %v4842, %v4924
  %v5024 = vadd.f32 %v4843, %v4926
  %v5025 = vadd.f32 %v4844, %v4928
  %v5026 = vadd.f32 %v4845, %v4930
  %v5027 = vadd.f32 %v4846, %v4934
  %v5028 = vadd.f32 %v4847, %v4936
  %v5029 = vadd.f32 %v4848, %v4938
  %v5030 = vadd.f32 %v4849, %v4940
  %v5031 = vadd.f32 %v4850, %v4977
  %v5032 = vadd.f32 %v4851, %v4979
  %v5033 = vadd.f32 %v4852, %v4981
  %v5034 = vadd.f32 %v4853, %v4983
  %v5035 = vadd.f32 %v4854, %v4987
  %v5036 = vadd.f32 %v4855, %v4989
  %v5037 = vadd.f32 %v4856, %v4991
  %v5038 = vadd.f32 %v4857, %v4993
  %v5039 = vadd.f32 %v4858, %v4997
  %v5040 = vadd.f32 %v4859, %v4999
  %v5041 = vadd.f32 %v4860, %v5001
  %v5042 = vadd.f32 %v4861, %v5003
  %v5043 = vadd.f32 %v4862, %v5007
  %v5044 = vadd.f32 %v4863, %v5009
  %v5045 = vadd.f32 %v4864, %v5011
  %v5046 = vadd.f32 %v4865, %v5013
  %v5047 = vmax.f32 %v5015, %v5031
  %v5048 = vmax.f32 %v5016, %v5032
  %v5049 = vmax.f32 %v5017, %v5033
  %v5050 = vmax.f32 %v5018, %v5034
  %v5051 = vmax.f32 %v5019, %v5035
  %v5052 = vmax.f32 %v5020, %v5036
  %v5053 = vmax.f32 %v5021, %v5037
  %v5054 = vmax.f32 %v5022, %v5038
  %v5055 = vmax.f32 %v5023, %v5039
  %v5056 = vmax.f32 %v5024, %v5040
  %v5057 = vmax.f32 %v5025, %v5041
  %v5058 = vmax.f32 %v5026, %v5042
  %v5059 = vmax.f32 %v5027, %v5043
  %v5060 = vmax.f32 %v5028, %v5044
  %v5061 = vmax.f32 %v5029, %v5045
  %v5062 = vmax.f32 %v5030, %v5046
  %v5063 = vmax.f32 %v4202, %v5047
  %v5064 = vmax.f32 %v4203, %v5048
  %v5065 = vmax.f32 %v4204, %v5049
  %v5066 = vmax.f32 %v4205, %v5050
  %v5067 = vmax.f32 %v4206, %v5051
  %v5068 = vmax.f32 %v4207, %v5052
  %v5069 = vmax.f32 %v4208, %v5053
  %v5070 = vmax.f32 %v4209, %v5054
  %v5071 = vmax.f32 %v4210, %v5055
  %v5072 = vmax.f32 %v4211, %v5056
  %v5073 = vmax.f32 %v4212, %v5057
  %v5074 = vmax.f32 %v4213, %v5058
  %v5075 = vmax.f32 %v4214, %v5059
  %v5076 = vmax.f32 %v4215, %v5060
  %v5077 = vmax.f32 %v4216, %v5061
  %v5078 = vmax.f32 %v4217, %v5062
  %v5079 = vld [vmem:[%s4] sm:$0x3]
  %v5081 = vlaneseq
  %v5082 = vshrl.u32 %v5081, 7
  %v5083 = vsub.s32 0, %v5082
  %v5084 = vrot.slane %v5079, %v5083
  %v5085 = vlaneseq
  %v5086 = vshrl.u32 %v5085, 7
  %v5087 = vsub.s32 1, %v5086
  %v5088 = vrot.slane %v5079, %v5087
  %v5091 = vadd.f32 %v5063, %v5084
  %v5092 = vadd.f32 %v5064, %v5088
  %v5093 = vadd.f32 %v5065, %v5084
  %v5094 = vadd.f32 %v5066, %v5088
  %v5095 = vadd.f32 %v5067, %v5084
  %v5096 = vadd.f32 %v5068, %v5088
  %v5097 = vadd.f32 %v5069, %v5084
  %v5098 = vadd.f32 %v5070, %v5088
  %v5099 = vadd.f32 %v5071, %v5084
  %v5100 = vadd.f32 %v5072, %v5088
  %v5101 = vadd.f32 %v5073, %v5084
  %v5102 = vadd.f32 %v5074, %v5088
  %v5103 = vadd.f32 %v5075, %v5084
  %v5104 = vadd.f32 %v5076, %v5088
  %v5105 = vadd.f32 %v5077, %v5084
  %v5106 = vadd.f32 %v5078, %v5088
  %v5107 = vmax.f32 %v5091, 0.0
  %v5108 = vmax.f32 %v5092, 0.0
  %v5109 = vmax.f32 %v5093, 0.0
  %v5110 = vmax.f32 %v5094, 0.0
  %v5111 = vmax.f32 %v5095, 0.0
  %v5112 = vmax.f32 %v5096, 0.0
  %v5113 = vmax.f32 %v5097, 0.0
  %v5114 = vmax.f32 %v5098, 0.0
  %v5115 = vmax.f32 %v5099, 0.0
  %v5116 = vmax.f32 %v5100, 0.0
  %v5117 = vmax.f32 %v5101, 0.0
  %v5118 = vmax.f32 %v5102, 0.0
  %v5119 = vmax.f32 %v5103, 0.0
  %v5120 = vmax.f32 %v5104, 0.0
  %v5121 = vmax.f32 %v5105, 0.0
  %v5122 = vmax.f32 %v5106, 0.0
  %v5123 = vpack.c.bf16 %v5109, %v5107
  %v5124 = vpack.c.bf16 %v5110, %v5108
  %v5125 = vld [vmem:[%s5] sm:$0xf]
  %v5126 = vld [vmem:[%s5 + $0x4] sm:$0xf]
  %v5127 = vld [vmem:[%s5 + $0x8] sm:$0xf]
  %v5128 = vld [vmem:[%s5 + $0xc] sm:$0xf]
  %v5129 = vld [vmem:[%s5 + $0x10] sm:$0xf]
  %v5130 = vld [vmem:[%s5 + $0x14] sm:$0xf]
  %v5131 = vld [vmem:[%s5 + $0x18] sm:$0xf]
  %v5132 = vld [vmem:[%s5 + $0x1c] sm:$0xf]
  %v5133 = vld [vmem:[%s5 + $0x20] sm:$0xf]
  %v5134 = vld [vmem:[%s5 + $0x24] sm:$0xf]
  %v5135 = vld [vmem:[%s5 + $0x28] sm:$0xf]
  %v5136 = vld [vmem:[%s5 + $0x2c] sm:$0xf]
  %v5137 = vld [vmem:[%s5 + $0x30] sm:$0xf]
  %v5138 = vld [vmem:[%s5 + $0x34] sm:$0xf]
  %v5139 = vld [vmem:[%s5 + $0x38] sm:$0xf]
  %v5140 = vld [vmem:[%s5 + $0x3c] sm:$0xf]
  %v5141 = vld [vmem:[%s5 + $0x40] sm:$0xf]
  %v5142 = vld [vmem:[%s5 + $0x44] sm:$0xf]
  %v5143 = vld [vmem:[%s5 + $0x48] sm:$0xf]
  %v5144 = vld [vmem:[%s5 + $0x4c] sm:$0xf]
  %v5145 = vld [vmem:[%s5 + $0x50] sm:$0xf]
  %v5146 = vld [vmem:[%s5 + $0x54] sm:$0xf]
  %v5147 = vld [vmem:[%s5 + $0x58] sm:$0xf]
  %v5148 = vld [vmem:[%s5 + $0x5c] sm:$0xf]
  %v5149 = vld [vmem:[%s5 + $0x60] sm:$0xf]
  %v5150 = vpack.c.bf16 %v5113, %v5111
  %v5151 = vpack.c.bf16 %v5114, %v5112
  %s5152 = scalar_lea.vmem %s5, 100
  %v5153 = vld [vmem:[%s5152] sm:$0xf]
  %v5154 = vld [vmem:[%s5152 + $0x4] sm:$0xf]
  %v5155 = vld [vmem:[%s5152 + $0x8] sm:$0xf]
  %v5156 = vld [vmem:[%s5152 + $0xc] sm:$0xf]
  %v5157 = vld [vmem:[%s5152 + $0x10] sm:$0xf]
  %v5158 = vld [vmem:[%s5152 + $0x14] sm:$0xf]
  %v5159 = vld [vmem:[%s5152 + $0x18] sm:$0xf]
  %v5160 = vld [vmem:[%s5152 + $0x1c] sm:$0xf]
  %v5161 = vld [vmem:[%s5152 + $0x20] sm:$0xf]
  %v5162 = vld [vmem:[%s5152 + $0x24] sm:$0xf]
  %v5163 = vld [vmem:[%s5152 + $0x28] sm:$0xf]
  %v5164 = vld [vmem:[%s5152 + $0x2c] sm:$0xf]
  %v5165 = vld [vmem:[%s5152 + $0x30] sm:$0xf]
  %v5166 = vld [vmem:[%s5152 + $0x34] sm:$0xf]
  %v5167 = vld [vmem:[%s5152 + $0x38] sm:$0xf]
  %v5168 = vld [vmem:[%s5152 + $0x3c] sm:$0xf]
  %v5169 = vld [vmem:[%s5152 + $0x40] sm:$0xf]
  %v5170 = vld [vmem:[%s5152 + $0x44] sm:$0xf]
  %v5171 = vld [vmem:[%s5152 + $0x48] sm:$0xf]
  %v5172 = vld [vmem:[%s5152 + $0x4c] sm:$0xf]
  %v5173 = vld [vmem:[%s5152 + $0x50] sm:$0xf]
  %v5174 = vld [vmem:[%s5152 + $0x54] sm:$0xf]
  %v5175 = vld [vmem:[%s5152 + $0x58] sm:$0xf]
  %v5176 = vld [vmem:[%s5152 + $0x5c] sm:$0xf]
  %v5177 = vld [vmem:[%s5152 + $0x60] sm:$0xf]
  %v5203 = vunpack.c.l.b16 %v5153
  %v5204 = vunpack.c.l.b16 %v5154
  %v5205 = vunpack.c.l.b16 %v5155
  %v5206 = vunpack.c.l.b16 %v5156
  %v5207 = vunpack.c.l.b16 %v5157
  %v5208 = vunpack.c.l.b16 %v5158
  %v5209 = vunpack.c.l.b16 %v5159
  %v5210 = vunpack.c.l.b16 %v5160
  %v5211 = vunpack.c.l.b16 %v5161
  %v5212 = vunpack.c.l.b16 %v5162
  %v5213 = vunpack.c.l.b16 %v5163
  %v5214 = vunpack.c.l.b16 %v5164
  %v5215 = vunpack.c.l.b16 %v5165
  %v5216 = vunpack.c.l.b16 %v5166
  %v5217 = vunpack.c.l.b16 %v5167
  %v5218 = vunpack.c.l.b16 %v5168
  %v5219 = vunpack.c.l.b16 %v5169
  %v5220 = vunpack.c.l.b16 %v5170
  %v5221 = vunpack.c.l.b16 %v5171
  %v5222 = vunpack.c.l.b16 %v5172
  %v5223 = vunpack.c.l.b16 %v5173
  %v5224 = vunpack.c.l.b16 %v5174
  %v5225 = vunpack.c.l.b16 %v5175
  %v5226 = vunpack.c.l.b16 %v5176
  %v5227 = vunpack.c.l.b16 %v5177
  %v5228 = vpack.c.b16 %v5204, %v5203
  %v5229 = vpack.c.b16 %v5206, %v5205
  %v5230 = vpack.c.b16 %v5208, %v5207
  %v5231 = vpack.c.b16 %v5210, %v5209
  %v5232 = vpack.c.b16 %v5212, %v5211
  %v5233 = vpack.c.b16 %v5214, %v5213
  %v5234 = vpack.c.b16 %v5216, %v5215
  %v5235 = vpack.c.b16 %v5218, %v5217
  %v5236 = vpack.c.b16 %v5220, %v5219
  %v5237 = vpack.c.b16 %v5222, %v5221
  %v5238 = vpack.c.b16 %v5224, %v5223
  %v5239 = vpack.c.b16 %v5226, %v5225
  %v5240 = vpack.c.b16 %v5227, %v5227
  %vm5253 = vcmask 588800
  %v5255 = vsel %vm5253, %v5151, 0
  %vm5257 = vcmask 1043456
  %v5259 = vsel %vm5257, %v5240, 0
  %5261 = vmatprep.subr.bf16.mxu0 0
  %5262 = vmatpush1.bf16.msra.mxu0 %v5228
  %5263 = vmatprep.subr.bf16.mxu0 0
  %5264 = vmatpush1.bf16.msra.mxu0 %v5229
  %5265 = vmatprep.subr.bf16.mxu0 0
  %5266 = vmatpush1.bf16.msra.mxu0 %v5230
  %5267 = vmatprep.subr.bf16.mxu0 0
  %5268 = vmatpush1.bf16.msra.mxu0 %v5231
  %5269 = vmatprep.subr.bf16.mxu0 0
  %5270 = vmatpush1.bf16.msra.mxu0 %v5232
  %5271 = vmatprep.subr.bf16.mxu0 0
  %5272 = vmatpush1.bf16.msra.mxu0 %v5233
  %5273 = vmatprep.subr.bf16.mxu0 0
  %5274 = vmatpush1.bf16.msra.mxu0 %v5234
  %5275 = vmatprep.subr.bf16.mxu0 0
  %5276 = vmatpush1.bf16.msra.mxu0 %v5235
  %5277 = vmatprep.subr.bf16.mxu0 0
  %5278 = vmatpush1.bf16.msra.mxu0 %v5236
  %5279 = vmatprep.subr.bf16.mxu0 0
  %5280 = vmatpush1.bf16.msra.mxu0 %v5237
  %5281 = vmatprep.subr.bf16.mxu0 0
  %5282 = vmatpush1.bf16.msra.mxu0 %v5238
  %5283 = vmatprep.subr.bf16.mxu0 0
  %5284 = vmatpush1.bf16.msra.mxu0 %v5239
  %5285 = vmatprep.subr.bf16.mxu0 0
  %5286 = vmatpush1.bf16.msra.mxu0 %v5259
  %5287 = vmatprep.subr.bf16.mxu0 0
  %5288 = vmatpush1.bf16.msra.mxu0 0
  %5289 = vmatprep.subr.bf16.mxu0 0
  %5290 = vmatpush1.bf16.msra.mxu0 0
  %5291 = vmatprep.subr.bf16.mxu0 0
  %5292 = vmatpush1.bf16.msra.mxu0 0
  %5293 = vmatprep.mubr.bf16.mxu0 %v5255
  %5294 = vmatmul.mubr.bf16.gmra.mrb[0].mxu0 %v5150
  %v5295 = vpop.f32.mrb[0].mxu0
  %v5296 = vadd.f32 0.0, %v5295
  %v5297 = vpop.f32.mrb[0].mxu0
  %v5298 = vpop.f32.mrb[0].mxu0
  %v5299 = vadd.f32 0.0, %v5298
  %v5300 = vpop.f32.mrb[0].mxu0
  %5301 = vdwg.mxu0
  %v5327 = vunpack.c.l.b16 %v5125
  %v5328 = vunpack.c.l.b16 %v5126
  %v5329 = vunpack.c.l.b16 %v5127
  %v5330 = vunpack.c.l.b16 %v5128
  %v5331 = vunpack.c.l.b16 %v5129
  %v5332 = vunpack.c.l.b16 %v5130
  %v5333 = vunpack.c.l.b16 %v5131
  %v5334 = vunpack.c.l.b16 %v5132
  %v5335 = vunpack.c.l.b16 %v5133
  %v5336 = vunpack.c.l.b16 %v5134
  %v5337 = vunpack.c.l.b16 %v5135
  %v5338 = vunpack.c.l.b16 %v5136
  %v5339 = vunpack.c.l.b16 %v5137
  %v5340 = vunpack.c.l.b16 %v5138
  %v5341 = vunpack.c.l.b16 %v5139
  %v5342 = vunpack.c.l.b16 %v5140
  %v5343 = vunpack.c.l.b16 %v5141
  %v5344 = vunpack.c.l.b16 %v5142
  %v5345 = vunpack.c.l.b16 %v5143
  %v5346 = vunpack.c.l.b16 %v5144
  %v5347 = vunpack.c.l.b16 %v5145
  %v5348 = vunpack.c.l.b16 %v5146
  %v5349 = vunpack.c.l.b16 %v5147
  %v5350 = vunpack.c.l.b16 %v5148
  %v5351 = vunpack.c.l.b16 %v5149
  %v5352 = vpack.c.b16 %v5328, %v5327
  %v5353 = vpack.c.b16 %v5330, %v5329
  %v5354 = vpack.c.b16 %v5332, %v5331
  %v5355 = vpack.c.b16 %v5334, %v5333
  %v5356 = vpack.c.b16 %v5336, %v5335
  %v5357 = vpack.c.b16 %v5338, %v5337
  %v5358 = vpack.c.b16 %v5340, %v5339
  %v5359 = vpack.c.b16 %v5342, %v5341
  %v5360 = vpack.c.b16 %v5344, %v5343
  %v5361 = vpack.c.b16 %v5346, %v5345
  %v5362 = vpack.c.b16 %v5348, %v5347
  %v5363 = vpack.c.b16 %v5350, %v5349
  %v5364 = vpack.c.b16 %v5351, %v5351
  %v5378 = vsel %vm5253, %v5124, 0
  %v5381 = vsel %vm5257, %v5364, 0
  %5383 = vmatprep.subr.bf16.mxu0 0
  %5384 = vmatpush1.bf16.msra.mxu0 %v5352
  %5385 = vmatprep.subr.bf16.mxu0 0
  %5386 = vmatpush1.bf16.msra.mxu0 %v5353
  %5387 = vmatprep.subr.bf16.mxu0 0
  %5388 = vmatpush1.bf16.msra.mxu0 %v5354
  %5389 = vmatprep.subr.bf16.mxu0 0
  %5390 = vmatpush1.bf16.msra.mxu0 %v5355
  %5391 = vmatprep.subr.bf16.mxu0 0
  %5392 = vmatpush1.bf16.msra.mxu0 %v5356
  %5393 = vmatprep.subr.bf16.mxu0 0
  %5394 = vmatpush1.bf16.msra.mxu0 %v5357
  %5395 = vmatprep.subr.bf16.mxu0 0
  %5396 = vmatpush1.bf16.msra.mxu0 %v5358
  %5397 = vmatprep.subr.bf16.mxu0 0
  %5398 = vmatpush1.bf16.msra.mxu0 %v5359
  %5399 = vmatprep.subr.bf16.mxu0 0
  %5400 = vmatpush1.bf16.msra.mxu0 %v5360
  %5401 = vmatprep.subr.bf16.mxu0 0
  %5402 = vmatpush1.bf16.msra.mxu0 %v5361
  %5403 = vmatprep.subr.bf16.mxu0 0
  %5404 = vmatpush1.bf16.msra.mxu0 %v5362
  %5405 = vmatprep.subr.bf16.mxu0 0
  %5406 = vmatpush1.bf16.msra.mxu0 %v5363
  %5407 = vmatprep.subr.bf16.mxu0 0
  %5408 = vmatpush1.bf16.msra.mxu0 %v5381
  %5409 = vmatprep.subr.bf16.mxu0 0
  %5410 = vmatpush1.bf16.msra.mxu0 0
  %5411 = vmatprep.subr.bf16.mxu0 0
  %5412 = vmatpush1.bf16.msra.mxu0 0
  %5413 = vmatprep.subr.bf16.mxu0 0
  %5414 = vmatpush1.bf16.msra.mxu0 0
  %5415 = vmatprep.mubr.bf16.mxu0 %v5378
  %5416 = vmatmul.mubr.bf16.gmra.mrb[0].mxu0 %v5123
  %v5417 = vpop.f32.mrb[0].mxu0
  %v5418 = vadd.f32 %v5296, %v5417
  %v5419 = vpop.f32.mrb[0].mxu0
  %v5420 = vpop.f32.mrb[0].mxu0
  %v5421 = vadd.f32 %v5299, %v5420
  %v5422 = vpop.f32.mrb[0].mxu0
  %5423 = vdwg.mxu0
  %v5424 = vpack.c.bf16 %v5117, %v5115
  %v5425 = vpack.c.bf16 %v5118, %v5116
  %s5426 = scalar_lea.vmem %s5, 200
  %v5427 = vld [vmem:[%s5426] sm:$0xf]
  %v5428 = vld [vmem:[%s5426 + $0x4] sm:$0xf]
  %v5429 = vld [vmem:[%s5426 + $0x8] sm:$0xf]
  %v5430 = vld [vmem:[%s5426 + $0xc] sm:$0xf]
  %v5431 = vld [vmem:[%s5426 + $0x10] sm:$0xf]
  %v5432 = vld [vmem:[%s5426 + $0x14] sm:$0xf]
  %v5433 = vld [vmem:[%s5426 + $0x18] sm:$0xf]
  %v5434 = vld [vmem:[%s5426 + $0x1c] sm:$0xf]
  %v5435 = vld [vmem:[%s5426 + $0x20] sm:$0xf]
  %v5436 = vld [vmem:[%s5426 + $0x24] sm:$0xf]
  %v5437 = vld [vmem:[%s5426 + $0x28] sm:$0xf]
  %v5438 = vld [vmem:[%s5426 + $0x2c] sm:$0xf]
  %v5439 = vld [vmem:[%s5426 + $0x30] sm:$0xf]
  %v5440 = vld [vmem:[%s5426 + $0x34] sm:$0xf]
  %v5441 = vld [vmem:[%s5426 + $0x38] sm:$0xf]
  %v5442 = vld [vmem:[%s5426 + $0x3c] sm:$0xf]
  %v5443 = vld [vmem:[%s5426 + $0x40] sm:$0xf]
  %v5444 = vld [vmem:[%s5426 + $0x44] sm:$0xf]
  %v5445 = vld [vmem:[%s5426 + $0x48] sm:$0xf]
  %v5446 = vld [vmem:[%s5426 + $0x4c] sm:$0xf]
  %v5447 = vld [vmem:[%s5426 + $0x50] sm:$0xf]
  %v5448 = vld [vmem:[%s5426 + $0x54] sm:$0xf]
  %v5449 = vld [vmem:[%s5426 + $0x58] sm:$0xf]
  %v5450 = vld [vmem:[%s5426 + $0x5c] sm:$0xf]
  %v5451 = vld [vmem:[%s5426 + $0x60] sm:$0xf]
  %v5477 = vunpack.c.l.b16 %v5427
  %v5478 = vunpack.c.l.b16 %v5428
  %v5479 = vunpack.c.l.b16 %v5429
  %v5480 = vunpack.c.l.b16 %v5430
  %v5481 = vunpack.c.l.b16 %v5431
  %v5482 = vunpack.c.l.b16 %v5432
  %v5483 = vunpack.c.l.b16 %v5433
  %v5484 = vunpack.c.l.b16 %v5434
  %v5485 = vunpack.c.l.b16 %v5435
  %v5486 = vunpack.c.l.b16 %v5436
  %v5487 = vunpack.c.l.b16 %v5437
  %v5488 = vunpack.c.l.b16 %v5438
  %v5489 = vunpack.c.l.b16 %v5439
  %v5490 = vunpack.c.l.b16 %v5440
  %v5491 = vunpack.c.l.b16 %v5441
  %v5492 = vunpack.c.l.b16 %v5442
  %v5493 = vunpack.c.l.b16 %v5443
  %v5494 = vunpack.c.l.b16 %v5444
  %v5495 = vunpack.c.l.b16 %v5445
  %v5496 = vunpack.c.l.b16 %v5446
  %v5497 = vunpack.c.l.b16 %v5447
  %v5498 = vunpack.c.l.b16 %v5448
  %v5499 = vunpack.c.l.b16 %v5449
  %v5500 = vunpack.c.l.b16 %v5450
  %v5501 = vunpack.c.l.b16 %v5451
  %v5502 = vpack.c.b16 %v5478, %v5477
  %v5503 = vpack.c.b16 %v5480, %v5479
  %v5504 = vpack.c.b16 %v5482, %v5481
  %v5505 = vpack.c.b16 %v5484, %v5483
  %v5506 = vpack.c.b16 %v5486, %v5485
  %v5507 = vpack.c.b16 %v5488, %v5487
  %v5508 = vpack.c.b16 %v5490, %v5489
  %v5509 = vpack.c.b16 %v5492, %v5491
  %v5510 = vpack.c.b16 %v5494, %v5493
  %v5511 = vpack.c.b16 %v5496, %v5495
  %v5512 = vpack.c.b16 %v5498, %v5497
  %v5513 = vpack.c.b16 %v5500, %v5499
  %v5514 = vpack.c.b16 %v5501, %v5501
  %v5528 = vsel %vm5253, %v5425, 0
  %v5531 = vsel %vm5257, %v5514, 0
  %5533 = vmatprep.subr.bf16.mxu0 0
  %5534 = vmatpush1.bf16.msra.mxu0 %v5502
  %5535 = vmatprep.subr.bf16.mxu0 0
  %5536 = vmatpush1.bf16.msra.mxu0 %v5503
  %5537 = vmatprep.subr.bf16.mxu0 0
  %5538 = vmatpush1.bf16.msra.mxu0 %v5504
  %5539 = vmatprep.subr.bf16.mxu0 0
  %5540 = vmatpush1.bf16.msra.mxu0 %v5505
  %5541 = vmatprep.subr.bf16.mxu0 0
  %5542 = vmatpush1.bf16.msra.mxu0 %v5506
  %5543 = vmatprep.subr.bf16.mxu0 0
  %5544 = vmatpush1.bf16.msra.mxu0 %v5507
  %5545 = vmatprep.subr.bf16.mxu0 0
  %5546 = vmatpush1.bf16.msra.mxu0 %v5508
  %5547 = vmatprep.subr.bf16.mxu0 0
  %5548 = vmatpush1.bf16.msra.mxu0 %v5509
  %5549 = vmatprep.subr.bf16.mxu0 0
  %5550 = vmatpush1.bf16.msra.mxu0 %v5510
  %5551 = vmatprep.subr.bf16.mxu0 0
  %5552 = vmatpush1.bf16.msra.mxu0 %v5511
  %5553 = vmatprep.subr.bf16.mxu0 0
  %5554 = vmatpush1.bf16.msra.mxu0 %v5512
  %5555 = vmatprep.subr.bf16.mxu0 0
  %5556 = vmatpush1.bf16.msra.mxu0 %v5513
  %5557 = vmatprep.subr.bf16.mxu0 0
  %5558 = vmatpush1.bf16.msra.mxu0 %v5531
  %5559 = vmatprep.subr.bf16.mxu0 0
  %5560 = vmatpush1.bf16.msra.mxu0 0
  %5561 = vmatprep.subr.bf16.mxu0 0
  %5562 = vmatpush1.bf16.msra.mxu0 0
  %5563 = vmatprep.subr.bf16.mxu0 0
  %5564 = vmatpush1.bf16.msra.mxu0 0
  %5565 = vmatprep.mubr.bf16.mxu0 %v5528
  %5566 = vmatmul.mubr.bf16.gmra.mrb[0].mxu0 %v5424
  %v5567 = vpop.f32.mrb[0].mxu0
  %v5568 = vadd.f32 0.0, %v5567
  %v5569 = vpop.f32.mrb[0].mxu0
  %v5570 = vpop.f32.mrb[0].mxu0
  %v5571 = vadd.f32 0.0, %v5570
  %v5572 = vpop.f32.mrb[0].mxu0
  %5573 = vdwg.mxu0
  %v5574 = vadd.f32 %v5418, %v5568
  %v5575 = vadd.f32 %v5421, %v5571
  %v5576 = vpack.c.bf16 %v5121, %v5119
  %v5577 = vpack.c.bf16 %v5122, %v5120
  %s5578 = scalar_lea.vmem %s5, 300
  %v5579 = vld [vmem:[%s5578] sm:$0xf]
  %v5580 = vld [vmem:[%s5578 + $0x4] sm:$0xf]
  %v5581 = vld [vmem:[%s5578 + $0x8] sm:$0xf]
  %v5582 = vld [vmem:[%s5578 + $0xc] sm:$0xf]
  %v5583 = vld [vmem:[%s5578 + $0x10] sm:$0xf]
  %v5584 = vld [vmem:[%s5578 + $0x14] sm:$0xf]
  %v5585 = vld [vmem:[%s5578 + $0x18] sm:$0xf]
  %v5586 = vld [vmem:[%s5578 + $0x1c] sm:$0xf]
  %v5587 = vld [vmem:[%s5578 + $0x20] sm:$0xf]
  %v5588 = vld [vmem:[%s5578 + $0x24] sm:$0xf]
  %v5589 = vld [vmem:[%s5578 + $0x28] sm:$0xf]
  %v5590 = vld [vmem:[%s5578 + $0x2c] sm:$0xf]
  %v5591 = vld [vmem:[%s5578 + $0x30] sm:$0xf]
  %v5592 = vld [vmem:[%s5578 + $0x34] sm:$0xf]
  %v5593 = vld [vmem:[%s5578 + $0x38] sm:$0xf]
  %v5594 = vld [vmem:[%s5578 + $0x3c] sm:$0xf]
  %v5595 = vld [vmem:[%s5578 + $0x40] sm:$0xf]
  %v5596 = vld [vmem:[%s5578 + $0x44] sm:$0xf]
  %v5597 = vld [vmem:[%s5578 + $0x48] sm:$0xf]
  %v5598 = vld [vmem:[%s5578 + $0x4c] sm:$0xf]
  %v5599 = vld [vmem:[%s5578 + $0x50] sm:$0xf]
  %v5600 = vld [vmem:[%s5578 + $0x54] sm:$0xf]
  %v5601 = vld [vmem:[%s5578 + $0x58] sm:$0xf]
  %v5602 = vld [vmem:[%s5578 + $0x5c] sm:$0xf]
  %v5603 = vld [vmem:[%s5578 + $0x60] sm:$0xf]
  %v5629 = vunpack.c.l.b16 %v5579
  %v5630 = vunpack.c.l.b16 %v5580
  %v5631 = vunpack.c.l.b16 %v5581
  %v5632 = vunpack.c.l.b16 %v5582
  %v5633 = vunpack.c.l.b16 %v5583
  %v5634 = vunpack.c.l.b16 %v5584
  %v5635 = vunpack.c.l.b16 %v5585
  %v5636 = vunpack.c.l.b16 %v5586
  %v5637 = vunpack.c.l.b16 %v5587
  %v5638 = vunpack.c.l.b16 %v5588
  %v5639 = vunpack.c.l.b16 %v5589
  %v5640 = vunpack.c.l.b16 %v5590
  %v5641 = vunpack.c.l.b16 %v5591
  %v5642 = vunpack.c.l.b16 %v5592
  %v5643 = vunpack.c.l.b16 %v5593
  %v5644 = vunpack.c.l.b16 %v5594
  %v5645 = vunpack.c.l.b16 %v5595
  %v5646 = vunpack.c.l.b16 %v5596
  %v5647 = vunpack.c.l.b16 %v5597
  %v5648 = vunpack.c.l.b16 %v5598
  %v5649 = vunpack.c.l.b16 %v5599
  %v5650 = vunpack.c.l.b16 %v5600
  %v5651 = vunpack.c.l.b16 %v5601
  %v5652 = vunpack.c.l.b16 %v5602
  %v5653 = vunpack.c.l.b16 %v5603
  %v5654 = vpack.c.b16 %v5630, %v5629
  %v5655 = vpack.c.b16 %v5632, %v5631
  %v5656 = vpack.c.b16 %v5634, %v5633
  %v5657 = vpack.c.b16 %v5636, %v5635
  %v5658 = vpack.c.b16 %v5638, %v5637
  %v5659 = vpack.c.b16 %v5640, %v5639
  %v5660 = vpack.c.b16 %v5642, %v5641
  %v5661 = vpack.c.b16 %v5644, %v5643
  %v5662 = vpack.c.b16 %v5646, %v5645
  %v5663 = vpack.c.b16 %v5648, %v5647
  %v5664 = vpack.c.b16 %v5650, %v5649
  %v5665 = vpack.c.b16 %v5652, %v5651
  %v5666 = vpack.c.b16 %v5653, %v5653
  %v5680 = vsel %vm5253, %v5577, 0
  %v5683 = vsel %vm5257, %v5666, 0
  %5685 = vmatprep.subr.bf16.mxu0 0
  %5686 = vmatpush1.bf16.msra.mxu0 %v5654
  %5687 = vmatprep.subr.bf16.mxu0 0
  %5688 = vmatpush1.bf16.msra.mxu0 %v5655
  %5689 = vmatprep.subr.bf16.mxu0 0
  %5690 = vmatpush1.bf16.msra.mxu0 %v5656
  %5691 = vmatprep.subr.bf16.mxu0 0
  %5692 = vmatpush1.bf16.msra.mxu0 %v5657
  %5693 = vmatprep.subr.bf16.mxu0 0
  %5694 = vmatpush1.bf16.msra.mxu0 %v5658
  %5695 = vmatprep.subr.bf16.mxu0 0
  %5696 = vmatpush1.bf16.msra.mxu0 %v5659
  %5697 = vmatprep.subr.bf16.mxu0 0
  %5698 = vmatpush1.bf16.msra.mxu0 %v5660
  %5699 = vmatprep.subr.bf16.mxu0 0
  %5700 = vmatpush1.bf16.msra.mxu0 %v5661
  %5701 = vmatprep.subr.bf16.mxu0 0
  %5702 = vmatpush1.bf16.msra.mxu0 %v5662
  %5703 = vmatprep.subr.bf16.mxu0 0
  %5704 = vmatpush1.bf16.msra.mxu0 %v5663
  %5705 = vmatprep.subr.bf16.mxu0 0
  %5706 = vmatpush1.bf16.msra.mxu0 %v5664
  %5707 = vmatprep.subr.bf16.mxu0 0
  %5708 = vmatpush1.bf16.msra.mxu0 %v5665
  %5709 = vmatprep.subr.bf16.mxu0 0
  %5710 = vmatpush1.bf16.msra.mxu0 %v5683
  %5711 = vmatprep.subr.bf16.mxu0 0
  %5712 = vmatpush1.bf16.msra.mxu0 0
  %5713 = vmatprep.subr.bf16.mxu0 0
  %5714 = vmatpush1.bf16.msra.mxu0 0
  %5715 = vmatprep.subr.bf16.mxu0 0
  %5716 = vmatpush1.bf16.msra.mxu0 0
  %5717 = vmatprep.mubr.bf16.mxu0 %v5680
  %5718 = vmatmul.mubr.bf16.gmra.mrb[0].mxu0 %v5576
  %v5719 = vpop.f32.mrb[0].mxu0
  %v5720 = vadd.f32 0.0, %v5719
  %v5721 = vpop.f32.mrb[0].mxu0
  %v5722 = vpop.f32.mrb[0].mxu0
  %v5723 = vadd.f32 0.0, %v5722
  %v5724 = vpop.f32.mrb[0].mxu0
  %5725 = vdwg.mxu0
  %v5726 = vadd.f32 %v5574, %v5720
  %v5727 = vadd.f32 %v5575, %v5723
  %v5728 = vld [vmem:[%s6] sm:$0x1]
  %v5730 = vlaneseq
  %v5731 = vshrl.u32 %v5730, 7
  %v5732 = vsub.s32 0, %v5731
  %v5733 = vrot.slane %v5728, %v5732
  %v5735 = vadd.f32 %v5726, %v5733
  %v5736 = vadd.f32 %v5727, %v5733
  %v5737 = vmax.f32 %v5735, 0.0
  %v5738 = vmax.f32 %v5736, 0.0
  %v5739 = vld [vmem:[%s7] sm:$0xff]
  %v5740 = vld [vmem:[%s7 + $0x8] sm:$0xff]
  %v5741 = vld [vmem:[%s7 + $0x10] sm:$0xff]
  %v5742 = vld [vmem:[%s7 + $0x18] sm:$0xff]
  %v5743 = vld [vmem:[%s8] sm:$0x1]
  %v5745 = vlaneseq
  %v5746 = vshrl.u32 %v5745, 7
  %v5747 = vsub.s32 0, %v5746
  %v5748 = vrot.slane %v5743, %v5747
  %vm5750 = vcmask 261120
  %v5752 = vsel %vm5750, %v5737, 0
  %v5755 = vsel %vm5750, %v5738, 0
  %5757 = vmatprep.subr.mxu0 0.0
  %5758 = vmatpush1.msra.mxu0 %v5739
  %5759 = vmatprep.subr.mxu0 0.0
  %5760 = vmatpush1.msra.mxu0 %v5740
  %5761 = vmatprep.subr.mxu0 0.0
  %5762 = vmatpush1.msra.mxu0 %v5741
  %5763 = vmatprep.subr.mxu0 0.0
  %5764 = vmatpush1.msra.mxu0 %v5742
  %5765 = vmatprep.subr.mxu0 0.0
  %5766 = vmatpush1.msra.mxu0 0.0
  %5767 = vmatprep.subr.mxu0 0.0
  %5768 = vmatpush1.msra.mxu0 0.0
  %5769 = vmatprep.subr.mxu0 0.0
  %5770 = vmatpush1.msra.mxu0 0.0
  %5771 = vmatprep.subr.mxu0 0.0
  %5772 = vmatpush1.msra.mxu0 0.0
  %5773 = vmatprep.subr.mxu0 0.0
  %5774 = vmatpush1.msra.mxu0 0.0
  %5775 = vmatprep.subr.mxu0 0.0
  %5776 = vmatpush1.msra.mxu0 0.0
  %5777 = vmatprep.subr.mxu0 0.0
  %5778 = vmatpush1.msra.mxu0 0.0
  %5779 = vmatprep.subr.mxu0 0.0
  %5780 = vmatpush1.msra.mxu0 0.0
  %5781 = vmatprep.subr.mxu0 0.0
  %5782 = vmatpush1.msra.mxu0 0.0
  %5783 = vmatprep.subr.mxu0 0.0
  %5784 = vmatpush1.msra.mxu0 0.0
  %5785 = vmatprep.subr.mxu0 0.0
  %5786 = vmatpush1.msra.mxu0 0.0
  %5787 = vmatprep.subr.mxu0 0.0
  %5788 = vmatpush1.msra.mxu0 0.0
  %5789 = vmatprep.subr.mxu0 0.0
  %5790 = vmatpush1.msra.mxu0 0.0
  %5791 = vmatprep.subr.mxu0 0.0
  %5792 = vmatpush1.msra.mxu0 0.0
  %5793 = vmatprep.subr.mxu0 0.0
  %5794 = vmatpush1.msra.mxu0 0.0
  %5795 = vmatprep.subr.mxu0 0.0
  %5796 = vmatpush1.msra.mxu0 0.0
  %5797 = vmatprep.subr.mxu0 0.0
  %5798 = vmatpush1.msra.mxu0 0.0
  %5799 = vmatprep.subr.mxu0 0.0
  %5800 = vmatpush1.msra.mxu0 0.0
  %5801 = vmatprep.subr.mxu0 0.0
  %5802 = vmatpush1.msra.mxu0 0.0
  %5803 = vmatprep.subr.mxu0 0.0
  %5804 = vmatpush1.msra.mxu0 0.0
  %5805 = vmatprep.subr.mxu0 0.0
  %5806 = vmatpush1.msra.mxu0 0.0
  %5807 = vmatprep.subr.mxu0 0.0
  %5808 = vmatpush1.msra.mxu0 0.0
  %5809 = vmatprep.subr.mxu0 0.0
  %5810 = vmatpush1.msra.mxu0 0.0
  %5811 = vmatprep.subr.mxu0 0.0
  %5812 = vmatpush1.msra.mxu0 0.0
  %5813 = vmatprep.subr.mxu0 0.0
  %5814 = vmatpush1.msra.mxu0 0.0
  %5815 = vmatprep.subr.mxu0 0.0
  %5816 = vmatpush1.msra.mxu0 0.0
  %5817 = vmatprep.subr.mxu0 0.0
  %5818 = vmatpush1.msra.mxu0 0.0
  %5819 = vmatprep.subr.mxu0 0.0
  %5820 = vmatpush1.msra.mxu0 0.0
  %5821 = vmatprep.mubr.f32.mxu0 0.0
  %5822 = vmatmul.mubr.f32.gmra.mrb[0].mxu0 %v5752
  %v5823 = vpop.f32.mrb[0].mxu0
  %v5824 = vadd.f32 %v5748, %v5823
  %v5825 = vpop.f32.mrb[0].mxu0
  %5826 = vmatprep.mubr.f32.mxu0 0.0
  %5827 = vmatmul.mubr.f32.gmra.mrb[0].mxu0 %v5755
  %v5828 = vpop.f32.mrb[0].mxu0
  %v5829 = vadd.f32 %v5748, %v5828
  %v5830 = vpop.f32.mrb[0].mxu0
  %5831 = vdwg.mxu0
  %5832 = vmax.xlane.f32.xlu0 %v5824
  %v5833 = vpop.xlane.xlu0 %5832
  %5834 = vmax.xlane.f32.xlu0 %v5829
  %v5835 = vpop.xlane.xlu0 %5834
  %v5836 = vsub.f32 %v5824, %v5833
  %v5837 = vsub.f32 %v5829, %v5835
  %v5838 = vmul.f32 %v5836, 1.442695
  %v5839 = vpow.pop %v5838
  %v5840 = vmul.f32 %v5837, 1.442695
  %v5841 = vpow.pop %v5840
  %5842 = vadd.xlane.f32.xlu0 %v5839
  %v5843 = vpop.xlane.xlu0 %5842
  %5844 = vadd.xlane.f32.xlu0 %v5841
  %v5845 = vpop.xlane.xlu0 %5844
  %v5846 = vlog2.pop %v5843
  %v5847 = vmul.f32 %v5846, 0.6931472
  %v5848 = vlog2.pop %v5845
  %v5849 = vmul.f32 %v5848, 0.6931472
  %v5850 = vsub.f32 %v5836, %v5847
  %v5851 = vsub.f32 %v5837, %v5849
  %5852 = vst [vmem:[%s9] sm:$0xff] %v5850
  %5853 = vst [vmem:[%s9 + $0x8] sm:$0xff] %v5851
  // Predicated region
  $region38: #{net_forward_pallas.1} parent=0 // pred_check
    _
  $region39: #{net_forward_pallas.1} parent=0 // pred_check_branch
    %5855 = sbr.rel (0) target = $region41
  $region40: #{net_forward_pallas.1} parent=0 // pred_region
    _
  $region41: #{net_forward_pallas.1} parent=0 // pred_fallthru
    _
  // Predicated region
  $region42: #{net_forward_pallas.1} parent=0 // pred_check
    _
  $region43: #{net_forward_pallas.1} parent=0 // pred_check_branch
    %5857 = sbr.rel (0) target = $region45
  $region44: #{net_forward_pallas.1} parent=0 // pred_region
    _
  $region45: #{net_forward_pallas.1} parent=0 // pred_fallthru
    _

</llo_original>
